<compile_context>
chip_gen: v7x
topology: tpu7x:2x2x1
jax: 0.10.0
libtpu: 0.0.40
codegen_flags: <defaults>
</compile_context>

<pallas_src>
import functools

import jax
import jax.numpy as jnp
from jax.experimental import pallas as pl
from jax.experimental.pallas import tpu as pltpu

_EPS = 1e-6                       # matches nn.LayerNorm(2*hid_dim, eps=1e-06)


def _round_up(a, b):
    return (a + b - 1) // b * b


def _vmem_limit_bytes():
    """~3/4 of physical VMEM (v7x: 48 MiB, v5e/v6e: 96 MiB), capped at 100 MiB."""
    cap = None
    try:
        cap = getattr(pltpu.get_tpu_info(), "vmem_capacity_bytes", None)
    except Exception:
        cap = None
    if not cap:
        cap = 64 * 1024 * 1024            # conservative fallback (v7x physical)
    return int(min(max(cap * 3 // 4, 32 * 1024 * 1024), 100 * 1024 * 1024))


# ----------------------------------------------------------------- kernel 1 --
def _stats_kernel(x_ref, w1_ref, b1_ref, pmax_ref, psum_ref,
                  *, n_rows, block_rows, ragged):
    """scores = x @ W1 + b1 ; per-tile column-wise max / sum(exp) partials."""
    i = pl.program_id(0)

    # bf16 MXU operands, f32 accumulation; bias added in f32.
    scores = jnp.dot(x_ref[...].astype(w1_ref.dtype), w1_ref[...],
                     preferred_element_type=jnp.float32) + b1_ref[...]

    def emit(sc):
        tile_max = jnp.max(sc, axis=0, keepdims=True)                      # (1, D)
        tile_sum = jnp.sum(jnp.exp(sc - tile_max), axis=0, keepdims=True)  # (1, D)
        pmax_ref[...] = tile_max[None]                                     # (1, 1, D)
        psum_ref[...] = tile_sum[None]

    if not ragged:
        emit(scores)
    else:
        last = pl.num_programs(0) - 1

        @pl.when(i != last)                       # interior tiles: no masking cost
        def _():
            emit(scores)

        @pl.when(i == last)                       # ragged tile: mask OOB rows
        def _():
            row = i * block_rows + jax.lax.broadcasted_iota(
                jnp.int32, scores.shape, 0)
            emit(jnp.where(row < n_rows, scores, -jnp.inf))


# ----------------------------------------------------------------- kernel 2 --
def _apply_kernel(x_ref, w1_ref, b1_ref, pmax_ref, psum_ref, g_ref, b_ref, o_ref):
    """Recompute scores; attn = exp(scores - lse); LayerNorm(relu(x * attn))."""
    x = x_ref[...].astype(jnp.float32)

    # Recompute scores on the MXU instead of reading an f32 intermediate
    # from HBM (the DMA it replaces is far more expensive than the matmul).
    scores = jnp.dot(x_ref[...].astype(w1_ref.dtype), w1_ref[...],
                     preferred_element_type=jnp.float32) + b1_ref[...]

    # Fold the tiny (n_tiles, D) partial-stat combine in-kernel -> lse.
    pm = pmax_ref[...]                                  # (n_tiles, 1, D)
    ps = psum_ref[...]                                  # (n_tiles, 1, D)
    m = jnp.max(pm, axis=0)                             # (1, D) global column max
    s = jnp.sum(ps * jnp.exp(pm - m), axis=0)           # (1, D) global sum(exp)
    lse = m + jnp.log(s)                                # (1, D)

    attn = jnp.exp(scores - lse)                        # softmax over rows
    y = jnp.maximum(x * attn, 0.0)                      # mul + ReLU

    # LayerNorm over features; both moments computed in parallel.
    mu = jnp.mean(y, axis=-1, keepdims=True)
    ms = jnp.mean(y * y, axis=-1, keepdims=True)
    var = jnp.maximum(ms - mu * mu, 0.0)
    out = (y - mu) * jax.lax.rsqrt(var + _EPS) * g_ref[...] + b_ref[...]
    o_ref[...] = out.astype(o_ref.dtype)


# ------------------------------------------------------------------ wrapper --
@functools.partial(jax.jit, static_argnames=("block_rows", "compute_dtype"))
def attention_dis(x, params, *, block_rows=512, compute_dtype=jnp.bfloat16):
    """x: (N, 2*hid_dim). Softmax over rows (dim=-2), LayerNorm over features."""
    n, d = x.shape
    w1 = params["w1"].astype(compute_dtype)       # (d, d), stored (in, out)
    b1 = params["b1"].astype(jnp.float32)         # (1, d)
    gamma = params["gamma"].astype(jnp.float32)   # (1, d)
    beta = params["beta"].astype(jnp.float32)     # (1, d)

    # Row tile: multiple of 8 sublanes, clamped to the (8-rounded) problem size.
    br = _round_up(min(block_rows, _round_up(n, 8)), 8)
    n_tiles = pl.cdiv(n, br)            # no jnp.pad: rely on edge-block handling
    ragged = (n % br) != 0

    cparams = pltpu.CompilerParams(
        dimension_semantics=("parallel",),
        vmem_limit_bytes=_vmem_limit_bytes())

    # ---- pass 1: per-tile column softmax partials (no scores written) -------
    pmax, psum = pl.pallas_call(
        functools.partial(_stats_kernel, n_rows=n, block_rows=br, ragged=ragged),
        out_shape=(jax.ShapeDtypeStruct((n_tiles, 1, d), jnp.float32),
                   jax.ShapeDtypeStruct((n_tiles, 1, d), jnp.float32)),
        grid_spec=pltpu.PrefetchScalarGridSpec(
            num_scalar_prefetch=0,
            grid=(n_tiles,),
            in_specs=[
                pl.BlockSpec((br, d), lambda i: (i, 0)),   # x tile
                pl.BlockSpec((d, d), lambda i: (0, 0)),    # W1 (VMEM resident)
                pl.BlockSpec((1, d), lambda i: (0, 0)),    # b1
            ],
            out_specs=[
                pl.BlockSpec((1, 1, d), lambda i: (i, 0, 0)),   # per-tile max
                pl.BlockSpec((1, 1, d), lambda i: (i, 0, 0)),   # per-tile sum(exp)
            ]),
        compiler_params=cparams,
    )(x, w1, b1)

    # ---- pass 2: recompute scores + softmax-apply + mul + relu + LayerNorm ---
    out = pl.pallas_call(
        _apply_kernel,
        out_shape=jax.ShapeDtypeStruct((n, d), x.dtype),
        grid_spec=pltpu.PrefetchScalarGridSpec(
            num_scalar_prefetch=0,
            grid=(n_tiles,),
            in_specs=[
                pl.BlockSpec((br, d), lambda i: (i, 0)),              # x tile
                pl.BlockSpec((d, d), lambda i: (0, 0)),               # W1
                pl.BlockSpec((1, d), lambda i: (0, 0)),               # b1
                pl.BlockSpec((n_tiles, 1, d), lambda i: (0, 0, 0)),   # pmax
                pl.BlockSpec((n_tiles, 1, d), lambda i: (0, 0, 0)),   # psum
                pl.BlockSpec((1, d), lambda i: (0, 0)),               # LN gamma
                pl.BlockSpec((1, d), lambda i: (0, 0)),               # LN beta
            ],
            out_specs=pl.BlockSpec((br, d), lambda i: (i, 0))),
        compiler_params=cparams,
    )(x, w1, b1, pmax, psum, gamma, beta)

    return out


# -------------------------------------------------------------------- params --
def init_params(key, hid_dim, dtype=jnp.float32):
    """Parameters matching Attention_dis(hid_dim). fc1 weight is stored
    transposed, i.e. (in_features, out_features), so kernels compute x @ W1."""
    d = 2 * hid_dim
    k1, k2 = jax.random.split(key)
    w1 = (jax.random.uniform(k1, (d, d), dtype, -1.0, 1.0)
          / jnp.sqrt(jnp.asarray(d, dtype)))
    b1 = jax.random.uniform(k2, (1, d), dtype, -0.1, 0.1)
    return {"w1": w1, "b1": b1,
            "gamma": jnp.ones((1, d), dtype),   # LayerNorm defaults
            "beta": jnp.zeros((1, d), dtype)}


def reference(x, params, compute_dtype=jnp.bfloat16):
    """Pure-JAX forward using the same mixed precision as the kernels."""
    scores = jnp.dot(x.astype(compute_dtype), params["w1"].astype(compute_dtype),
                     preferred_element_type=jnp.float32) + params["b1"]
    attn = jax.nn.softmax(scores, axis=-2)          # softmax over rows
    y = jnp.maximum(x * attn, 0.0)
    mu = jnp.mean(y, axis=-1, keepdims=True)
    var = jnp.mean(jnp.square(y - mu), axis=-1, keepdims=True)
    return (y - mu) * jax.lax.rsqrt(var + _EPS) * params["gamma"] + params["beta"]


if __name__ == "__main__":
    key = jax.random.PRNGKey(0)

    # (rows, hid_dim, block_rows):
    #  case 1: lane-dense D = 2*64 = 128, 4 grid steps (>= 2 per v7x TensorCore)
    #  case 2: ragged rows (300 rows, 128-row tiles -> masked last tile), D = 64
    cases = [(2048, 64, 512), (300, 32, 128)]
    for n_rows, hid_dim, block_rows in cases:
        key, kx, kp = jax.random.split(key, 3)
        x = jax.random.normal(kx, (n_rows, 2 * hid_dim), jnp.float32)
        params = init_params(kp, hid_dim)

        out = jax.block_until_ready(attention_dis(x, params, block_rows=block_rows))
        ref = reference(x, params)

        assert out.shape == x.shape, (out.shape, x.shape)
        max_err = float(jnp.max(jnp.abs(out - ref)))
        assert jnp.allclose(out, ref, atol=5e-4, rtol=5e-4), \
            f"mismatch vs reference (max |err| = {max_err})"

    print("KERNEL_OK")
</pallas_src>

<mosaic_0001>
module attributes {stable_mosaic.version = 11 : i64} {
  func.func @_stats_kernel(%arg0: i32, %arg1: memref<512x128xf32, #tpu.memory_space<vmem>>, %arg2: memref<128x128xbf16, #tpu.memory_space<vmem>>, %arg3: memref<1x128xf32, #tpu.memory_space<vmem>>, %arg4: memref<1x1x128xf32, #tpu.memory_space<vmem>>, %arg5: memref<1x1x128xf32, #tpu.memory_space<vmem>>) attributes {dimension_semantics = [#tpu.dimension_semantics<parallel>], iteration_bounds = array<i64: 4>, scalar_prefetch = 0 : i64, scratch_operands = 0 : i64, tpu.core_type = #tpu.core_type<tc>, window_params = [{transform_indices = @transform_0, window_bounds = array<i64: 512, 128>}, {pipeline_mode = #tpu.pipeline_mode<synchronous>, transform_indices = @transform_1, window_bounds = array<i64: 128, 128>}, {pipeline_mode = #tpu.pipeline_mode<synchronous>, transform_indices = @transform_2, window_bounds = array<i64: 1, 128>}, {transform_indices = @transform_3, window_bounds = array<i64: 1, 1, 128>}, {transform_indices = @transform_4, window_bounds = array<i64: 1, 1, 128>}]} {
    %c0 = arith.constant 0 : index
    %c0_0 = arith.constant 0 : index
    %0 = vector.load %arg1[%c0, %c0_0] : memref<512x128xf32, #tpu.memory_space<vmem>>, vector<512x128xf32>
    %1 = arith.truncf %0 : vector<512x128xf32> to vector<512x128xbf16>
    %c0_1 = arith.constant 0 : index
    %c0_2 = arith.constant 0 : index
    %2 = vector.load %arg2[%c0_1, %c0_2] : memref<128x128xbf16, #tpu.memory_space<vmem>>, vector<128x128xbf16>
    %cst = arith.constant dense<0.000000e+00> : vector<512x128xf32>
    %3 = tpu.matmul %1, %2, %cst {dimension_numbers = #tpu.dot_dimension_numbers<[1], [0], [0], [1], [0, 0, 1, 1], [], []>} : vector<512x128xbf16>, vector<128x128xbf16>, vector<512x128xf32> -> vector<512x128xf32>
    %c0_3 = arith.constant 0 : index
    %c0_4 = arith.constant 0 : index
    %4 = vector.load %arg3[%c0_3, %c0_4] : memref<1x128xf32, #tpu.memory_space<vmem>>, vector<1x128xf32>
    %5 = vector.broadcast %4 : vector<1x128xf32> to vector<512x128xf32>
    %6 = arith.addf %3, %5 : vector<512x128xf32>
    %cst_5 = arith.constant dense<0xFF800000> : vector<128xf32>
    %7 = vector.multi_reduction <maximumf>, %6, %cst_5 [0] : vector<512x128xf32> to vector<128xf32>
    %8 = vector.shape_cast %7 : vector<128xf32> to vector<1x128xf32>
    %9 = vector.broadcast %8 : vector<1x128xf32> to vector<512x128xf32>
    %10 = arith.subf %6, %9 : vector<512x128xf32>
    %11 = math.exp %10 : vector<512x128xf32>
    %cst_6 = arith.constant dense<0.000000e+00> : vector<128xf32>
    %12 = vector.multi_reduction <add>, %11, %cst_6 [0] : vector<512x128xf32> to vector<128xf32>
    %13 = vector.shape_cast %12 : vector<128xf32> to vector<1x128xf32>
    %14 = vector.shape_cast %8 : vector<1x128xf32> to vector<1x1x128xf32>
    %c0_7 = arith.constant 0 : index
    %c0_8 = arith.constant 0 : index
    %c0_9 = arith.constant 0 : index
    %15 = vector.load %arg4[%c0_7, %c0_8, %c0_9] : memref<1x1x128xf32, #tpu.memory_space<vmem>>, vector<1x1x128xf32>
    tpu.vector_store %arg4[%c0_7, %c0_8, %c0_9], %14 {strides = array<i32>} : memref<1x1x128xf32, #tpu.memory_space<vmem>>, vector<1x1x128xf32>,
    %16 = vector.shape_cast %13 : vector<1x128xf32> to vector<1x1x128xf32>
    %c0_10 = arith.constant 0 : index
    %c0_11 = arith.constant 0 : index
    %c0_12 = arith.constant 0 : index
    %17 = vector.load %arg5[%c0_10, %c0_11, %c0_12] : memref<1x1x128xf32, #tpu.memory_space<vmem>>, vector<1x1x128xf32>
    tpu.vector_store %arg5[%c0_10, %c0_11, %c0_12], %16 {strides = array<i32>} : memref<1x1x128xf32, #tpu.memory_space<vmem>>, vector<1x1x128xf32>,
    return
  }
  func.func @transform_0(%arg0: i32) -> (i32, i32) {
    %c0_i32 = arith.constant 0 : i32
    %c0_i32_0 = arith.constant 0 : i32
    return %arg0, %c0_i32 : i32, i32
  }
  func.func @transform_1(%arg0: i32) -> (i32, i32) {
    %c0_i32 = arith.constant 0 : i32
    %c0_i32_0 = arith.constant 0 : i32
    %c0_i32_1 = arith.constant 0 : i32
    return %c0_i32, %c0_i32_0 : i32, i32
  }
  func.func @transform_2(%arg0: i32) -> (i32, i32) {
    %c0_i32 = arith.constant 0 : i32
    %c0_i32_0 = arith.constant 0 : i32
    %c0_i32_1 = arith.constant 0 : i32
    return %c0_i32, %c0_i32_0 : i32, i32
  }
  func.func @transform_3(%arg0: i32) -> (i32, i32, i32) {
    %c0_i32 = arith.constant 0 : i32
    %c0_i32_0 = arith.constant 0 : i32
    %c0_i32_1 = arith.constant 0 : i32
    return %arg0, %c0_i32, %c0_i32_0 : i32, i32, i32
  }
  func.func @transform_4(%arg0: i32) -> (i32, i32, i32) {
    %c0_i32 = arith.constant 0 : i32
    %c0_i32_0 = arith.constant 0 : i32
    %c0_i32_1 = arith.constant 0 : i32
    return %arg0, %c0_i32, %c0_i32_0 : i32, i32, i32
  }
}

module attributes {stable_mosaic.version = 11 : i64} {
  func.func @_apply_kernel(%arg0: i32, %arg1: memref<512x128xf32, #tpu.memory_space<vmem>>, %arg2: memref<128x128xbf16, #tpu.memory_space<vmem>>, %arg3: memref<1x128xf32, #tpu.memory_space<vmem>>, %arg4: memref<4x1x128xf32, #tpu.memory_space<vmem>>, %arg5: memref<4x1x128xf32, #tpu.memory_space<vmem>>, %arg6: memref<1x128xf32, #tpu.memory_space<vmem>>, %arg7: memref<1x128xf32, #tpu.memory_space<vmem>>, %arg8: memref<512x128xf32, #tpu.memory_space<vmem>>) attributes {dimension_semantics = [#tpu.dimension_semantics<parallel>], iteration_bounds = array<i64: 4>, scalar_prefetch = 0 : i64, scratch_operands = 0 : i64, tpu.core_type = #tpu.core_type<tc>, window_params = [{transform_indices = @transform_0, window_bounds = array<i64: 512, 128>}, {pipeline_mode = #tpu.pipeline_mode<synchronous>, transform_indices = @transform_1, window_bounds = array<i64: 128, 128>}, {pipeline_mode = #tpu.pipeline_mode<synchronous>, transform_indices = @transform_2, window_bounds = array<i64: 1, 128>}, {pipeline_mode = #tpu.pipeline_mode<synchronous>, transform_indices = @transform_3, window_bounds = array<i64: 4, 1, 128>}, {pipeline_mode = #tpu.pipeline_mode<synchronous>, transform_indices = @transform_4, window_bounds = array<i64: 4, 1, 128>}, {pipeline_mode = #tpu.pipeline_mode<synchronous>, transform_indices = @transform_5, window_bounds = array<i64: 1, 128>}, {pipeline_mode = #tpu.pipeline_mode<synchronous>, transform_indices = @transform_6, window_bounds = array<i64: 1, 128>}, {transform_indices = @transform_7, window_bounds = array<i64: 512, 128>}]} {
    %c0 = arith.constant 0 : index
    %c0_0 = arith.constant 0 : index
    %0 = vector.load %arg1[%c0, %c0_0] : memref<512x128xf32, #tpu.memory_space<vmem>>, vector<512x128xf32>
    %c0_1 = arith.constant 0 : index
    %c0_2 = arith.constant 0 : index
    %1 = vector.load %arg1[%c0_1, %c0_2] : memref<512x128xf32, #tpu.memory_space<vmem>>, vector<512x128xf32>
    %2 = arith.truncf %1 : vector<512x128xf32> to vector<512x128xbf16>
    %c0_3 = arith.constant 0 : index
    %c0_4 = arith.constant 0 : index
    %3 = vector.load %arg2[%c0_3, %c0_4] : memref<128x128xbf16, #tpu.memory_space<vmem>>, vector<128x128xbf16>
    %cst = arith.constant dense<0.000000e+00> : vector<512x128xf32>
    %4 = tpu.matmul %2, %3, %cst {dimension_numbers = #tpu.dot_dimension_numbers<[1], [0], [0], [1], [0, 0, 1, 1], [], []>} : vector<512x128xbf16>, vector<128x128xbf16>, vector<512x128xf32> -> vector<512x128xf32>
    %c0_5 = arith.constant 0 : index
    %c0_6 = arith.constant 0 : index
    %5 = vector.load %arg3[%c0_5, %c0_6] : memref<1x128xf32, #tpu.memory_space<vmem>>, vector<1x128xf32>
    %6 = vector.broadcast %5 : vector<1x128xf32> to vector<512x128xf32>
    %7 = arith.addf %4, %6 : vector<512x128xf32>
    %c0_7 = arith.constant 0 : index
    %c0_8 = arith.constant 0 : index
    %c0_9 = arith.constant 0 : index
    %8 = vector.load %arg4[%c0_7, %c0_8, %c0_9] : memref<4x1x128xf32, #tpu.memory_space<vmem>>, vector<4x1x128xf32>
    %c0_10 = arith.constant 0 : index
    %c0_11 = arith.constant 0 : index
    %c0_12 = arith.constant 0 : index
    %9 = vector.load %arg5[%c0_10, %c0_11, %c0_12] : memref<4x1x128xf32, #tpu.memory_space<vmem>>, vector<4x1x128xf32>
    %cst_13 = arith.constant dense<0xFF800000> : vector<1x128xf32>
    %10 = vector.multi_reduction <maximumf>, %8, %cst_13 [0] : vector<4x1x128xf32> to vector<1x128xf32>
    %11 = vector.shape_cast %10 : vector<1x128xf32> to vector<1x1x128xf32>
    %12 = vector.broadcast %11 : vector<1x1x128xf32> to vector<4x1x128xf32>
    %13 = arith.subf %8, %12 : vector<4x1x128xf32>
    %14 = math.exp %13 : vector<4x1x128xf32>
    %15 = arith.mulf %9, %14 : vector<4x1x128xf32>
    %cst_14 = arith.constant dense<0.000000e+00> : vector<1x128xf32>
    %16 = vector.multi_reduction <add>, %15, %cst_14 [0] : vector<4x1x128xf32> to vector<1x128xf32>
    %17 = math.log %16 : vector<1x128xf32>
    %18 = arith.addf %10, %17 : vector<1x128xf32>
    %19 = vector.broadcast %18 : vector<1x128xf32> to vector<512x128xf32>
    %20 = arith.subf %7, %19 : vector<512x128xf32>
    %21 = math.exp %20 : vector<512x128xf32>
    %22 = arith.mulf %0, %21 : vector<512x128xf32>
    %cst_15 = arith.constant 0.000000e+00 : f32
    %23 = vector.broadcast %cst_15 : f32 to vector<512x128xf32>
    %24 = arith.maximumf %22, %23 : vector<512x128xf32>
    %cst_16 = arith.constant dense<0.000000e+00> : vector<512xf32>
    %25 = vector.multi_reduction <add>, %24, %cst_16 [1] : vector<512x128xf32> to vector<512xf32>
    %26 = vector.shape_cast %25 : vector<512xf32> to vector<512x1xf32>
    %cst_17 = arith.constant 1.280000e+02 : f32
    %27 = vector.broadcast %cst_17 : f32 to vector<512x1xf32>
    %28 = arith.divf %26, %27 : vector<512x1xf32>
    %29 = arith.mulf %24, %24 : vector<512x128xf32>
    %cst_18 = arith.constant dense<0.000000e+00> : vector<512xf32>
    %30 = vector.multi_reduction <add>, %29, %cst_18 [1] : vector<512x128xf32> to vector<512xf32>
    %31 = vector.shape_cast %30 : vector<512xf32> to vector<512x1xf32>
    %cst_19 = arith.constant 1.280000e+02 : f32
    %32 = vector.broadcast %cst_19 : f32 to vector<512x1xf32>
    %33 = arith.divf %31, %32 : vector<512x1xf32>
    %34 = arith.mulf %28, %28 : vector<512x1xf32>
    %35 = arith.subf %33, %34 : vector<512x1xf32>
    %cst_20 = arith.constant 0.000000e+00 : f32
    %36 = vector.broadcast %cst_20 : f32 to vector<512x1xf32>
    %37 = arith.maximumf %35, %36 : vector<512x1xf32>
    %38 = vector.broadcast %28 : vector<512x1xf32> to vector<512x128xf32>
    %39 = arith.subf %24, %38 : vector<512x128xf32>
    %cst_21 = arith.constant 9.99999997E-7 : f32
    %40 = vector.broadcast %cst_21 : f32 to vector<512x1xf32>
    %41 = arith.addf %37, %40 : vector<512x1xf32>
    %42 = math.rsqrt %41 : vector<512x1xf32>
    %43 = vector.broadcast %42 : vector<512x1xf32> to vector<512x128xf32>
    %44 = arith.mulf %39, %43 : vector<512x128xf32>
    %c0_22 = arith.constant 0 : index
    %c0_23 = arith.constant 0 : index
    %45 = vector.load %arg6[%c0_22, %c0_23] : memref<1x128xf32, #tpu.memory_space<vmem>>, vector<1x128xf32>
    %46 = vector.broadcast %45 : vector<1x128xf32> to vector<512x128xf32>
    %47 = arith.mulf %44, %46 : vector<512x128xf32>
    %c0_24 = arith.constant 0 : index
    %c0_25 = arith.constant 0 : index
    %48 = vector.load %arg7[%c0_24, %c0_25] : memref<1x128xf32, #tpu.memory_space<vmem>>, vector<1x128xf32>
    %49 = vector.broadcast %48 : vector<1x128xf32> to vector<512x128xf32>
    %50 = arith.addf %47, %49 : vector<512x128xf32>
    %c0_26 = arith.constant 0 : index
    %c0_27 = arith.constant 0 : index
    %51 = vector.load %arg8[%c0_26, %c0_27] : memref<512x128xf32, #tpu.memory_space<vmem>>, vector<512x128xf32>
    tpu.vector_store %arg8[%c0_26, %c0_27], %50 {strides = array<i32>} : memref<512x128xf32, #tpu.memory_space<vmem>>, vector<512x128xf32>,
    return
  }
  func.func @transform_0(%arg0: i32) -> (i32, i32) {
    %c0_i32 = arith.constant 0 : i32
    %c0_i32_0 = arith.constant 0 : i32
    return %arg0, %c0_i32 : i32, i32
  }
  func.func @transform_1(%arg0: i32) -> (i32, i32) {
    %c0_i32 = arith.constant 0 : i32
    %c0_i32_0 = arith.constant 0 : i32
    %c0_i32_1 = arith.constant 0 : i32
    return %c0_i32, %c0_i32_0 : i32, i32
  }
  func.func @transform_2(%arg0: i32) -> (i32, i32) {
    %c0_i32 = arith.constant 0 : i32
    %c0_i32_0 = arith.constant 0 : i32
    %c0_i32_1 = arith.constant 0 : i32
    return %c0_i32, %c0_i32_0 : i32, i32
  }
  func.func @transform_3(%arg0: i32) -> (i32, i32, i32) {
    %c0_i32 = arith.constant 0 : i32
    %c0_i32_0 = arith.constant 0 : i32
    %c0_i32_1 = arith.constant 0 : i32
    %c0_i32_2 = arith.constant 0 : i32
    return %c0_i32, %c0_i32_0, %c0_i32_1 : i32, i32, i32
  }
  func.func @transform_4(%arg0: i32) -> (i32, i32, i32) {
    %c0_i32 = arith.constant 0 : i32
    %c0_i32_0 = arith.constant 0 : i32
    %c0_i32_1 = arith.constant 0 : i32
    %c0_i32_2 = arith.constant 0 : i32
    return %c0_i32, %c0_i32_0, %c0_i32_1 : i32, i32, i32
  }
  func.func @transform_5(%arg0: i32) -> (i32, i32) {
    %c0_i32 = arith.constant 0 : i32
    %c0_i32_0 = arith.constant 0 : i32
    %c0_i32_1 = arith.constant 0 : i32
    return %c0_i32, %c0_i32_0 : i32, i32
  }
  func.func @transform_6(%arg0: i32) -> (i32, i32) {
    %c0_i32 = arith.constant 0 : i32
    %c0_i32_0 = arith.constant 0 : i32
    %c0_i32_1 = arith.constant 0 : i32
    return %c0_i32, %c0_i32_0 : i32, i32
  }
  func.func @transform_7(%arg0: i32) -> (i32, i32) {
    %c0_i32 = arith.constant 0 : i32
    %c0_i32_0 = arith.constant 0 : i32
    return %arg0, %c0_i32 : i32, i32
  }
}

</mosaic_0001>

<llo_original>
// kernel: attention_dis.2
$region0: #{attention_dis.2}
  #allocation0 [shape = 'u32[]', space=smem, size = 0x4, offset = 0x4, fixed_abs, tag = 'smem constant byte address 0x4 - core index']
  #allocation1 [shape = 'u32[144,128]{1,0:T(1,128)}', space=vmem, size = 0x12000, scoped, tag = 'internal scratch']
  %s0 = inlined_call_operand.hbm [shape: f32[2048,128], index: 0, kind: input, shape index: {}]
  %s1 = inlined_call_operand.vmem [shape: bf16[128,128], index: 1, kind: input, shape index: {}]
  %s2 = inlined_call_operand.vmem [shape: f32[1,128], index: 2, kind: input, shape index: {}]
  %s3 = inlined_call_operand.vmem [shape: f32[4,1,128], index: 3, kind: output, shape index: {0}]
  %s4 = inlined_call_operand.vmem [shape: f32[4,1,128], index: 4, kind: output, shape index: {1}]
  %5 = xla_tuple %s3, %s4
  %s6 = sld [smem:[#allocation0]]
  $region57: #{attention_dis.2} parent=0
    _
  %s8 = ssub.s32 1, %s6
  %s9 = scalar_select 0, %s8, %s6
  $region1: #{attention_dis.2} parent=0
    #allocation2 [shape = 'u8[524288]{0}', space=vmem, size = 0x80000, scoped, tag = 'input window, operand 0']
    #allocation3 [shape = 's32[2]{0}', space=sflag, size = 0x8, scoped, tag = 'scoped memory for attention_dis.2']
    %10 = vsyncpa [#allocation3], 0
    %s11 = scalar_lea.sflag [#allocation3], 1
    %12 = vsyncpa %s11, 0
    loop: start=0, step=1, limit=6
    $region2: #{attention_dis.2} parent=1 // loop_pre_header
      _
    $region3: #{attention_dis.2} parent=1 // loop_header
      %s14 = sphi 0, %s18
      %p15 = scmp.ge.s32.totalorder %s14, 6
      %s24 = sphi 0, %s26
      %s27 = sphi 0, %s24
      %s28 = sphi 0, %s27
      %s44 = sphi 0, %s28
      %s48 = sphi 0, %s48
      %s50 = sphi 0, %s48
      %s51 = sphi 0, %s50
      %s65 = sphi 0, %s51
      %s69 = sphi 0, %s69
      %s71 = sphi 0, %s69
      %s72 = sphi 0, %s71
      %s86 = sphi 0, %s72
      %s92 = sphi 0, %s94
      %s95 = sphi 0, %s92
      %s96 = sphi 0, %s95
      %s112 = sphi 0, %s96
      %s118 = sphi 0, %s120
      %s121 = sphi 0, %s118
      %s122 = sphi 0, %s121
      %s138 = sphi 0, %s122
    $region4: #{attention_dis.2} parent=1 // loop_header_branch
      %17 = sbr.rel (%p15) target = $region8
    $region5: #{attention_dis.2} parent=1 // loop_body
      %s19 = ssub.s32 %s14, 1
      %s20 = ssub.s32 %s14, 2
      %s21 = sadd.s32 %s14, 1
      %s22 = ssub.s32 %s14, %s21
      %p23 = scmp.eq.s32.totalorder %s22, 0
      %s25 = sadd.s32 %s24, 1
      %s26 = scalar_select %p23, %s24, %s25
      %p29 = pneg %p23
      %p30 = scmp.eq.s32.totalorder %s14, 3
      %p31 = por %p29, %p30
      %p32 = scmp.ne.s32.totalorder %s24, %s27
      %p33 = scmp.eq.s32.totalorder %s14, 0
      %p34 = por %p32, %p33
      %p35 = scmp.ne.s32.totalorder %s24, %s27
      %p36 = scmp.eq.s32.totalorder %s19, 3
      %p37 = por %p35, %p36
      %p38 = scmp.ne.s32.totalorder %s27, %s28
      %p39 = scmp.eq.s32.totalorder %s19, 0
      %p40 = por %p38, %p39
      %p41 = scmp.ne.s32.totalorder %s27, %s28
      %p42 = scmp.eq.s32.totalorder %s20, 3
      %p43 = por %p41, %p42
      %p45 = scmp.ne.s32.totalorder %s28, %s44
      %p46 = scmp.eq.s32.totalorder %s20, 0
      %p47 = por %p45, %p46
      %s49 = sadd.s32 %s48, 1
      %p52 = scmp.eq.s32.totalorder %s14, 3
      %p53 = scmp.ne.s32.totalorder %s48, %s50
      %p54 = scmp.eq.s32.totalorder %s14, 0
      %p55 = por %p53, %p54
      %p56 = scmp.ne.s32.totalorder %s48, %s50
      %p57 = scmp.eq.s32.totalorder %s19, 3
      %p58 = por %p56, %p57
      %p59 = scmp.ne.s32.totalorder %s50, %s51
      %p60 = scmp.eq.s32.totalorder %s19, 0
      %p61 = por %p59, %p60
      %p62 = scmp.ne.s32.totalorder %s50, %s51
      %p63 = scmp.eq.s32.totalorder %s20, 3
      %p64 = por %p62, %p63
      %p66 = scmp.ne.s32.totalorder %s51, %s65
      %p67 = scmp.eq.s32.totalorder %s20, 0
      %p68 = por %p66, %p67
      %s70 = sadd.s32 %s69, 1
      %p73 = scmp.eq.s32.totalorder %s14, 3
      %p74 = scmp.ne.s32.totalorder %s69, %s71
      %p75 = scmp.eq.s32.totalorder %s14, 0
      %p76 = por %p74, %p75
      %p77 = scmp.ne.s32.totalorder %s69, %s71
      %p78 = scmp.eq.s32.totalorder %s19, 3
      %p79 = por %p77, %p78
      %p80 = scmp.ne.s32.totalorder %s71, %s72
      %p81 = scmp.eq.s32.totalorder %s19, 0
      %p82 = por %p80, %p81
      %p83 = scmp.ne.s32.totalorder %s71, %s72
      %p84 = scmp.eq.s32.totalorder %s20, 3
      %p85 = por %p83, %p84
      %p87 = scmp.ne.s32.totalorder %s72, %s86
      %p88 = scmp.eq.s32.totalorder %s20, 0
      %p89 = por %p87, %p88
      %s90 = ssub.s32 %s14, %s21
      %p91 = scmp.eq.s32.totalorder %s90, 0
      %s93 = sadd.s32 %s92, 1
      %s94 = scalar_select %p91, %s92, %s93
      %p97 = pneg %p91
      %p98 = scmp.eq.s32.totalorder %s14, 3
      %p99 = por %p97, %p98
      %p100 = scmp.ne.s32.totalorder %s92, %s95
      %p101 = scmp.eq.s32.totalorder %s14, 0
      %p102 = por %p100, %p101
      %p103 = scmp.ne.s32.totalorder %s92, %s95
      %p104 = scmp.eq.s32.totalorder %s19, 3
      %p105 = por %p103, %p104
      %p106 = scmp.ne.s32.totalorder %s95, %s96
      %p107 = scmp.eq.s32.totalorder %s19, 0
      %p108 = por %p106, %p107
      %p109 = scmp.ne.s32.totalorder %s95, %s96
      %p110 = scmp.eq.s32.totalorder %s20, 3
      %p111 = por %p109, %p110
      %p113 = scmp.ne.s32.totalorder %s96, %s112
      %p114 = scmp.eq.s32.totalorder %s20, 0
      %p115 = por %p113, %p114
      %s116 = ssub.s32 %s14, %s21
      %p117 = scmp.eq.s32.totalorder %s116, 0
      %s119 = sadd.s32 %s118, 1
      %s120 = scalar_select %p117, %s118, %s119
      %p123 = pneg %p117
      %p124 = scmp.eq.s32.totalorder %s14, 3
      %p125 = por %p123, %p124
      %p126 = scmp.ne.s32.totalorder %s118, %s121
      %p127 = scmp.eq.s32.totalorder %s14, 0
      %p128 = por %p126, %p127
      %p129 = scmp.ne.s32.totalorder %s118, %s121
      %p130 = scmp.eq.s32.totalorder %s19, 3
      %p131 = por %p129, %p130
      %p132 = scmp.ne.s32.totalorder %s121, %s122
      %p133 = scmp.eq.s32.totalorder %s19, 0
      %p134 = por %p132, %p133
      %p135 = scmp.ne.s32.totalorder %s121, %s122
      %p136 = scmp.eq.s32.totalorder %s20, 3
      %p137 = por %p135, %p136
      %p139 = scmp.ne.s32.totalorder %s122, %s138
      %p140 = scmp.eq.s32.totalorder %s20, 0
      %p141 = por %p139, %p140
      %p142 = scmp.le.s32.totalorder 1, %s14
      %p143 = scmp.lt.s32.totalorder %s14, 5
      %p144 = pnand %p142, %p143
      %p145 = pneg %p144
      // Predicated region
      $region9: #{attention_dis.2} parent=5 // pred_check
        _
      $region10: #{attention_dis.2} parent=5 // pred_check_branch
        %147 = sbr.rel (%p144) target = $region12
      $region11: #{attention_dis.2} parent=5 // pred_region
        %s148 = ssub.s32 %s14, 1
        // Predicated region
        $region13: #{attention_dis.2} parent=11 // pred_check
          %p149 = pneg %p61
        $region14: #{attention_dis.2} parent=11 // pred_check_branch
          %151 = sbr.rel (%p149) target = $region16
        $region15: #{attention_dis.2} parent=11 // pred_region
          _
        $region16: #{attention_dis.2} parent=11 // pred_fallthru
          _
        // Predicated region
        $region17: #{attention_dis.2} parent=11 // pred_check
          %p152 = pneg %p82
        $region18: #{attention_dis.2} parent=11 // pred_check_branch
          %154 = sbr.rel (%p152) target = $region20
        $region19: #{attention_dis.2} parent=11 // pred_region
          _
        $region20: #{attention_dis.2} parent=11 // pred_fallthru
          _
      $region12: #{attention_dis.2} parent=5 // pred_fallthru
        _
      %p155 = scmp.lt.s32.totalorder %s14, 4
      // Predicated region
      $region21: #{attention_dis.2} parent=5 // pred_check
        %p156 = pneg %p155
      $region22: #{attention_dis.2} parent=5 // pred_check_branch
        %158 = sbr.rel (%p156) target = $region24
      $region23: #{attention_dis.2} parent=5 // pred_region
        // Predicated region
        $region25: #{attention_dis.2} parent=23 // pred_check
          %p159 = pneg %p34
        $region26: #{attention_dis.2} parent=23 // pred_check_branch
          %161 = sbr.rel (%p159) target = $region28
        $region27: #{attention_dis.2} parent=23 // pred_region
          %s162 = sand.u32 %s24, 1
          %s163 = scalar_lea.sflag [#allocation3], %s162
          %s164 = sand.u32 %s24, 1
          %s165 = smul.addr %s164, 512
          %s166 = scalar_lea.vmem [#allocation2], %s165
          %s167 = smul.u32 64, %s14
          %s169 = ssub.s32 8192, 8192
          %170 = vsyncadd %s163, %s169
          %s171 = smul.addr %s167, 128
          %s172 = scalar_lea.hbm %s0, %s171
          %s173 = sshll.u32 %s166, 4
          %s174 = int_to_ptr.vmem [resolvable:$true] %s173
          %179 = dma.hbm_to_vmem [thread:$0]  %s172, 8192, %s174, %s163, 128, 128, 8
        $region28: #{attention_dis.2} parent=23 // pred_fallthru
          _
      $region24: #{attention_dis.2} parent=5 // pred_fallthru
        _
      %p180 = scmp.le.s32.totalorder 1, %s14
      %p181 = scmp.lt.s32.totalorder %s14, 5
      %p182 = pnand %p180, %p181
      %p183 = pneg %p182
      // Predicated region
      $region29: #{attention_dis.2} parent=5 // pred_check
        _
      $region30: #{attention_dis.2} parent=5 // pred_check_branch
        %185 = sbr.rel (%p182) target = $region32
      $region31: #{attention_dis.2} parent=5 // pred_region
        %s186 = ssub.s32 %s14, 1
        %s187 = sand.u32 %s27, 1
        %s188 = scalar_lea.sflag [#allocation3], %s187
        %s189 = sand.u32 %s27, 1
        %s190 = smul.addr %s189, 512
        %s191 = scalar_lea.vmem [#allocation2], %s190
        // Predicated region
        $region33: #{attention_dis.2} parent=31 // pred_check
          %p192 = pneg %p40
        $region34: #{attention_dis.2} parent=31 // pred_check_branch
          %194 = sbr.rel (%p192) target = $region36
        $region35: #{attention_dis.2} parent=31 // pred_region
          %195 = dma.done %s188, 8192
        $region36: #{attention_dis.2} parent=31 // pred_fallthru
          _
        %s196 = sand.u32 %s27, 1
        %s197 = scalar_lea.sflag [#allocation3], %s196
        %s198 = sand.u32 %s27, 1
        %s199 = smul.addr %s198, 512
        %s200 = scalar_lea.vmem [#allocation2], %s199
        %p201 = pneg %p40
        %p202 = pneg %p37
        %p203 = pneg %p61
        %p204 = pneg %p58
        %p205 = pneg %p82
        %p206 = pneg %p79
        %p207 = pneg %p108
        %p208 = pneg %p105
        %p209 = scmp.lt.s32.totalorder %s19, 3
        %s210 = scalar_select %p209, %s19, 3
        %s211 = scalar_lea.vmem %s3, %s210
        %p212 = pneg %p134
        %p213 = pneg %p131
        %p214 = scmp.lt.s32.totalorder %s19, 3
        %s215 = scalar_select %p214, %s19, 3
        %s216 = scalar_lea.vmem %s4, %s215
        %s217 = smul.u32 64, %s19
        %p218 = scmp.lt.s32.totalorder %s19, 3
        %s219 = scalar_select %p218, %s19, 3
        %s220 = scalar_lea.vmem %s3, %s219
        %p221 = scmp.lt.s32.totalorder %s19, 3
        %s222 = scalar_select %p221, %s19, 3
        %s223 = scalar_lea.vmem %s4, %s222
        %v225 = vld [vmem:[%s191] sm:$0xff]
        %v226 = vld [vmem:[%s191 + $0x8] sm:$0xff]
        %v227 = vld [vmem:[%s191 + $0x10] sm:$0xff]
        %v228 = vld [vmem:[%s191 + $0x18] sm:$0xff]
        %v229 = vld [vmem:[%s191 + $0x20] sm:$0xff]
        %v230 = vld [vmem:[%s191 + $0x28] sm:$0xff]
        %v231 = vld [vmem:[%s191 + $0x30] sm:$0xff]
        %v232 = vld [vmem:[%s191 + $0x38] sm:$0xff]
        %v233 = vld [vmem:[%s191 + $0x40] sm:$0xff]
        %v234 = vld [vmem:[%s191 + $0x48] sm:$0xff]
        %v235 = vld [vmem:[%s191 + $0x50] sm:$0xff]
        %v236 = vld [vmem:[%s191 + $0x58] sm:$0xff]
        %v237 = vld [vmem:[%s191 + $0x60] sm:$0xff]
        %v238 = vld [vmem:[%s191 + $0x68] sm:$0xff]
        %v239 = vld [vmem:[%s191 + $0x70] sm:$0xff]
        %v240 = vld [vmem:[%s191 + $0x78] sm:$0xff]
        %v241 = vld [vmem:[%s191 + $0x80] sm:$0xff]
        %v242 = vld [vmem:[%s191 + $0x88] sm:$0xff]
        %v243 = vld [vmem:[%s191 + $0x90] sm:$0xff]
        %v244 = vld [vmem:[%s191 + $0x98] sm:$0xff]
        %v245 = vld [vmem:[%s191 + $0xa0] sm:$0xff]
        %v246 = vld [vmem:[%s191 + $0xa8] sm:$0xff]
        %v247 = vld [vmem:[%s191 + $0xb0] sm:$0xff]
        %v248 = vld [vmem:[%s191 + $0xb8] sm:$0xff]
        %v249 = vld [vmem:[%s191 + $0xc0] sm:$0xff]
        %v250 = vld [vmem:[%s191 + $0xc8] sm:$0xff]
        %v251 = vld [vmem:[%s191 + $0xd0] sm:$0xff]
        %v252 = vld [vmem:[%s191 + $0xd8] sm:$0xff]
        %v253 = vld [vmem:[%s191 + $0xe0] sm:$0xff]
        %v254 = vld [vmem:[%s191 + $0xe8] sm:$0xff]
        %v255 = vld [vmem:[%s191 + $0xf0] sm:$0xff]
        %v256 = vld [vmem:[%s191 + $0xf8] sm:$0xff]
        %v257 = vld [vmem:[%s191 + $0x100] sm:$0xff]
        %v258 = vld [vmem:[%s191 + $0x108] sm:$0xff]
        %v259 = vld [vmem:[%s191 + $0x110] sm:$0xff]
        %v260 = vld [vmem:[%s191 + $0x118] sm:$0xff]
        %v261 = vld [vmem:[%s191 + $0x120] sm:$0xff]
        %v262 = vld [vmem:[%s191 + $0x128] sm:$0xff]
        %v263 = vld [vmem:[%s191 + $0x130] sm:$0xff]
        %v264 = vld [vmem:[%s191 + $0x138] sm:$0xff]
        %v265 = vld [vmem:[%s191 + $0x140] sm:$0xff]
        %v266 = vld [vmem:[%s191 + $0x148] sm:$0xff]
        %v267 = vld [vmem:[%s191 + $0x150] sm:$0xff]
        %v268 = vld [vmem:[%s191 + $0x158] sm:$0xff]
        %v269 = vld [vmem:[%s191 + $0x160] sm:$0xff]
        %v270 = vld [vmem:[%s191 + $0x168] sm:$0xff]
        %v271 = vld [vmem:[%s191 + $0x170] sm:$0xff]
        %v272 = vld [vmem:[%s191 + $0x178] sm:$0xff]
        %v273 = vld [vmem:[%s191 + $0x180] sm:$0xff]
        %v274 = vld [vmem:[%s191 + $0x188] sm:$0xff]
        %v275 = vld [vmem:[%s191 + $0x190] sm:$0xff]
        %v276 = vld [vmem:[%s191 + $0x198] sm:$0xff]
        %v277 = vld [vmem:[%s191 + $0x1a0] sm:$0xff]
        %v278 = vld [vmem:[%s191 + $0x1a8] sm:$0xff]
        %v279 = vld [vmem:[%s191 + $0x1b0] sm:$0xff]
        %v280 = vld [vmem:[%s191 + $0x1b8] sm:$0xff]
        %v281 = vld [vmem:[%s191 + $0x1c0] sm:$0xff]
        %v282 = vld [vmem:[%s191 + $0x1c8] sm:$0xff]
        %v283 = vld [vmem:[%s191 + $0x1d0] sm:$0xff]
        %v284 = vld [vmem:[%s191 + $0x1d8] sm:$0xff]
        %v285 = vld [vmem:[%s191 + $0x1e0] sm:$0xff]
        %v286 = vld [vmem:[%s191 + $0x1e8] sm:$0xff]
        %v287 = vld [vmem:[%s191 + $0x1f0] sm:$0xff]
        %v288 = vld [vmem:[%s191 + $0x1f8] sm:$0xff]
        %v289 = vpack.c.bf16 %v226, %v225
        %v290 = vpack.c.bf16 %v228, %v227
        %v291 = vpack.c.bf16 %v230, %v229
        %v292 = vpack.c.bf16 %v232, %v231
        %v293 = vpack.c.bf16 %v234, %v233
        %v294 = vpack.c.bf16 %v236, %v235
        %v295 = vpack.c.bf16 %v238, %v237
        %v296 = vpack.c.bf16 %v240, %v239
        %v297 = vpack.c.bf16 %v242, %v241
        %v298 = vpack.c.bf16 %v244, %v243
        %v299 = vpack.c.bf16 %v246, %v245
        %v300 = vpack.c.bf16 %v248, %v247
        %v301 = vpack.c.bf16 %v250, %v249
        %v302 = vpack.c.bf16 %v252, %v251
        %v303 = vpack.c.bf16 %v254, %v253
        %v304 = vpack.c.bf16 %v256, %v255
        %v305 = vpack.c.bf16 %v258, %v257
        %v306 = vpack.c.bf16 %v260, %v259
        %v307 = vpack.c.bf16 %v262, %v261
        %v308 = vpack.c.bf16 %v264, %v263
        %v309 = vpack.c.bf16 %v266, %v265
        %v310 = vpack.c.bf16 %v268, %v267
        %v311 = vpack.c.bf16 %v270, %v269
        %v312 = vpack.c.bf16 %v272, %v271
        %v313 = vpack.c.bf16 %v274, %v273
        %v314 = vpack.c.bf16 %v276, %v275
        %v315 = vpack.c.bf16 %v278, %v277
        %v316 = vpack.c.bf16 %v280, %v279
        %v317 = vpack.c.bf16 %v282, %v281
        %v318 = vpack.c.bf16 %v284, %v283
        %v319 = vpack.c.bf16 %v286, %v285
        %v320 = vpack.c.bf16 %v288, %v287
        %v321 = vld [vmem:[%s1] sm:$0xf]
        %v322 = vld [vmem:[%s1 + $0x4] sm:$0xf]
        %v323 = vld [vmem:[%s1 + $0x8] sm:$0xf]
        %v324 = vld [vmem:[%s1 + $0xc] sm:$0xf]
        %v325 = vld [vmem:[%s1 + $0x10] sm:$0xf]
        %v326 = vld [vmem:[%s1 + $0x14] sm:$0xf]
        %v327 = vld [vmem:[%s1 + $0x18] sm:$0xf]
        %v328 = vld [vmem:[%s1 + $0x1c] sm:$0xf]
        %v329 = vld [vmem:[%s1 + $0x20] sm:$0xf]
        %v330 = vld [vmem:[%s1 + $0x24] sm:$0xf]
        %v331 = vld [vmem:[%s1 + $0x28] sm:$0xf]
        %v332 = vld [vmem:[%s1 + $0x2c] sm:$0xf]
        %v333 = vld [vmem:[%s1 + $0x30] sm:$0xf]
        %v334 = vld [vmem:[%s1 + $0x34] sm:$0xf]
        %v335 = vld [vmem:[%s1 + $0x38] sm:$0xf]
        %v336 = vld [vmem:[%s1 + $0x3c] sm:$0xf]
        %v337 = vld [vmem:[%s2] sm:$0x1]
        %v339 = vlaneseq
        %v340 = vshrl.u32 %v339, 7
        %v341 = vsub.s32 0, %v340
        %v342 = vrot.slane %v337, %v341
        %v360 = vunpack.c.l.b16 %v321
        %v361 = vunpack.c.l.b16 %v322
        %v362 = vunpack.c.l.b16 %v323
        %v363 = vunpack.c.l.b16 %v324
        %v364 = vunpack.c.l.b16 %v325
        %v365 = vunpack.c.l.b16 %v326
        %v366 = vunpack.c.l.b16 %v327
        %v367 = vunpack.c.l.b16 %v328
        %v368 = vunpack.c.l.b16 %v329
        %v369 = vunpack.c.l.b16 %v330
        %v370 = vunpack.c.l.b16 %v331
        %v371 = vunpack.c.l.b16 %v332
        %v372 = vunpack.c.l.b16 %v333
        %v373 = vunpack.c.l.b16 %v334
        %v374 = vunpack.c.l.b16 %v335
        %v375 = vunpack.c.l.b16 %v336
        %v376 = vpack.c.b16 %v361, %v360
        %v377 = vpack.c.b16 %v363, %v362
        %v378 = vpack.c.b16 %v365, %v364
        %v379 = vpack.c.b16 %v367, %v366
        %v380 = vpack.c.b16 %v369, %v368
        %v381 = vpack.c.b16 %v371, %v370
        %v382 = vpack.c.b16 %v373, %v372
        %v383 = vpack.c.b16 %v375, %v374
        %392 = vmatprep.subr.bf16.mxu0 0
        %393 = vmatpush1.bf16.msra.mxu0 %v376
        %394 = vmatprep.subr.bf16.mxu0 0
        %395 = vmatpush1.bf16.msra.mxu0 %v377
        %396 = vmatprep.subr.bf16.mxu0 0
        %397 = vmatpush1.bf16.msra.mxu0 %v378
        %398 = vmatprep.subr.bf16.mxu0 0
        %399 = vmatpush1.bf16.msra.mxu0 %v379
        %400 = vmatprep.subr.bf16.mxu0 0
        %401 = vmatpush1.bf16.msra.mxu0 %v380
        %402 = vmatprep.subr.bf16.mxu0 0
        %403 = vmatpush1.bf16.msra.mxu0 %v381
        %404 = vmatprep.subr.bf16.mxu0 0
        %405 = vmatpush1.bf16.msra.mxu0 %v382
        %406 = vmatprep.subr.bf16.mxu0 0
        %407 = vmatpush1.bf16.msra.mxu0 %v383
        %408 = vmatprep.subr.bf16.mxu0 0
        %409 = vmatpush1.bf16.msra.mxu0 0
        %410 = vmatprep.subr.bf16.mxu0 0
        %411 = vmatpush1.bf16.msra.mxu0 0
        %412 = vmatprep.subr.bf16.mxu0 0
        %413 = vmatpush1.bf16.msra.mxu0 0
        %414 = vmatprep.subr.bf16.mxu0 0
        %415 = vmatpush1.bf16.msra.mxu0 0
        %416 = vmatprep.subr.bf16.mxu0 0
        %417 = vmatpush1.bf16.msra.mxu0 0
        %418 = vmatprep.subr.bf16.mxu0 0
        %419 = vmatpush1.bf16.msra.mxu0 0
        %420 = vmatprep.subr.bf16.mxu0 0
        %421 = vmatpush1.bf16.msra.mxu0 0
        %422 = vmatprep.subr.bf16.mxu0 0
        %423 = vmatpush1.bf16.msra.mxu0 0
        %424 = vmatprep.mubr.bf16.mxu0 0
        %425 = vmatmul.mubr.bf16.gmra.mrb[0].mxu0 %v289
        %v426 = vpop.f32.mrb[0].mxu0
        %v427 = vadd.f32 %v342, %v426
        %v428 = vpop.f32.mrb[0].mxu0
        %v429 = vpop.f32.mrb[0].mxu0
        %v430 = vadd.f32 %v342, %v429
        %v431 = vpop.f32.mrb[0].mxu0
        %432 = vmatprep.mubr.bf16.mxu0 0
        %433 = vmatmul.mubr.bf16.gmra.mrb[0].mxu0 %v290
        %v434 = vpop.f32.mrb[0].mxu0
        %v435 = vadd.f32 %v342, %v434
        %v436 = vpop.f32.mrb[0].mxu0
        %v437 = vpop.f32.mrb[0].mxu0
        %v438 = vadd.f32 %v342, %v437
        %v439 = vpop.f32.mrb[0].mxu0
        %440 = vmatprep.mubr.bf16.mxu0 0
        %441 = vmatmul.mubr.bf16.gmra.mrb[0].mxu0 %v291
        %v442 = vpop.f32.mrb[0].mxu0
        %v443 = vadd.f32 %v342, %v442
        %v444 = vpop.f32.mrb[0].mxu0
        %v445 = vpop.f32.mrb[0].mxu0
        %v446 = vadd.f32 %v342, %v445
        %v447 = vpop.f32.mrb[0].mxu0
        %448 = vmatprep.mubr.bf16.mxu0 0
        %449 = vmatmul.mubr.bf16.gmra.mrb[0].mxu0 %v292
        %v450 = vpop.f32.mrb[0].mxu0
        %v451 = vadd.f32 %v342, %v450
        %v452 = vpop.f32.mrb[0].mxu0
        %v453 = vpop.f32.mrb[0].mxu0
        %v454 = vadd.f32 %v342, %v453
        %v455 = vpop.f32.mrb[0].mxu0
        %456 = vmatprep.mubr.bf16.mxu0 0
        %457 = vmatmul.mubr.bf16.gmra.mrb[0].mxu0 %v293
        %v458 = vpop.f32.mrb[0].mxu0
        %v459 = vadd.f32 %v342, %v458
        %v460 = vpop.f32.mrb[0].mxu0
        %v461 = vpop.f32.mrb[0].mxu0
        %v462 = vadd.f32 %v342, %v461
        %v463 = vpop.f32.mrb[0].mxu0
        %464 = vmatprep.mubr.bf16.mxu0 0
        %465 = vmatmul.mubr.bf16.gmra.mrb[0].mxu0 %v294
        %v466 = vpop.f32.mrb[0].mxu0
        %v467 = vadd.f32 %v342, %v466
        %v468 = vpop.f32.mrb[0].mxu0
        %v469 = vpop.f32.mrb[0].mxu0
        %v470 = vadd.f32 %v342, %v469
        %v471 = vpop.f32.mrb[0].mxu0
        %472 = vmatprep.mubr.bf16.mxu0 0
        %473 = vmatmul.mubr.bf16.gmra.mrb[0].mxu0 %v295
        %v474 = vpop.f32.mrb[0].mxu0
        %v475 = vadd.f32 %v342, %v474
        %v476 = vpop.f32.mrb[0].mxu0
        %v477 = vpop.f32.mrb[0].mxu0
        %v478 = vadd.f32 %v342, %v477
        %v479 = vpop.f32.mrb[0].mxu0
        %480 = vmatprep.mubr.bf16.mxu0 0
        %481 = vmatmul.mubr.bf16.gmra.mrb[0].mxu0 %v296
        %v482 = vpop.f32.mrb[0].mxu0
        %v483 = vadd.f32 %v342, %v482
        %v484 = vpop.f32.mrb[0].mxu0
        %v485 = vpop.f32.mrb[0].mxu0
        %v486 = vadd.f32 %v342, %v485
        %v487 = vpop.f32.mrb[0].mxu0
        %488 = vmatprep.mubr.bf16.mxu0 0
        %489 = vmatmul.mubr.bf16.gmra.mrb[0].mxu0 %v297
        %v490 = vpop.f32.mrb[0].mxu0
        %v491 = vadd.f32 %v342, %v490
        %v492 = vpop.f32.mrb[0].mxu0
        %v493 = vpop.f32.mrb[0].mxu0
        %v494 = vadd.f32 %v342, %v493
        %v495 = vpop.f32.mrb[0].mxu0
        %496 = vmatprep.mubr.bf16.mxu0 0
        %497 = vmatmul.mubr.bf16.gmra.mrb[0].mxu0 %v298
        %v498 = vpop.f32.mrb[0].mxu0
        %v499 = vadd.f32 %v342, %v498
        %v500 = vpop.f32.mrb[0].mxu0
        %v501 = vpop.f32.mrb[0].mxu0
        %v502 = vadd.f32 %v342, %v501
        %v503 = vpop.f32.mrb[0].mxu0
        %504 = vmatprep.mubr.bf16.mxu0 0
        %505 = vmatmul.mubr.bf16.gmra.mrb[0].mxu0 %v299
        %v506 = vpop.f32.mrb[0].mxu0
        %v507 = vadd.f32 %v342, %v506
        %v508 = vpop.f32.mrb[0].mxu0
        %v509 = vpop.f32.mrb[0].mxu0
        %v510 = vadd.f32 %v342, %v509
        %v511 = vpop.f32.mrb[0].mxu0
        %512 = vmatprep.mubr.bf16.mxu0 0
        %513 = vmatmul.mubr.bf16.gmra.mrb[0].mxu0 %v300
        %v514 = vpop.f32.mrb[0].mxu0
        %v515 = vadd.f32 %v342, %v514
        %v516 = vpop.f32.mrb[0].mxu0
        %v517 = vpop.f32.mrb[0].mxu0
        %v518 = vadd.f32 %v342, %v517
        %v519 = vpop.f32.mrb[0].mxu0
        %520 = vmatprep.mubr.bf16.mxu0 0
        %521 = vmatmul.mubr.bf16.gmra.mrb[0].mxu0 %v301
        %v522 = vpop.f32.mrb[0].mxu0
        %v523 = vadd.f32 %v342, %v522
        %v524 = vpop.f32.mrb[0].mxu0
        %v525 = vpop.f32.mrb[0].mxu0
        %v526 = vadd.f32 %v342, %v525
        %v527 = vpop.f32.mrb[0].mxu0
        %528 = vmatprep.mubr.bf16.mxu0 0
        %529 = vmatmul.mubr.bf16.gmra.mrb[0].mxu0 %v302
        %v530 = vpop.f32.mrb[0].mxu0
        %v531 = vadd.f32 %v342, %v530
        %v532 = vpop.f32.mrb[0].mxu0
        %v533 = vpop.f32.mrb[0].mxu0
        %v534 = vadd.f32 %v342, %v533
        %v535 = vpop.f32.mrb[0].mxu0
        %536 = vmatprep.mubr.bf16.mxu0 0
        %537 = vmatmul.mubr.bf16.gmra.mrb[0].mxu0 %v303
        %v538 = vpop.f32.mrb[0].mxu0
        %v539 = vadd.f32 %v342, %v538
        %v540 = vpop.f32.mrb[0].mxu0
        %v541 = vpop.f32.mrb[0].mxu0
        %v542 = vadd.f32 %v342, %v541
        %v543 = vpop.f32.mrb[0].mxu0
        %544 = vmatprep.mubr.bf16.mxu0 0
        %545 = vmatmul.mubr.bf16.gmra.mrb[0].mxu0 %v304
        %v546 = vpop.f32.mrb[0].mxu0
        %v547 = vadd.f32 %v342, %v546
        %v548 = vpop.f32.mrb[0].mxu0
        %v549 = vpop.f32.mrb[0].mxu0
        %v550 = vadd.f32 %v342, %v549
        %v551 = vpop.f32.mrb[0].mxu0
        %552 = vmatprep.mubr.bf16.mxu0 0
        %553 = vmatmul.mubr.bf16.gmra.mrb[0].mxu0 %v305
        %v554 = vpop.f32.mrb[0].mxu0
        %v555 = vadd.f32 %v342, %v554
        %v556 = vpop.f32.mrb[0].mxu0
        %v557 = vpop.f32.mrb[0].mxu0
        %v558 = vadd.f32 %v342, %v557
        %v559 = vpop.f32.mrb[0].mxu0
        %560 = vmatprep.mubr.bf16.mxu0 0
        %561 = vmatmul.mubr.bf16.gmra.mrb[0].mxu0 %v306
        %v562 = vpop.f32.mrb[0].mxu0
        %v563 = vadd.f32 %v342, %v562
        %v564 = vpop.f32.mrb[0].mxu0
        %v565 = vpop.f32.mrb[0].mxu0
        %v566 = vadd.f32 %v342, %v565
        %v567 = vpop.f32.mrb[0].mxu0
        %568 = vmatprep.mubr.bf16.mxu0 0
        %569 = vmatmul.mubr.bf16.gmra.mrb[0].mxu0 %v307
        %v570 = vpop.f32.mrb[0].mxu0
        %v571 = vadd.f32 %v342, %v570
        %v572 = vpop.f32.mrb[0].mxu0
        %v573 = vpop.f32.mrb[0].mxu0
        %v574 = vadd.f32 %v342, %v573
        %v575 = vpop.f32.mrb[0].mxu0
        %576 = vmatprep.mubr.bf16.mxu0 0
        %577 = vmatmul.mubr.bf16.gmra.mrb[0].mxu0 %v308
        %v578 = vpop.f32.mrb[0].mxu0
        %v579 = vadd.f32 %v342, %v578
        %v580 = vpop.f32.mrb[0].mxu0
        %v581 = vpop.f32.mrb[0].mxu0
        %v582 = vadd.f32 %v342, %v581
        %v583 = vpop.f32.mrb[0].mxu0
        %584 = vmatprep.mubr.bf16.mxu0 0
        %585 = vmatmul.mubr.bf16.gmra.mrb[0].mxu0 %v309
        %v586 = vpop.f32.mrb[0].mxu0
        %v587 = vadd.f32 %v342, %v586
        %v588 = vpop.f32.mrb[0].mxu0
        %v589 = vpop.f32.mrb[0].mxu0
        %v590 = vadd.f32 %v342, %v589
        %v591 = vpop.f32.mrb[0].mxu0
        %592 = vmatprep.mubr.bf16.mxu0 0
        %593 = vmatmul.mubr.bf16.gmra.mrb[0].mxu0 %v310
        %v594 = vpop.f32.mrb[0].mxu0
        %v595 = vadd.f32 %v342, %v594
        %v596 = vpop.f32.mrb[0].mxu0
        %v597 = vpop.f32.mrb[0].mxu0
        %v598 = vadd.f32 %v342, %v597
        %v599 = vpop.f32.mrb[0].mxu0
        %600 = vmatprep.mubr.bf16.mxu0 0
        %601 = vmatmul.mubr.bf16.gmra.mrb[0].mxu0 %v311
        %v602 = vpop.f32.mrb[0].mxu0
        %v603 = vadd.f32 %v342, %v602
        %v604 = vpop.f32.mrb[0].mxu0
        %v605 = vpop.f32.mrb[0].mxu0
        %v606 = vadd.f32 %v342, %v605
        %v607 = vpop.f32.mrb[0].mxu0
        %608 = vmatprep.mubr.bf16.mxu0 0
        %609 = vmatmul.mubr.bf16.gmra.mrb[0].mxu0 %v312
        %v610 = vpop.f32.mrb[0].mxu0
        %v611 = vadd.f32 %v342, %v610
        %v612 = vpop.f32.mrb[0].mxu0
        %v613 = vpop.f32.mrb[0].mxu0
        %v614 = vadd.f32 %v342, %v613
        %v615 = vpop.f32.mrb[0].mxu0
        %616 = vmatprep.mubr.bf16.mxu0 0
        %617 = vmatmul.mubr.bf16.gmra.mrb[0].mxu0 %v313
        %v618 = vpop.f32.mrb[0].mxu0
        %v619 = vadd.f32 %v342, %v618
        %v620 = vpop.f32.mrb[0].mxu0
        %v621 = vpop.f32.mrb[0].mxu0
        %v622 = vadd.f32 %v342, %v621
        %v623 = vpop.f32.mrb[0].mxu0
        %624 = vmatprep.mubr.bf16.mxu0 0
        %625 = vmatmul.mubr.bf16.gmra.mrb[0].mxu0 %v314
        %v626 = vpop.f32.mrb[0].mxu0
        %v627 = vadd.f32 %v342, %v626
        %v628 = vpop.f32.mrb[0].mxu0
        %v629 = vpop.f32.mrb[0].mxu0
        %v630 = vadd.f32 %v342, %v629
        %v631 = vpop.f32.mrb[0].mxu0
        %632 = vmatprep.mubr.bf16.mxu0 0
        %633 = vmatmul.mubr.bf16.gmra.mrb[0].mxu0 %v315
        %v634 = vpop.f32.mrb[0].mxu0
        %v635 = vadd.f32 %v342, %v634
        %v636 = vpop.f32.mrb[0].mxu0
        %v637 = vpop.f32.mrb[0].mxu0
        %v638 = vadd.f32 %v342, %v637
        %v639 = vpop.f32.mrb[0].mxu0
        %640 = vmatprep.mubr.bf16.mxu0 0
        %641 = vmatmul.mubr.bf16.gmra.mrb[0].mxu0 %v316
        %v642 = vpop.f32.mrb[0].mxu0
        %v643 = vadd.f32 %v342, %v642
        %v644 = vpop.f32.mrb[0].mxu0
        %v645 = vpop.f32.mrb[0].mxu0
        %v646 = vadd.f32 %v342, %v645
        %v647 = vpop.f32.mrb[0].mxu0
        %648 = vmatprep.mubr.bf16.mxu0 0
        %649 = vmatmul.mubr.bf16.gmra.mrb[0].mxu0 %v317
        %v650 = vpop.f32.mrb[0].mxu0
        %v651 = vadd.f32 %v342, %v650
        %v652 = vpop.f32.mrb[0].mxu0
        %v653 = vpop.f32.mrb[0].mxu0
        %v654 = vadd.f32 %v342, %v653
        %v655 = vpop.f32.mrb[0].mxu0
        %656 = vmatprep.mubr.bf16.mxu0 0
        %657 = vmatmul.mubr.bf16.gmra.mrb[0].mxu0 %v318
        %v658 = vpop.f32.mrb[0].mxu0
        %v659 = vadd.f32 %v342, %v658
        %v660 = vpop.f32.mrb[0].mxu0
        %v661 = vpop.f32.mrb[0].mxu0
        %v662 = vadd.f32 %v342, %v661
        %v663 = vpop.f32.mrb[0].mxu0
        %664 = vmatprep.mubr.bf16.mxu0 0
        %665 = vmatmul.mubr.bf16.gmra.mrb[0].mxu0 %v319
        %v666 = vpop.f32.mrb[0].mxu0
        %v667 = vadd.f32 %v342, %v666
        %v668 = vpop.f32.mrb[0].mxu0
        %v669 = vpop.f32.mrb[0].mxu0
        %v670 = vadd.f32 %v342, %v669
        %v671 = vpop.f32.mrb[0].mxu0
        %672 = vmatprep.mubr.bf16.mxu0 0
        %673 = vmatmul.mubr.bf16.gmra.mrb[0].mxu0 %v320
        %v674 = vpop.f32.mrb[0].mxu0
        %v675 = vadd.f32 %v342, %v674
        %v676 = vpop.f32.mrb[0].mxu0
        %v677 = vpop.f32.mrb[0].mxu0
        %v678 = vadd.f32 %v342, %v677
        %v679 = vpop.f32.mrb[0].mxu0
        %680 = vdwg.mxu0
        %v681 = vmax.f32 %v427, %v443
        %v682 = vmax.f32 %v430, %v446
        %v683 = vmax.f32 %v435, %v451
        %v684 = vmax.f32 %v438, %v454
        %v685 = vmax.f32 %v681, %v459
        %v686 = vmax.f32 %v682, %v462
        %v687 = vmax.f32 %v683, %v467
        %v688 = vmax.f32 %v684, %v470
        %v689 = vmax.f32 %v685, %v475
        %v690 = vmax.f32 %v686, %v478
        %v691 = vmax.f32 %v687, %v483
        %v692 = vmax.f32 %v688, %v486
        %v693 = vmax.f32 %v689, %v491
        %v694 = vmax.f32 %v690, %v494
        %v695 = vmax.f32 %v691, %v499
        %v696 = vmax.f32 %v692, %v502
        %v697 = vmax.f32 %v693, %v507
        %v698 = vmax.f32 %v694, %v510
        %v699 = vmax.f32 %v695, %v515
        %v700 = vmax.f32 %v696, %v518
        %v701 = vmax.f32 %v697, %v523
        %v702 = vmax.f32 %v698, %v526
        %v703 = vmax.f32 %v699, %v531
        %v704 = vmax.f32 %v700, %v534
        %v705 = vmax.f32 %v701, %v539
        %v706 = vmax.f32 %v702, %v542
        %v707 = vmax.f32 %v703, %v547
        %v708 = vmax.f32 %v704, %v550
        %v709 = vmax.f32 %v705, %v555
        %v710 = vmax.f32 %v706, %v558
        %v711 = vmax.f32 %v707, %v563
        %v712 = vmax.f32 %v708, %v566
        %v713 = vmax.f32 %v709, %v571
        %v714 = vmax.f32 %v710, %v574
        %v715 = vmax.f32 %v711, %v579
        %v716 = vmax.f32 %v712, %v582
        %v717 = vmax.f32 %v713, %v587
        %v718 = vmax.f32 %v714, %v590
        %v719 = vmax.f32 %v715, %v595
        %v720 = vmax.f32 %v716, %v598
        %v721 = vmax.f32 %v717, %v603
        %v722 = vmax.f32 %v718, %v606
        %v723 = vmax.f32 %v719, %v611
        %v724 = vmax.f32 %v720, %v614
        %v725 = vmax.f32 %v721, %v619
        %v726 = vmax.f32 %v722, %v622
        %v727 = vmax.f32 %v723, %v627
        %v728 = vmax.f32 %v724, %v630
        %v729 = vmax.f32 %v725, %v635
        %v730 = vmax.f32 %v726, %v638
        %v731 = vmax.f32 %v727, %v643
        %v732 = vmax.f32 %v728, %v646
        %v733 = vmax.f32 %v729, %v651
        %v734 = vmax.f32 %v730, %v654
        %v735 = vmax.f32 %v731, %v659
        %v736 = vmax.f32 %v732, %v662
        %v737 = vmax.f32 %v733, %v667
        %v738 = vmax.f32 %v734, %v670
        %v739 = vmax.f32 %v735, %v675
        %v740 = vmax.f32 %v736, %v678
        %v741 = vmax.f32 %v737, %v738
        %v742 = vmax.f32 %v739, %v740
        %v743 = vmax.f32 %v741, %v742
        %v744 = vrot.slane %v743, 4
        %v745 = vmax.f32 %v743, %v744
        %v746 = vrot.slane %v745, 2
        %v747 = vmax.f32 %v745, %v746
        %v748 = vrot.slane %v747, 1
        %v749 = vmax.f32 %v747, %v748
        %v750 = vsub.f32 %v427, %v749
        %v751 = vsub.f32 %v430, %v749
        %v752 = vsub.f32 %v435, %v749
        %v753 = vsub.f32 %v438, %v749
        %v754 = vsub.f32 %v443, %v749
        %v755 = vsub.f32 %v446, %v749
        %v756 = vsub.f32 %v451, %v749
        %v757 = vsub.f32 %v454, %v749
        %v758 = vsub.f32 %v459, %v749
        %v759 = vsub.f32 %v462, %v749
        %v760 = vsub.f32 %v467, %v749
        %v761 = vsub.f32 %v470, %v749
        %v762 = vsub.f32 %v475, %v749
        %v763 = vsub.f32 %v478, %v749
        %v764 = vsub.f32 %v483, %v749
        %v765 = vsub.f32 %v486, %v749
        %v766 = vsub.f32 %v491, %v749
        %v767 = vsub.f32 %v494, %v749
        %v768 = vsub.f32 %v499, %v749
        %v769 = vsub.f32 %v502, %v749
        %v770 = vsub.f32 %v507, %v749
        %v771 = vsub.f32 %v510, %v749
        %v772 = vsub.f32 %v515, %v749
        %v773 = vsub.f32 %v518, %v749
        %v774 = vsub.f32 %v523, %v749
        %v775 = vsub.f32 %v526, %v749
        %v776 = vsub.f32 %v531, %v749
        %v777 = vsub.f32 %v534, %v749
        %v778 = vsub.f32 %v539, %v749
        %v779 = vsub.f32 %v542, %v749
        %v780 = vsub.f32 %v547, %v749
        %v781 = vsub.f32 %v550, %v749
        %v782 = vsub.f32 %v555, %v749
        %v783 = vsub.f32 %v558, %v749
        %v784 = vsub.f32 %v563, %v749
        %v785 = vsub.f32 %v566, %v749
        %v786 = vsub.f32 %v571, %v749
        %v787 = vsub.f32 %v574, %v749
        %v788 = vsub.f32 %v579, %v749
        %v789 = vsub.f32 %v582, %v749
        %v790 = vsub.f32 %v587, %v749
        %v791 = vsub.f32 %v590, %v749
        %v792 = vsub.f32 %v595, %v749
        %v793 = vsub.f32 %v598, %v749
        %v794 = vsub.f32 %v603, %v749
        %v795 = vsub.f32 %v606, %v749
        %v796 = vsub.f32 %v611, %v749
        %v797 = vsub.f32 %v614, %v749
        %v798 = vsub.f32 %v619, %v749
        %v799 = vsub.f32 %v622, %v749
        %v800 = vsub.f32 %v627, %v749
        %v801 = vsub.f32 %v630, %v749
        %v802 = vsub.f32 %v635, %v749
        %v803 = vsub.f32 %v638, %v749
        %v804 = vsub.f32 %v643, %v749
        %v805 = vsub.f32 %v646, %v749
        %v806 = vsub.f32 %v651, %v749
        %v807 = vsub.f32 %v654, %v749
        %v808 = vsub.f32 %v659, %v749
        %v809 = vsub.f32 %v662, %v749
        %v810 = vsub.f32 %v667, %v749
        %v811 = vsub.f32 %v670, %v749
        %v812 = vsub.f32 %v675, %v749
        %v813 = vsub.f32 %v678, %v749
        %v814 = vmul.f32 %v750, 1.442695
        %v815 = vpow.pop %v814
        %v816 = vmul.f32 %v751, 1.442695
        %v817 = vpow.pop %v816
        %v818 = vmul.f32 %v752, 1.442695
        %v819 = vpow.pop %v818
        %v820 = vmul.f32 %v753, 1.442695
        %v821 = vpow.pop %v820
        %v822 = vmul.f32 %v754, 1.442695
        %v823 = vpow.pop %v822
        %v824 = vmul.f32 %v755, 1.442695
        %v825 = vpow.pop %v824
        %v826 = vmul.f32 %v756, 1.442695
        %v827 = vpow.pop %v826
        %v828 = vmul.f32 %v757, 1.442695
        %v829 = vpow.pop %v828
        %v830 = vmul.f32 %v758, 1.442695
        %v831 = vpow.pop %v830
        %v832 = vmul.f32 %v759, 1.442695
        %v833 = vpow.pop %v832
        %v834 = vmul.f32 %v760, 1.442695
        %v835 = vpow.pop %v834
        %v836 = vmul.f32 %v761, 1.442695
        %v837 = vpow.pop %v836
        %v838 = vmul.f32 %v762, 1.442695
        %v839 = vpow.pop %v838
        %v840 = vmul.f32 %v763, 1.442695
        %v841 = vpow.pop %v840
        %v842 = vmul.f32 %v764, 1.442695
        %v843 = vpow.pop %v842
        %v844 = vmul.f32 %v765, 1.442695
        %v845 = vpow.pop %v844
        %v846 = vmul.f32 %v766, 1.442695
        %v847 = vpow.pop %v846
        %v848 = vmul.f32 %v767, 1.442695
        %v849 = vpow.pop %v848
        %v850 = vmul.f32 %v768, 1.442695
        %v851 = vpow.pop %v850
        %v852 = vmul.f32 %v769, 1.442695
        %v853 = vpow.pop %v852
        %v854 = vmul.f32 %v770, 1.442695
        %v855 = vpow.pop %v854
        %v856 = vmul.f32 %v771, 1.442695
        %v857 = vpow.pop %v856
        %v858 = vmul.f32 %v772, 1.442695
        %v859 = vpow.pop %v858
        %v860 = vmul.f32 %v773, 1.442695
        %v861 = vpow.pop %v860
        %v862 = vmul.f32 %v774, 1.442695
        %v863 = vpow.pop %v862
        %v864 = vmul.f32 %v775, 1.442695
        %v865 = vpow.pop %v864
        %v866 = vmul.f32 %v776, 1.442695
        %v867 = vpow.pop %v866
        %v868 = vmul.f32 %v777, 1.442695
        %v869 = vpow.pop %v868
        %v870 = vmul.f32 %v778, 1.442695
        %v871 = vpow.pop %v870
        %v872 = vmul.f32 %v779, 1.442695
        %v873 = vpow.pop %v872
        %v874 = vmul.f32 %v780, 1.442695
        %v875 = vpow.pop %v874
        %v876 = vmul.f32 %v781, 1.442695
        %v877 = vpow.pop %v876
        %v878 = vmul.f32 %v782, 1.442695
        %v879 = vpow.pop %v878
        %v880 = vmul.f32 %v783, 1.442695
        %v881 = vpow.pop %v880
        %v882 = vmul.f32 %v784, 1.442695
        %v883 = vpow.pop %v882
        %v884 = vmul.f32 %v785, 1.442695
        %v885 = vpow.pop %v884
        %v886 = vmul.f32 %v786, 1.442695
        %v887 = vpow.pop %v886
        %v888 = vmul.f32 %v787, 1.442695
        %v889 = vpow.pop %v888
        %v890 = vmul.f32 %v788, 1.442695
        %v891 = vpow.pop %v890
        %v892 = vmul.f32 %v789, 1.442695
        %v893 = vpow.pop %v892
        %v894 = vmul.f32 %v790, 1.442695
        %v895 = vpow.pop %v894
        %v896 = vmul.f32 %v791, 1.442695
        %v897 = vpow.pop %v896
        %v898 = vmul.f32 %v792, 1.442695
        %v899 = vpow.pop %v898
        %v900 = vmul.f32 %v793, 1.442695
        %v901 = vpow.pop %v900
        %v902 = vmul.f32 %v794, 1.442695
        %v903 = vpow.pop %v902
        %v904 = vmul.f32 %v795, 1.442695
        %v905 = vpow.pop %v904
        %v906 = vmul.f32 %v796, 1.442695
        %v907 = vpow.pop %v906
        %v908 = vmul.f32 %v797, 1.442695
        %v909 = vpow.pop %v908
        %v910 = vmul.f32 %v798, 1.442695
        %v911 = vpow.pop %v910
        %v912 = vmul.f32 %v799, 1.442695
        %v913 = vpow.pop %v912
        %v914 = vmul.f32 %v800, 1.442695
        %v915 = vpow.pop %v914
        %v916 = vmul.f32 %v801, 1.442695
        %v917 = vpow.pop %v916
        %v918 = vmul.f32 %v802, 1.442695
        %v919 = vpow.pop %v918
        %v920 = vmul.f32 %v803, 1.442695
        %v921 = vpow.pop %v920
        %v922 = vmul.f32 %v804, 1.442695
        %v923 = vpow.pop %v922
        %v924 = vmul.f32 %v805, 1.442695
        %v925 = vpow.pop %v924
        %v926 = vmul.f32 %v806, 1.442695
        %v927 = vpow.pop %v926
        %v928 = vmul.f32 %v807, 1.442695
        %v929 = vpow.pop %v928
        %v930 = vmul.f32 %v808, 1.442695
        %v931 = vpow.pop %v930
        %v932 = vmul.f32 %v809, 1.442695
        %v933 = vpow.pop %v932
        %v934 = vmul.f32 %v810, 1.442695
        %v935 = vpow.pop %v934
        %v936 = vmul.f32 %v811, 1.442695
        %v937 = vpow.pop %v936
        %v938 = vmul.f32 %v812, 1.442695
        %v939 = vpow.pop %v938
        %v940 = vmul.f32 %v813, 1.442695
        %v941 = vpow.pop %v940
        %v942 = vadd.f32 %v815, %v817
        %v943 = vadd.f32 %v942, %v819
        %v944 = vadd.f32 %v943, %v821
        %v945 = vadd.f32 %v944, %v823
        %v946 = vadd.f32 %v945, %v825
        %v947 = vadd.f32 %v946, %v827
        %v948 = vadd.f32 %v947, %v829
        %v949 = vadd.f32 %v948, %v831
        %v950 = vadd.f32 %v949, %v833
        %v951 = vadd.f32 %v950, %v835
        %v952 = vadd.f32 %v951, %v837
        %v953 = vadd.f32 %v952, %v839
        %v954 = vadd.f32 %v953, %v841
        %v955 = vadd.f32 %v954, %v843
        %v956 = vadd.f32 %v955, %v845
        %v957 = vadd.f32 %v956, %v847
        %v958 = vadd.f32 %v957, %v849
        %v959 = vadd.f32 %v958, %v851
        %v960 = vadd.f32 %v959, %v853
        %v961 = vadd.f32 %v960, %v855
        %v962 = vadd.f32 %v961, %v857
        %v963 = vadd.f32 %v962, %v859
        %v964 = vadd.f32 %v963, %v861
        %v965 = vadd.f32 %v964, %v863
        %v966 = vadd.f32 %v965, %v865
        %v967 = vadd.f32 %v966, %v867
        %v968 = vadd.f32 %v967, %v869
        %v969 = vadd.f32 %v968, %v871
        %v970 = vadd.f32 %v969, %v873
        %v971 = vadd.f32 %v970, %v875
        %v972 = vadd.f32 %v971, %v877
        %v973 = vadd.f32 %v972, %v879
        %v974 = vadd.f32 %v973, %v881
        %v975 = vadd.f32 %v974, %v883
        %v976 = vadd.f32 %v975, %v885
        %v977 = vadd.f32 %v976, %v887
        %v978 = vadd.f32 %v977, %v889
        %v979 = vadd.f32 %v978, %v891
        %v980 = vadd.f32 %v979, %v893
        %v981 = vadd.f32 %v980, %v895
        %v982 = vadd.f32 %v981, %v897
        %v983 = vadd.f32 %v982, %v899
        %v984 = vadd.f32 %v983, %v901
        %v985 = vadd.f32 %v984, %v903
        %v986 = vadd.f32 %v985, %v905
        %v987 = vadd.f32 %v986, %v907
        %v988 = vadd.f32 %v987, %v909
        %v989 = vadd.f32 %v988, %v911
        %v990 = vadd.f32 %v989, %v913
        %v991 = vadd.f32 %v990, %v915
        %v992 = vadd.f32 %v991, %v917
        %v993 = vadd.f32 %v992, %v919
        %v994 = vadd.f32 %v993, %v921
        %v995 = vadd.f32 %v994, %v923
        %v996 = vadd.f32 %v995, %v925
        %v997 = vadd.f32 %v996, %v927
        %v998 = vadd.f32 %v997, %v929
        %v999 = vadd.f32 %v998, %v931
        %v1000 = vadd.f32 %v999, %v933
        %v1001 = vadd.f32 %v1000, %v935
        %v1002 = vadd.f32 %v1001, %v937
        %v1003 = vadd.f32 %v1002, %v939
        %v1004 = vadd.f32 %v1003, %v941
        %v1005 = vrot.slane %v1004, 4
        %v1006 = vadd.f32 %v1004, %v1005
        %v1007 = vrot.slane %v1006, 2
        %v1008 = vadd.f32 %v1006, %v1007
        %v1009 = vrot.slane %v1008, 1
        %v1010 = vadd.f32 %v1008, %v1009
        %1011 = vst [vmem:[%s220] sm:$0x1] %v749
        %1012 = vst [vmem:[%s223] sm:$0x1] %v1010
        %p1013 = scmp.lt.s32.totalorder %s19, 3
        %s1014 = scalar_select %p1013, %s19, 3
        %s1015 = scalar_lea.vmem %s3, %s1014
        %p1016 = scmp.lt.s32.totalorder %s19, 3
        %s1017 = scalar_select %p1016, %s19, 3
        %s1018 = scalar_lea.vmem %s4, %s1017
        // Predicated region
        $region37: #{attention_dis.2} parent=31 // pred_check
          %p1019 = pneg %p105
        $region38: #{attention_dis.2} parent=31 // pred_check_branch
          %1021 = sbr.rel (%p1019) target = $region40
        $region39: #{attention_dis.2} parent=31 // pred_region
          _
        $region40: #{attention_dis.2} parent=31 // pred_fallthru
          _
        // Predicated region
        $region41: #{attention_dis.2} parent=31 // pred_check
          %p1022 = pneg %p131
        $region42: #{attention_dis.2} parent=31 // pred_check_branch
          %1024 = sbr.rel (%p1022) target = $region44
        $region43: #{attention_dis.2} parent=31 // pred_region
          _
        $region44: #{attention_dis.2} parent=31 // pred_fallthru
          _
      $region32: #{attention_dis.2} parent=5 // pred_fallthru
        _
      %p1025 = scmp.le.s32.totalorder 2, %s14
      // Predicated region
      $region45: #{attention_dis.2} parent=5 // pred_check
        %p1026 = pneg %p1025
      $region46: #{attention_dis.2} parent=5 // pred_check_branch
        %1028 = sbr.rel (%p1026) target = $region48
      $region47: #{attention_dis.2} parent=5 // pred_region
        %s1029 = ssub.s32 %s14, 2
        // Predicated region
        $region49: #{attention_dis.2} parent=47 // pred_check
          %p1030 = pneg %p111
        $region50: #{attention_dis.2} parent=47 // pred_check_branch
          %1032 = sbr.rel (%p1030) target = $region52
        $region51: #{attention_dis.2} parent=47 // pred_region
          %p1033 = scmp.lt.s32.totalorder %s20, 3
          %s1034 = scalar_select %p1033, %s20, 3
          %s1035 = scalar_lea.vmem %s3, %s1034
        $region52: #{attention_dis.2} parent=47 // pred_fallthru
          _
        // Predicated region
        $region53: #{attention_dis.2} parent=47 // pred_check
          %p1036 = pneg %p137
        $region54: #{attention_dis.2} parent=47 // pred_check_branch
          %1038 = sbr.rel (%p1036) target = $region56
        $region55: #{attention_dis.2} parent=47 // pred_region
          %p1039 = scmp.lt.s32.totalorder %s20, 3
          %s1040 = scalar_select %p1039, %s20, 3
          %s1041 = scalar_lea.vmem %s4, %s1040
        $region56: #{attention_dis.2} parent=47 // pred_fallthru
          _
      $region48: #{attention_dis.2} parent=5 // pred_fallthru
        _
    $region6: #{attention_dis.2} parent=1 // loop_footer
      %s18 = sadd.s32 1, %s14
    $region7: #{attention_dis.2} parent=1 // loop_footer_branch
      %13 = sbr.rel target = $region3
    $region8: #{attention_dis.2} parent=1 // loop_exit
      _
    %1042 = vsyncpa [#allocation3], 1
    %s1043 = scalar_lea.sflag [#allocation3], 1
    %1044 = vsyncpa %s1043, 1

// kernel: attention_dis.3
$region0: #{attention_dis.3}
  #allocation0 [shape = 'u32[]', space=smem, size = 0x4, offset = 0x4, fixed_abs, tag = 'smem constant byte address 0x4 - core index']
  #allocation1 [shape = 'u32[144,128]{1,0:T(1,128)}', space=vmem, size = 0x12000, scoped, tag = 'internal scratch']
  %s0 = inlined_call_operand.vmem [shape: f32[2048,128], index: 0, kind: input, shape index: {}]
  %s1 = inlined_call_operand.vmem [shape: bf16[128,128], index: 1, kind: input, shape index: {}]
  %s2 = inlined_call_operand.vmem [shape: f32[1,128], index: 2, kind: input, shape index: {}]
  %s3 = inlined_call_operand.vmem [shape: f32[4,1,128], index: 3, kind: input, shape index: {}]
  %s4 = inlined_call_operand.vmem [shape: f32[4,1,128], index: 4, kind: input, shape index: {}]
  %s5 = inlined_call_operand.vmem [shape: f32[1,128], index: 5, kind: input, shape index: {}]
  %s6 = inlined_call_operand.vmem [shape: f32[1,128], index: 6, kind: input, shape index: {}]
  %s7 = inlined_call_operand.hbm [shape: f32[2048,128], index: 7, kind: output, shape index: {}]
  %s8 = sld [smem:[#allocation0]]
  $region61: #{attention_dis.3} parent=0
    _
  %s10 = ssub.s32 1, %s8
  %s11 = scalar_select 0, %s10, %s8
  $region1: #{attention_dis.3} parent=0
    #allocation2 [shape = 'u8[524288]{0}', space=vmem, size = 0x80000, scoped, tag = 'output window, operand 0']
    #allocation3 [shape = 's32[2]{0}', space=sflag, size = 0x8, scoped, tag = 'scoped memory for attention_dis.3']
    %12 = vsyncpa [#allocation3], 0
    %s13 = scalar_lea.sflag [#allocation3], 1
    %14 = vsyncpa %s13, 0
    loop: start=0, step=1, limit=6
    $region2: #{attention_dis.3} parent=1 // loop_pre_header
      _
    $region3: #{attention_dis.3} parent=1 // loop_header
      %s16 = sphi 0, %s20
      %p17 = scmp.ge.s32.totalorder %s16, 6
      %s26 = sphi 0, %s28
      %s29 = sphi 0, %s26
      %s30 = sphi 0, %s29
      %s46 = sphi 0, %s30
      %s50 = sphi 0, %s50
      %s52 = sphi 0, %s50
      %s53 = sphi 0, %s52
      %s67 = sphi 0, %s53
      %s71 = sphi 0, %s71
      %s73 = sphi 0, %s71
      %s74 = sphi 0, %s73
      %s88 = sphi 0, %s74
      %s92 = sphi 0, %s92
      %s94 = sphi 0, %s92
      %s95 = sphi 0, %s94
      %s109 = sphi 0, %s95
      %s113 = sphi 0, %s113
      %s115 = sphi 0, %s113
      %s116 = sphi 0, %s115
      %s130 = sphi 0, %s116
      %s134 = sphi 0, %s134
      %s136 = sphi 0, %s134
      %s137 = sphi 0, %s136
      %s151 = sphi 0, %s137
      %s155 = sphi 0, %s155
      %s157 = sphi 0, %s155
      %s158 = sphi 0, %s157
      %s172 = sphi 0, %s158
      %s178 = sphi 0, %s180
      %s181 = sphi 0, %s178
      %s182 = sphi 0, %s181
      %s198 = sphi 0, %s182
    $region4: #{attention_dis.3} parent=1 // loop_header_branch
      %19 = sbr.rel (%p17) target = $region8
    $region5: #{attention_dis.3} parent=1 // loop_body
      %s21 = ssub.s32 %s16, 1
      %s22 = ssub.s32 %s16, 2
      %s23 = sadd.s32 %s16, 1
      %s24 = ssub.s32 %s16, %s23
      %p25 = scmp.eq.s32.totalorder %s24, 0
      %s27 = sadd.s32 %s26, 1
      %s28 = scalar_select %p25, %s26, %s27
      %p31 = pneg %p25
      %p32 = scmp.eq.s32.totalorder %s16, 3
      %p33 = por %p31, %p32
      %p34 = scmp.ne.s32.totalorder %s26, %s29
      %p35 = scmp.eq.s32.totalorder %s16, 0
      %p36 = por %p34, %p35
      %p37 = scmp.ne.s32.totalorder %s26, %s29
      %p38 = scmp.eq.s32.totalorder %s21, 3
      %p39 = por %p37, %p38
      %p40 = scmp.ne.s32.totalorder %s29, %s30
      %p41 = scmp.eq.s32.totalorder %s21, 0
      %p42 = por %p40, %p41
      %p43 = scmp.ne.s32.totalorder %s29, %s30
      %p44 = scmp.eq.s32.totalorder %s22, 3
      %p45 = por %p43, %p44
      %p47 = scmp.ne.s32.totalorder %s30, %s46
      %p48 = scmp.eq.s32.totalorder %s22, 0
      %p49 = por %p47, %p48
      %s51 = sadd.s32 %s50, 1
      %p54 = scmp.eq.s32.totalorder %s16, 3
      %p55 = scmp.ne.s32.totalorder %s50, %s52
      %p56 = scmp.eq.s32.totalorder %s16, 0
      %p57 = por %p55, %p56
      %p58 = scmp.ne.s32.totalorder %s50, %s52
      %p59 = scmp.eq.s32.totalorder %s21, 3
      %p60 = por %p58, %p59
      %p61 = scmp.ne.s32.totalorder %s52, %s53
      %p62 = scmp.eq.s32.totalorder %s21, 0
      %p63 = por %p61, %p62
      %p64 = scmp.ne.s32.totalorder %s52, %s53
      %p65 = scmp.eq.s32.totalorder %s22, 3
      %p66 = por %p64, %p65
      %p68 = scmp.ne.s32.totalorder %s53, %s67
      %p69 = scmp.eq.s32.totalorder %s22, 0
      %p70 = por %p68, %p69
      %s72 = sadd.s32 %s71, 1
      %p75 = scmp.eq.s32.totalorder %s16, 3
      %p76 = scmp.ne.s32.totalorder %s71, %s73
      %p77 = scmp.eq.s32.totalorder %s16, 0
      %p78 = por %p76, %p77
      %p79 = scmp.ne.s32.totalorder %s71, %s73
      %p80 = scmp.eq.s32.totalorder %s21, 3
      %p81 = por %p79, %p80
      %p82 = scmp.ne.s32.totalorder %s73, %s74
      %p83 = scmp.eq.s32.totalorder %s21, 0
      %p84 = por %p82, %p83
      %p85 = scmp.ne.s32.totalorder %s73, %s74
      %p86 = scmp.eq.s32.totalorder %s22, 3
      %p87 = por %p85, %p86
      %p89 = scmp.ne.s32.totalorder %s74, %s88
      %p90 = scmp.eq.s32.totalorder %s22, 0
      %p91 = por %p89, %p90
      %s93 = sadd.s32 %s92, 1
      %p96 = scmp.eq.s32.totalorder %s16, 3
      %p97 = scmp.ne.s32.totalorder %s92, %s94
      %p98 = scmp.eq.s32.totalorder %s16, 0
      %p99 = por %p97, %p98
      %p100 = scmp.ne.s32.totalorder %s92, %s94
      %p101 = scmp.eq.s32.totalorder %s21, 3
      %p102 = por %p100, %p101
      %p103 = scmp.ne.s32.totalorder %s94, %s95
      %p104 = scmp.eq.s32.totalorder %s21, 0
      %p105 = por %p103, %p104
      %p106 = scmp.ne.s32.totalorder %s94, %s95
      %p107 = scmp.eq.s32.totalorder %s22, 3
      %p108 = por %p106, %p107
      %p110 = scmp.ne.s32.totalorder %s95, %s109
      %p111 = scmp.eq.s32.totalorder %s22, 0
      %p112 = por %p110, %p111
      %s114 = sadd.s32 %s113, 1
      %p117 = scmp.eq.s32.totalorder %s16, 3
      %p118 = scmp.ne.s32.totalorder %s113, %s115
      %p119 = scmp.eq.s32.totalorder %s16, 0
      %p120 = por %p118, %p119
      %p121 = scmp.ne.s32.totalorder %s113, %s115
      %p122 = scmp.eq.s32.totalorder %s21, 3
      %p123 = por %p121, %p122
      %p124 = scmp.ne.s32.totalorder %s115, %s116
      %p125 = scmp.eq.s32.totalorder %s21, 0
      %p126 = por %p124, %p125
      %p127 = scmp.ne.s32.totalorder %s115, %s116
      %p128 = scmp.eq.s32.totalorder %s22, 3
      %p129 = por %p127, %p128
      %p131 = scmp.ne.s32.totalorder %s116, %s130
      %p132 = scmp.eq.s32.totalorder %s22, 0
      %p133 = por %p131, %p132
      %s135 = sadd.s32 %s134, 1
      %p138 = scmp.eq.s32.totalorder %s16, 3
      %p139 = scmp.ne.s32.totalorder %s134, %s136
      %p140 = scmp.eq.s32.totalorder %s16, 0
      %p141 = por %p139, %p140
      %p142 = scmp.ne.s32.totalorder %s134, %s136
      %p143 = scmp.eq.s32.totalorder %s21, 3
      %p144 = por %p142, %p143
      %p145 = scmp.ne.s32.totalorder %s136, %s137
      %p146 = scmp.eq.s32.totalorder %s21, 0
      %p147 = por %p145, %p146
      %p148 = scmp.ne.s32.totalorder %s136, %s137
      %p149 = scmp.eq.s32.totalorder %s22, 3
      %p150 = por %p148, %p149
      %p152 = scmp.ne.s32.totalorder %s137, %s151
      %p153 = scmp.eq.s32.totalorder %s22, 0
      %p154 = por %p152, %p153
      %s156 = sadd.s32 %s155, 1
      %p159 = scmp.eq.s32.totalorder %s16, 3
      %p160 = scmp.ne.s32.totalorder %s155, %s157
      %p161 = scmp.eq.s32.totalorder %s16, 0
      %p162 = por %p160, %p161
      %p163 = scmp.ne.s32.totalorder %s155, %s157
      %p164 = scmp.eq.s32.totalorder %s21, 3
      %p165 = por %p163, %p164
      %p166 = scmp.ne.s32.totalorder %s157, %s158
      %p167 = scmp.eq.s32.totalorder %s21, 0
      %p168 = por %p166, %p167
      %p169 = scmp.ne.s32.totalorder %s157, %s158
      %p170 = scmp.eq.s32.totalorder %s22, 3
      %p171 = por %p169, %p170
      %p173 = scmp.ne.s32.totalorder %s158, %s172
      %p174 = scmp.eq.s32.totalorder %s22, 0
      %p175 = por %p173, %p174
      %s176 = ssub.s32 %s16, %s23
      %p177 = scmp.eq.s32.totalorder %s176, 0
      %s179 = sadd.s32 %s178, 1
      %s180 = scalar_select %p177, %s178, %s179
      %p183 = pneg %p177
      %p184 = scmp.eq.s32.totalorder %s16, 3
      %p185 = por %p183, %p184
      %p186 = scmp.ne.s32.totalorder %s178, %s181
      %p187 = scmp.eq.s32.totalorder %s16, 0
      %p188 = por %p186, %p187
      %p189 = scmp.ne.s32.totalorder %s178, %s181
      %p190 = scmp.eq.s32.totalorder %s21, 3
      %p191 = por %p189, %p190
      %p192 = scmp.ne.s32.totalorder %s181, %s182
      %p193 = scmp.eq.s32.totalorder %s21, 0
      %p194 = por %p192, %p193
      %p195 = scmp.ne.s32.totalorder %s181, %s182
      %p196 = scmp.eq.s32.totalorder %s22, 3
      %p197 = por %p195, %p196
      %p199 = scmp.ne.s32.totalorder %s182, %s198
      %p200 = scmp.eq.s32.totalorder %s22, 0
      %p201 = por %p199, %p200
      %p202 = scmp.le.s32.totalorder 1, %s16
      %p203 = scmp.lt.s32.totalorder %s16, 5
      %p204 = pnand %p202, %p203
      %p205 = pneg %p204
      // Predicated region
      $region9: #{attention_dis.3} parent=5 // pred_check
        _
      $region10: #{attention_dis.3} parent=5 // pred_check_branch
        %207 = sbr.rel (%p204) target = $region12
      $region11: #{attention_dis.3} parent=5 // pred_region
        %s208 = ssub.s32 %s16, 1
        // Predicated region
        $region13: #{attention_dis.3} parent=11 // pred_check
          %p209 = pneg %p63
        $region14: #{attention_dis.3} parent=11 // pred_check_branch
          %211 = sbr.rel (%p209) target = $region16
        $region15: #{attention_dis.3} parent=11 // pred_region
          _
        $region16: #{attention_dis.3} parent=11 // pred_fallthru
          _
        // Predicated region
        $region17: #{attention_dis.3} parent=11 // pred_check
          %p212 = pneg %p84
        $region18: #{attention_dis.3} parent=11 // pred_check_branch
          %214 = sbr.rel (%p212) target = $region20
        $region19: #{attention_dis.3} parent=11 // pred_region
          _
        $region20: #{attention_dis.3} parent=11 // pred_fallthru
          _
        // Predicated region
        $region21: #{attention_dis.3} parent=11 // pred_check
          %p215 = pneg %p105
        $region22: #{attention_dis.3} parent=11 // pred_check_branch
          %217 = sbr.rel (%p215) target = $region24
        $region23: #{attention_dis.3} parent=11 // pred_region
          _
        $region24: #{attention_dis.3} parent=11 // pred_fallthru
          _
        // Predicated region
        $region25: #{attention_dis.3} parent=11 // pred_check
          %p218 = pneg %p126
        $region26: #{attention_dis.3} parent=11 // pred_check_branch
          %220 = sbr.rel (%p218) target = $region28
        $region27: #{attention_dis.3} parent=11 // pred_region
          _
        $region28: #{attention_dis.3} parent=11 // pred_fallthru
          _
        // Predicated region
        $region29: #{attention_dis.3} parent=11 // pred_check
          %p221 = pneg %p147
        $region30: #{attention_dis.3} parent=11 // pred_check_branch
          %223 = sbr.rel (%p221) target = $region32
        $region31: #{attention_dis.3} parent=11 // pred_region
          _
        $region32: #{attention_dis.3} parent=11 // pred_fallthru
          _
        // Predicated region
        $region33: #{attention_dis.3} parent=11 // pred_check
          %p224 = pneg %p168
        $region34: #{attention_dis.3} parent=11 // pred_check_branch
          %226 = sbr.rel (%p224) target = $region36
        $region35: #{attention_dis.3} parent=11 // pred_region
          _
        $region36: #{attention_dis.3} parent=11 // pred_fallthru
          _
      $region12: #{attention_dis.3} parent=5 // pred_fallthru
        _
      %p227 = scmp.lt.s32.totalorder %s16, 4
      // Predicated region
      $region37: #{attention_dis.3} parent=5 // pred_check
        %p228 = pneg %p227
      $region38: #{attention_dis.3} parent=5 // pred_check_branch
        %230 = sbr.rel (%p228) target = $region40
      $region39: #{attention_dis.3} parent=5 // pred_region
        // Predicated region
        $region41: #{attention_dis.3} parent=39 // pred_check
          %p231 = pneg %p36
        $region42: #{attention_dis.3} parent=39 // pred_check_branch
          %233 = sbr.rel (%p231) target = $region44
        $region43: #{attention_dis.3} parent=39 // pred_region
          %s234 = smul.u32 64, %s16
          %p235 = scmp.lt.s32.totalorder %s234, 255
          %s236 = scalar_select %p235, %s234, 255
          %s237 = smul.addr %s236, 8
          %s238 = scalar_lea.vmem %s0, %s237
          %s239 = smul.u32 64, %s16
        $region44: #{attention_dis.3} parent=39 // pred_fallthru
          _
      $region40: #{attention_dis.3} parent=5 // pred_fallthru
        _
      %p240 = scmp.le.s32.totalorder 1, %s16
      %p241 = scmp.lt.s32.totalorder %s16, 5
      %p242 = pnand %p240, %p241
      %p243 = pneg %p242
      // Predicated region
      $region45: #{attention_dis.3} parent=5 // pred_check
        _
      $region46: #{attention_dis.3} parent=5 // pred_check_branch
        %245 = sbr.rel (%p242) target = $region48
      $region47: #{attention_dis.3} parent=5 // pred_region
        %s246 = ssub.s32 %s16, 1
        %s247 = smul.u32 64, %s21
        %p248 = scmp.lt.s32.totalorder %s247, 255
        %s249 = scalar_select %p248, %s247, 255
        %s250 = smul.addr %s249, 8
        %s251 = scalar_lea.vmem %s0, %s250
        %p252 = pneg %p42
        %p253 = pneg %p39
        %p254 = pneg %p63
        %p255 = pneg %p60
        %p256 = pneg %p84
        %p257 = pneg %p81
        %p258 = pneg %p105
        %p259 = pneg %p102
        %p260 = pneg %p126
        %p261 = pneg %p123
        %p262 = pneg %p147
        %p263 = pneg %p144
        %p264 = pneg %p168
        %p265 = pneg %p165
        %p266 = pneg %p194
        %p267 = pneg %p191
        %s268 = sand.u32 %s181, 1
        %s269 = scalar_lea.sflag [#allocation3], %s268
        %s270 = sand.u32 %s181, 1
        %s271 = smul.addr %s270, 512
        %s272 = scalar_lea.vmem [#allocation2], %s271
        %s273 = smul.u32 64, %s21
        %p274 = scmp.lt.s32.totalorder %s273, 255
        %s275 = scalar_select %p274, %s273, 255
        %s276 = smul.addr %s275, 8
        %s277 = scalar_lea.vmem %s0, %s276
        %s278 = smul.u32 64, %s21
        %s279 = smul.u32 64, %s21
        %v281 = vld [vmem:[%s277] sm:$0xff]
        %v282 = vld [vmem:[%s277 + $0x8] sm:$0xff]
        %v283 = vld [vmem:[%s277 + $0x10] sm:$0xff]
        %v284 = vld [vmem:[%s277 + $0x18] sm:$0xff]
        %v285 = vld [vmem:[%s277 + $0x20] sm:$0xff]
        %v286 = vld [vmem:[%s277 + $0x28] sm:$0xff]
        %v287 = vld [vmem:[%s277 + $0x30] sm:$0xff]
        %v288 = vld [vmem:[%s277 + $0x38] sm:$0xff]
        %v289 = vld [vmem:[%s277 + $0x40] sm:$0xff]
        %v290 = vld [vmem:[%s277 + $0x48] sm:$0xff]
        %v291 = vld [vmem:[%s277 + $0x50] sm:$0xff]
        %v292 = vld [vmem:[%s277 + $0x58] sm:$0xff]
        %v293 = vld [vmem:[%s277 + $0x60] sm:$0xff]
        %v294 = vld [vmem:[%s277 + $0x68] sm:$0xff]
        %v295 = vld [vmem:[%s277 + $0x70] sm:$0xff]
        %v296 = vld [vmem:[%s277 + $0x78] sm:$0xff]
        %v297 = vld [vmem:[%s277 + $0x80] sm:$0xff]
        %v298 = vld [vmem:[%s277 + $0x88] sm:$0xff]
        %v299 = vld [vmem:[%s277 + $0x90] sm:$0xff]
        %v300 = vld [vmem:[%s277 + $0x98] sm:$0xff]
        %v301 = vld [vmem:[%s277 + $0xa0] sm:$0xff]
        %v302 = vld [vmem:[%s277 + $0xa8] sm:$0xff]
        %v303 = vld [vmem:[%s277 + $0xb0] sm:$0xff]
        %v304 = vld [vmem:[%s277 + $0xb8] sm:$0xff]
        %v305 = vld [vmem:[%s277 + $0xc0] sm:$0xff]
        %v306 = vld [vmem:[%s277 + $0xc8] sm:$0xff]
        %v307 = vld [vmem:[%s277 + $0xd0] sm:$0xff]
        %v308 = vld [vmem:[%s277 + $0xd8] sm:$0xff]
        %v309 = vld [vmem:[%s277 + $0xe0] sm:$0xff]
        %v310 = vld [vmem:[%s277 + $0xe8] sm:$0xff]
        %v311 = vld [vmem:[%s277 + $0xf0] sm:$0xff]
        %v312 = vld [vmem:[%s277 + $0xf8] sm:$0xff]
        %v313 = vld [vmem:[%s277 + $0x100] sm:$0xff]
        %v314 = vld [vmem:[%s277 + $0x108] sm:$0xff]
        %v315 = vld [vmem:[%s277 + $0x110] sm:$0xff]
        %v316 = vld [vmem:[%s277 + $0x118] sm:$0xff]
        %v317 = vld [vmem:[%s277 + $0x120] sm:$0xff]
        %v318 = vld [vmem:[%s277 + $0x128] sm:$0xff]
        %v319 = vld [vmem:[%s277 + $0x130] sm:$0xff]
        %v320 = vld [vmem:[%s277 + $0x138] sm:$0xff]
        %v321 = vld [vmem:[%s277 + $0x140] sm:$0xff]
        %v322 = vld [vmem:[%s277 + $0x148] sm:$0xff]
        %v323 = vld [vmem:[%s277 + $0x150] sm:$0xff]
        %v324 = vld [vmem:[%s277 + $0x158] sm:$0xff]
        %v325 = vld [vmem:[%s277 + $0x160] sm:$0xff]
        %v326 = vld [vmem:[%s277 + $0x168] sm:$0xff]
        %v327 = vld [vmem:[%s277 + $0x170] sm:$0xff]
        %v328 = vld [vmem:[%s277 + $0x178] sm:$0xff]
        %v329 = vld [vmem:[%s277 + $0x180] sm:$0xff]
        %v330 = vld [vmem:[%s277 + $0x188] sm:$0xff]
        %v331 = vld [vmem:[%s277 + $0x190] sm:$0xff]
        %v332 = vld [vmem:[%s277 + $0x198] sm:$0xff]
        %v333 = vld [vmem:[%s277 + $0x1a0] sm:$0xff]
        %v334 = vld [vmem:[%s277 + $0x1a8] sm:$0xff]
        %v335 = vld [vmem:[%s277 + $0x1b0] sm:$0xff]
        %v336 = vld [vmem:[%s277 + $0x1b8] sm:$0xff]
        %v337 = vld [vmem:[%s277 + $0x1c0] sm:$0xff]
        %v338 = vld [vmem:[%s277 + $0x1c8] sm:$0xff]
        %v339 = vld [vmem:[%s277 + $0x1d0] sm:$0xff]
        %v340 = vld [vmem:[%s277 + $0x1d8] sm:$0xff]
        %v341 = vld [vmem:[%s277 + $0x1e0] sm:$0xff]
        %v342 = vld [vmem:[%s277 + $0x1e8] sm:$0xff]
        %v343 = vld [vmem:[%s277 + $0x1f0] sm:$0xff]
        %v344 = vld [vmem:[%s277 + $0x1f8] sm:$0xff]
        %v345 = vpack.c.bf16 %v282, %v281
        %v346 = vpack.c.bf16 %v284, %v283
        %v347 = vpack.c.bf16 %v286, %v285
        %v348 = vpack.c.bf16 %v288, %v287
        %v349 = vpack.c.bf16 %v290, %v289
        %v350 = vpack.c.bf16 %v292, %v291
        %v351 = vpack.c.bf16 %v294, %v293
        %v352 = vpack.c.bf16 %v296, %v295
        %v353 = vpack.c.bf16 %v298, %v297
        %v354 = vpack.c.bf16 %v300, %v299
        %v355 = vpack.c.bf16 %v302, %v301
        %v356 = vpack.c.bf16 %v304, %v303
        %v357 = vpack.c.bf16 %v306, %v305
        %v358 = vpack.c.bf16 %v308, %v307
        %v359 = vpack.c.bf16 %v310, %v309
        %v360 = vpack.c.bf16 %v312, %v311
        %v361 = vpack.c.bf16 %v314, %v313
        %v362 = vpack.c.bf16 %v316, %v315
        %v363 = vpack.c.bf16 %v318, %v317
        %v364 = vpack.c.bf16 %v320, %v319
        %v365 = vpack.c.bf16 %v322, %v321
        %v366 = vpack.c.bf16 %v324, %v323
        %v367 = vpack.c.bf16 %v326, %v325
        %v368 = vpack.c.bf16 %v328, %v327
        %v369 = vpack.c.bf16 %v330, %v329
        %v370 = vpack.c.bf16 %v332, %v331
        %v371 = vpack.c.bf16 %v334, %v333
        %v372 = vpack.c.bf16 %v336, %v335
        %v373 = vpack.c.bf16 %v338, %v337
        %v374 = vpack.c.bf16 %v340, %v339
        %v375 = vpack.c.bf16 %v342, %v341
        %v376 = vpack.c.bf16 %v344, %v343
        %v377 = vld [vmem:[%s1] sm:$0xf]
        %v378 = vld [vmem:[%s1 + $0x4] sm:$0xf]
        %v379 = vld [vmem:[%s1 + $0x8] sm:$0xf]
        %v380 = vld [vmem:[%s1 + $0xc] sm:$0xf]
        %v381 = vld [vmem:[%s1 + $0x10] sm:$0xf]
        %v382 = vld [vmem:[%s1 + $0x14] sm:$0xf]
        %v383 = vld [vmem:[%s1 + $0x18] sm:$0xf]
        %v384 = vld [vmem:[%s1 + $0x1c] sm:$0xf]
        %v385 = vld [vmem:[%s1 + $0x20] sm:$0xf]
        %v386 = vld [vmem:[%s1 + $0x24] sm:$0xf]
        %v387 = vld [vmem:[%s1 + $0x28] sm:$0xf]
        %v388 = vld [vmem:[%s1 + $0x2c] sm:$0xf]
        %v389 = vld [vmem:[%s1 + $0x30] sm:$0xf]
        %v390 = vld [vmem:[%s1 + $0x34] sm:$0xf]
        %v391 = vld [vmem:[%s1 + $0x38] sm:$0xf]
        %v392 = vld [vmem:[%s1 + $0x3c] sm:$0xf]
        %v393 = vld [vmem:[%s2] sm:$0x1]
        %v395 = vlaneseq
        %v396 = vshrl.u32 %v395, 7
        %v397 = vsub.s32 0, %v396
        %v398 = vrot.slane %v393, %v397
        %v416 = vunpack.c.l.b16 %v377
        %v417 = vunpack.c.l.b16 %v378
        %v418 = vunpack.c.l.b16 %v379
        %v419 = vunpack.c.l.b16 %v380
        %v420 = vunpack.c.l.b16 %v381
        %v421 = vunpack.c.l.b16 %v382
        %v422 = vunpack.c.l.b16 %v383
        %v423 = vunpack.c.l.b16 %v384
        %v424 = vunpack.c.l.b16 %v385
        %v425 = vunpack.c.l.b16 %v386
        %v426 = vunpack.c.l.b16 %v387
        %v427 = vunpack.c.l.b16 %v388
        %v428 = vunpack.c.l.b16 %v389
        %v429 = vunpack.c.l.b16 %v390
        %v430 = vunpack.c.l.b16 %v391
        %v431 = vunpack.c.l.b16 %v392
        %v432 = vpack.c.b16 %v417, %v416
        %v433 = vpack.c.b16 %v419, %v418
        %v434 = vpack.c.b16 %v421, %v420
        %v435 = vpack.c.b16 %v423, %v422
        %v436 = vpack.c.b16 %v425, %v424
        %v437 = vpack.c.b16 %v427, %v426
        %v438 = vpack.c.b16 %v429, %v428
        %v439 = vpack.c.b16 %v431, %v430
        %448 = vmatprep.subr.bf16.mxu0 0
        %449 = vmatpush1.bf16.msra.mxu0 %v432
        %450 = vmatprep.subr.bf16.mxu0 0
        %451 = vmatpush1.bf16.msra.mxu0 %v433
        %452 = vmatprep.subr.bf16.mxu0 0
        %453 = vmatpush1.bf16.msra.mxu0 %v434
        %454 = vmatprep.subr.bf16.mxu0 0
        %455 = vmatpush1.bf16.msra.mxu0 %v435
        %456 = vmatprep.subr.bf16.mxu0 0
        %457 = vmatpush1.bf16.msra.mxu0 %v436
        %458 = vmatprep.subr.bf16.mxu0 0
        %459 = vmatpush1.bf16.msra.mxu0 %v437
        %460 = vmatprep.subr.bf16.mxu0 0
        %461 = vmatpush1.bf16.msra.mxu0 %v438
        %462 = vmatprep.subr.bf16.mxu0 0
        %463 = vmatpush1.bf16.msra.mxu0 %v439
        %464 = vmatprep.subr.bf16.mxu0 0
        %465 = vmatpush1.bf16.msra.mxu0 0
        %466 = vmatprep.subr.bf16.mxu0 0
        %467 = vmatpush1.bf16.msra.mxu0 0
        %468 = vmatprep.subr.bf16.mxu0 0
        %469 = vmatpush1.bf16.msra.mxu0 0
        %470 = vmatprep.subr.bf16.mxu0 0
        %471 = vmatpush1.bf16.msra.mxu0 0
        %472 = vmatprep.subr.bf16.mxu0 0
        %473 = vmatpush1.bf16.msra.mxu0 0
        %474 = vmatprep.subr.bf16.mxu0 0
        %475 = vmatpush1.bf16.msra.mxu0 0
        %476 = vmatprep.subr.bf16.mxu0 0
        %477 = vmatpush1.bf16.msra.mxu0 0
        %478 = vmatprep.subr.bf16.mxu0 0
        %479 = vmatpush1.bf16.msra.mxu0 0
        %480 = vmatprep.mubr.bf16.mxu0 0
        %481 = vmatmul.mubr.bf16.gmra.mrb[0].mxu0 %v345
        %v482 = vpop.f32.mrb[0].mxu0
        %v483 = vadd.f32 %v398, %v482
        %v484 = vpop.f32.mrb[0].mxu0
        %v485 = vpop.f32.mrb[0].mxu0
        %v486 = vadd.f32 %v398, %v485
        %v487 = vpop.f32.mrb[0].mxu0
        %488 = vmatprep.mubr.bf16.mxu0 0
        %489 = vmatmul.mubr.bf16.gmra.mrb[0].mxu0 %v346
        %v490 = vpop.f32.mrb[0].mxu0
        %v491 = vadd.f32 %v398, %v490
        %v492 = vpop.f32.mrb[0].mxu0
        %v493 = vpop.f32.mrb[0].mxu0
        %v494 = vadd.f32 %v398, %v493
        %v495 = vpop.f32.mrb[0].mxu0
        %496 = vmatprep.mubr.bf16.mxu0 0
        %497 = vmatmul.mubr.bf16.gmra.mrb[0].mxu0 %v347
        %v498 = vpop.f32.mrb[0].mxu0
        %v499 = vadd.f32 %v398, %v498
        %v500 = vpop.f32.mrb[0].mxu0
        %v501 = vpop.f32.mrb[0].mxu0
        %v502 = vadd.f32 %v398, %v501
        %v503 = vpop.f32.mrb[0].mxu0
        %504 = vmatprep.mubr.bf16.mxu0 0
        %505 = vmatmul.mubr.bf16.gmra.mrb[0].mxu0 %v348
        %v506 = vpop.f32.mrb[0].mxu0
        %v507 = vadd.f32 %v398, %v506
        %v508 = vpop.f32.mrb[0].mxu0
        %v509 = vpop.f32.mrb[0].mxu0
        %v510 = vadd.f32 %v398, %v509
        %v511 = vpop.f32.mrb[0].mxu0
        %512 = vmatprep.mubr.bf16.mxu0 0
        %513 = vmatmul.mubr.bf16.gmra.mrb[0].mxu0 %v349
        %v514 = vpop.f32.mrb[0].mxu0
        %v515 = vadd.f32 %v398, %v514
        %v516 = vpop.f32.mrb[0].mxu0
        %v517 = vpop.f32.mrb[0].mxu0
        %v518 = vadd.f32 %v398, %v517
        %v519 = vpop.f32.mrb[0].mxu0
        %520 = vmatprep.mubr.bf16.mxu0 0
        %521 = vmatmul.mubr.bf16.gmra.mrb[0].mxu0 %v350
        %v522 = vpop.f32.mrb[0].mxu0
        %v523 = vadd.f32 %v398, %v522
        %v524 = vpop.f32.mrb[0].mxu0
        %v525 = vpop.f32.mrb[0].mxu0
        %v526 = vadd.f32 %v398, %v525
        %v527 = vpop.f32.mrb[0].mxu0
        %528 = vmatprep.mubr.bf16.mxu0 0
        %529 = vmatmul.mubr.bf16.gmra.mrb[0].mxu0 %v351
        %v530 = vpop.f32.mrb[0].mxu0
        %v531 = vadd.f32 %v398, %v530
        %v532 = vpop.f32.mrb[0].mxu0
        %v533 = vpop.f32.mrb[0].mxu0
        %v534 = vadd.f32 %v398, %v533
        %v535 = vpop.f32.mrb[0].mxu0
        %536 = vmatprep.mubr.bf16.mxu0 0
        %537 = vmatmul.mubr.bf16.gmra.mrb[0].mxu0 %v352
        %v538 = vpop.f32.mrb[0].mxu0
        %v539 = vadd.f32 %v398, %v538
        %v540 = vpop.f32.mrb[0].mxu0
        %v541 = vpop.f32.mrb[0].mxu0
        %v542 = vadd.f32 %v398, %v541
        %v543 = vpop.f32.mrb[0].mxu0
        %544 = vmatprep.mubr.bf16.mxu0 0
        %545 = vmatmul.mubr.bf16.gmra.mrb[0].mxu0 %v353
        %v546 = vpop.f32.mrb[0].mxu0
        %v547 = vadd.f32 %v398, %v546
        %v548 = vpop.f32.mrb[0].mxu0
        %v549 = vpop.f32.mrb[0].mxu0
        %v550 = vadd.f32 %v398, %v549
        %v551 = vpop.f32.mrb[0].mxu0
        %552 = vmatprep.mubr.bf16.mxu0 0
        %553 = vmatmul.mubr.bf16.gmra.mrb[0].mxu0 %v354
        %v554 = vpop.f32.mrb[0].mxu0
        %v555 = vadd.f32 %v398, %v554
        %v556 = vpop.f32.mrb[0].mxu0
        %v557 = vpop.f32.mrb[0].mxu0
        %v558 = vadd.f32 %v398, %v557
        %v559 = vpop.f32.mrb[0].mxu0
        %560 = vmatprep.mubr.bf16.mxu0 0
        %561 = vmatmul.mubr.bf16.gmra.mrb[0].mxu0 %v355
        %v562 = vpop.f32.mrb[0].mxu0
        %v563 = vadd.f32 %v398, %v562
        %v564 = vpop.f32.mrb[0].mxu0
        %v565 = vpop.f32.mrb[0].mxu0
        %v566 = vadd.f32 %v398, %v565
        %v567 = vpop.f32.mrb[0].mxu0
        %568 = vmatprep.mubr.bf16.mxu0 0
        %569 = vmatmul.mubr.bf16.gmra.mrb[0].mxu0 %v356
        %v570 = vpop.f32.mrb[0].mxu0
        %v571 = vadd.f32 %v398, %v570
        %v572 = vpop.f32.mrb[0].mxu0
        %v573 = vpop.f32.mrb[0].mxu0
        %v574 = vadd.f32 %v398, %v573
        %v575 = vpop.f32.mrb[0].mxu0
        %576 = vmatprep.mubr.bf16.mxu0 0
        %577 = vmatmul.mubr.bf16.gmra.mrb[0].mxu0 %v357
        %v578 = vpop.f32.mrb[0].mxu0
        %v579 = vadd.f32 %v398, %v578
        %v580 = vpop.f32.mrb[0].mxu0
        %v581 = vpop.f32.mrb[0].mxu0
        %v582 = vadd.f32 %v398, %v581
        %v583 = vpop.f32.mrb[0].mxu0
        %584 = vmatprep.mubr.bf16.mxu0 0
        %585 = vmatmul.mubr.bf16.gmra.mrb[0].mxu0 %v358
        %v586 = vpop.f32.mrb[0].mxu0
        %v587 = vadd.f32 %v398, %v586
        %v588 = vpop.f32.mrb[0].mxu0
        %v589 = vpop.f32.mrb[0].mxu0
        %v590 = vadd.f32 %v398, %v589
        %v591 = vpop.f32.mrb[0].mxu0
        %592 = vmatprep.mubr.bf16.mxu0 0
        %593 = vmatmul.mubr.bf16.gmra.mrb[0].mxu0 %v359
        %v594 = vpop.f32.mrb[0].mxu0
        %v595 = vadd.f32 %v398, %v594
        %v596 = vpop.f32.mrb[0].mxu0
        %v597 = vpop.f32.mrb[0].mxu0
        %v598 = vadd.f32 %v398, %v597
        %v599 = vpop.f32.mrb[0].mxu0
        %600 = vmatprep.mubr.bf16.mxu0 0
        %601 = vmatmul.mubr.bf16.gmra.mrb[0].mxu0 %v360
        %v602 = vpop.f32.mrb[0].mxu0
        %v603 = vadd.f32 %v398, %v602
        %v604 = vpop.f32.mrb[0].mxu0
        %v605 = vpop.f32.mrb[0].mxu0
        %v606 = vadd.f32 %v398, %v605
        %v607 = vpop.f32.mrb[0].mxu0
        %608 = vmatprep.mubr.bf16.mxu0 0
        %609 = vmatmul.mubr.bf16.gmra.mrb[0].mxu0 %v361
        %v610 = vpop.f32.mrb[0].mxu0
        %v611 = vadd.f32 %v398, %v610
        %v612 = vpop.f32.mrb[0].mxu0
        %v613 = vpop.f32.mrb[0].mxu0
        %v614 = vadd.f32 %v398, %v613
        %v615 = vpop.f32.mrb[0].mxu0
        %616 = vmatprep.mubr.bf16.mxu0 0
        %617 = vmatmul.mubr.bf16.gmra.mrb[0].mxu0 %v362
        %v618 = vpop.f32.mrb[0].mxu0
        %v619 = vadd.f32 %v398, %v618
        %v620 = vpop.f32.mrb[0].mxu0
        %v621 = vpop.f32.mrb[0].mxu0
        %v622 = vadd.f32 %v398, %v621
        %v623 = vpop.f32.mrb[0].mxu0
        %624 = vmatprep.mubr.bf16.mxu0 0
        %625 = vmatmul.mubr.bf16.gmra.mrb[0].mxu0 %v363
        %v626 = vpop.f32.mrb[0].mxu0
        %v627 = vadd.f32 %v398, %v626
        %v628 = vpop.f32.mrb[0].mxu0
        %v629 = vpop.f32.mrb[0].mxu0
        %v630 = vadd.f32 %v398, %v629
        %v631 = vpop.f32.mrb[0].mxu0
        %632 = vmatprep.mubr.bf16.mxu0 0
        %633 = vmatmul.mubr.bf16.gmra.mrb[0].mxu0 %v364
        %v634 = vpop.f32.mrb[0].mxu0
        %v635 = vadd.f32 %v398, %v634
        %v636 = vpop.f32.mrb[0].mxu0
        %v637 = vpop.f32.mrb[0].mxu0
        %v638 = vadd.f32 %v398, %v637
        %v639 = vpop.f32.mrb[0].mxu0
        %640 = vmatprep.mubr.bf16.mxu0 0
        %641 = vmatmul.mubr.bf16.gmra.mrb[0].mxu0 %v365
        %v642 = vpop.f32.mrb[0].mxu0
        %v643 = vadd.f32 %v398, %v642
        %v644 = vpop.f32.mrb[0].mxu0
        %v645 = vpop.f32.mrb[0].mxu0
        %v646 = vadd.f32 %v398, %v645
        %v647 = vpop.f32.mrb[0].mxu0
        %648 = vmatprep.mubr.bf16.mxu0 0
        %649 = vmatmul.mubr.bf16.gmra.mrb[0].mxu0 %v366
        %v650 = vpop.f32.mrb[0].mxu0
        %v651 = vadd.f32 %v398, %v650
        %v652 = vpop.f32.mrb[0].mxu0
        %v653 = vpop.f32.mrb[0].mxu0
        %v654 = vadd.f32 %v398, %v653
        %v655 = vpop.f32.mrb[0].mxu0
        %656 = vmatprep.mubr.bf16.mxu0 0
        %657 = vmatmul.mubr.bf16.gmra.mrb[0].mxu0 %v367
        %v658 = vpop.f32.mrb[0].mxu0
        %v659 = vadd.f32 %v398, %v658
        %v660 = vpop.f32.mrb[0].mxu0
        %v661 = vpop.f32.mrb[0].mxu0
        %v662 = vadd.f32 %v398, %v661
        %v663 = vpop.f32.mrb[0].mxu0
        %664 = vmatprep.mubr.bf16.mxu0 0
        %665 = vmatmul.mubr.bf16.gmra.mrb[0].mxu0 %v368
        %v666 = vpop.f32.mrb[0].mxu0
        %v667 = vadd.f32 %v398, %v666
        %v668 = vpop.f32.mrb[0].mxu0
        %v669 = vpop.f32.mrb[0].mxu0
        %v670 = vadd.f32 %v398, %v669
        %v671 = vpop.f32.mrb[0].mxu0
        %672 = vmatprep.mubr.bf16.mxu0 0
        %673 = vmatmul.mubr.bf16.gmra.mrb[0].mxu0 %v369
        %v674 = vpop.f32.mrb[0].mxu0
        %v675 = vadd.f32 %v398, %v674
        %v676 = vpop.f32.mrb[0].mxu0
        %v677 = vpop.f32.mrb[0].mxu0
        %v678 = vadd.f32 %v398, %v677
        %v679 = vpop.f32.mrb[0].mxu0
        %680 = vmatprep.mubr.bf16.mxu0 0
        %681 = vmatmul.mubr.bf16.gmra.mrb[0].mxu0 %v370
        %v682 = vpop.f32.mrb[0].mxu0
        %v683 = vadd.f32 %v398, %v682
        %v684 = vpop.f32.mrb[0].mxu0
        %v685 = vpop.f32.mrb[0].mxu0
        %v686 = vadd.f32 %v398, %v685
        %v687 = vpop.f32.mrb[0].mxu0
        %688 = vmatprep.mubr.bf16.mxu0 0
        %689 = vmatmul.mubr.bf16.gmra.mrb[0].mxu0 %v371
        %v690 = vpop.f32.mrb[0].mxu0
        %v691 = vadd.f32 %v398, %v690
        %v692 = vpop.f32.mrb[0].mxu0
        %v693 = vpop.f32.mrb[0].mxu0
        %v694 = vadd.f32 %v398, %v693
        %v695 = vpop.f32.mrb[0].mxu0
        %696 = vmatprep.mubr.bf16.mxu0 0
        %697 = vmatmul.mubr.bf16.gmra.mrb[0].mxu0 %v372
        %v698 = vpop.f32.mrb[0].mxu0
        %v699 = vadd.f32 %v398, %v698
        %v700 = vpop.f32.mrb[0].mxu0
        %v701 = vpop.f32.mrb[0].mxu0
        %v702 = vadd.f32 %v398, %v701
        %v703 = vpop.f32.mrb[0].mxu0
        %704 = vmatprep.mubr.bf16.mxu0 0
        %705 = vmatmul.mubr.bf16.gmra.mrb[0].mxu0 %v373
        %v706 = vpop.f32.mrb[0].mxu0
        %v707 = vadd.f32 %v398, %v706
        %v708 = vpop.f32.mrb[0].mxu0
        %v709 = vpop.f32.mrb[0].mxu0
        %v710 = vadd.f32 %v398, %v709
        %v711 = vpop.f32.mrb[0].mxu0
        %712 = vmatprep.mubr.bf16.mxu0 0
        %713 = vmatmul.mubr.bf16.gmra.mrb[0].mxu0 %v374
        %v714 = vpop.f32.mrb[0].mxu0
        %v715 = vadd.f32 %v398, %v714
        %v716 = vpop.f32.mrb[0].mxu0
        %v717 = vpop.f32.mrb[0].mxu0
        %v718 = vadd.f32 %v398, %v717
        %v719 = vpop.f32.mrb[0].mxu0
        %720 = vmatprep.mubr.bf16.mxu0 0
        %721 = vmatmul.mubr.bf16.gmra.mrb[0].mxu0 %v375
        %v722 = vpop.f32.mrb[0].mxu0
        %v723 = vadd.f32 %v398, %v722
        %v724 = vpop.f32.mrb[0].mxu0
        %v725 = vpop.f32.mrb[0].mxu0
        %v726 = vadd.f32 %v398, %v725
        %v727 = vpop.f32.mrb[0].mxu0
        %728 = vmatprep.mubr.bf16.mxu0 0
        %729 = vmatmul.mubr.bf16.gmra.mrb[0].mxu0 %v376
        %v730 = vpop.f32.mrb[0].mxu0
        %v731 = vadd.f32 %v398, %v730
        %v732 = vpop.f32.mrb[0].mxu0
        %v733 = vpop.f32.mrb[0].mxu0
        %v734 = vadd.f32 %v398, %v733
        %v735 = vpop.f32.mrb[0].mxu0
        %736 = vdwg.mxu0
        %v737 = vld [vmem:[%s3] sm:$0x1]
        %v738 = vld [vmem:[%s3 + $0x1] sm:$0x1]
        %v739 = vld [vmem:[%s3 + $0x2] sm:$0x1]
        %v740 = vld [vmem:[%s3 + $0x3] sm:$0x1]
        %v741 = vld [vmem:[%s4] sm:$0x1]
        %v742 = vld [vmem:[%s4 + $0x1] sm:$0x1]
        %v743 = vld [vmem:[%s4 + $0x2] sm:$0x1]
        %v744 = vld [vmem:[%s4 + $0x3] sm:$0x1]
        %v745 = vlaneseq
        %vm746 = vcmp.ge.s32.totalorder %v745, 0
        %vm747 = vcmp.lt.s32.totalorder %v745, 128
        %vm748 = vmand %vm746, %vm747
        %v749 = vsel %vm748, %v737, -inf
        %v750 = vsel %vm748, %v738, -inf
        %v751 = vsel %vm748, %v739, -inf
        %v752 = vsel %vm748, %v740, -inf
        %v753 = vmax.f32 %v749, %v750
        %v754 = vmax.f32 %v751, %v752
        %v755 = vmax.f32 %v753, %v754
        %v756 = vsub.f32 %v737, %v755
        %v757 = vsub.f32 %v738, %v755
        %v758 = vsub.f32 %v739, %v755
        %v759 = vsub.f32 %v740, %v755
        %v760 = vmul.f32 %v756, 1.442695
        %v761 = vpow.pop %v760
        %v762 = vmul.f32 %v757, 1.442695
        %v763 = vpow.pop %v762
        %v764 = vmul.f32 %v758, 1.442695
        %v765 = vpow.pop %v764
        %v766 = vmul.f32 %v759, 1.442695
        %v767 = vpow.pop %v766
        %v768 = vmul.f32 %v741, %v761
        %v769 = vmul.f32 %v742, %v763
        %v770 = vmul.f32 %v743, %v765
        %v771 = vmul.f32 %v744, %v767
        %vm772 = vcmask 1040384
        %v773 = vsel %vm772, %v768, 0.0
        %v774 = vsel %vm772, %v769, 0.0
        %v775 = vadd.f32 %v773, %v774
        %v776 = vsel %vm772, %v770, 0.0
        %v777 = vadd.f32 %v775, %v776
        %v778 = vsel %vm772, %v771, 0.0
        %v779 = vadd.f32 %v777, %v778
        %v780 = vlog2.pop %v779
        %v781 = vmul.f32 %v780, 0.6931472
        %v782 = vadd.f32 %v755, %v781
        %v784 = vlaneseq
        %v785 = vshrl.u32 %v784, 7
        %v786 = vsub.s32 0, %v785
        %v787 = vrot.slane %v782, %v786
        %v789 = vsub.f32 %v483, %v787
        %v790 = vsub.f32 %v486, %v787
        %v791 = vsub.f32 %v491, %v787
        %v792 = vsub.f32 %v494, %v787
        %v793 = vsub.f32 %v499, %v787
        %v794 = vsub.f32 %v502, %v787
        %v795 = vsub.f32 %v507, %v787
        %v796 = vsub.f32 %v510, %v787
        %v797 = vsub.f32 %v515, %v787
        %v798 = vsub.f32 %v518, %v787
        %v799 = vsub.f32 %v523, %v787
        %v800 = vsub.f32 %v526, %v787
        %v801 = vsub.f32 %v531, %v787
        %v802 = vsub.f32 %v534, %v787
        %v803 = vsub.f32 %v539, %v787
        %v804 = vsub.f32 %v542, %v787
        %v805 = vsub.f32 %v547, %v787
        %v806 = vsub.f32 %v550, %v787
        %v807 = vsub.f32 %v555, %v787
        %v808 = vsub.f32 %v558, %v787
        %v809 = vsub.f32 %v563, %v787
        %v810 = vsub.f32 %v566, %v787
        %v811 = vsub.f32 %v571, %v787
        %v812 = vsub.f32 %v574, %v787
        %v813 = vsub.f32 %v579, %v787
        %v814 = vsub.f32 %v582, %v787
        %v815 = vsub.f32 %v587, %v787
        %v816 = vsub.f32 %v590, %v787
        %v817 = vsub.f32 %v595, %v787
        %v818 = vsub.f32 %v598, %v787
        %v819 = vsub.f32 %v603, %v787
        %v820 = vsub.f32 %v606, %v787
        %v821 = vsub.f32 %v611, %v787
        %v822 = vsub.f32 %v614, %v787
        %v823 = vsub.f32 %v619, %v787
        %v824 = vsub.f32 %v622, %v787
        %v825 = vsub.f32 %v627, %v787
        %v826 = vsub.f32 %v630, %v787
        %v827 = vsub.f32 %v635, %v787
        %v828 = vsub.f32 %v638, %v787
        %v829 = vsub.f32 %v643, %v787
        %v830 = vsub.f32 %v646, %v787
        %v831 = vsub.f32 %v651, %v787
        %v832 = vsub.f32 %v654, %v787
        %v833 = vsub.f32 %v659, %v787
        %v834 = vsub.f32 %v662, %v787
        %v835 = vsub.f32 %v667, %v787
        %v836 = vsub.f32 %v670, %v787
        %v837 = vsub.f32 %v675, %v787
        %v838 = vsub.f32 %v678, %v787
        %v839 = vsub.f32 %v683, %v787
        %v840 = vsub.f32 %v686, %v787
        %v841 = vsub.f32 %v691, %v787
        %v842 = vsub.f32 %v694, %v787
        %v843 = vsub.f32 %v699, %v787
        %v844 = vsub.f32 %v702, %v787
        %v845 = vsub.f32 %v707, %v787
        %v846 = vsub.f32 %v710, %v787
        %v847 = vsub.f32 %v715, %v787
        %v848 = vsub.f32 %v718, %v787
        %v849 = vsub.f32 %v723, %v787
        %v850 = vsub.f32 %v726, %v787
        %v851 = vsub.f32 %v731, %v787
        %v852 = vsub.f32 %v734, %v787
        %v853 = vmul.f32 %v789, 1.442695
        %v854 = vpow.pop %v853
        %v855 = vmul.f32 %v790, 1.442695
        %v856 = vpow.pop %v855
        %v857 = vmul.f32 %v791, 1.442695
        %v858 = vpow.pop %v857
        %v859 = vmul.f32 %v792, 1.442695
        %v860 = vpow.pop %v859
        %v861 = vmul.f32 %v793, 1.442695
        %v862 = vpow.pop %v861
        %v863 = vmul.f32 %v794, 1.442695
        %v864 = vpow.pop %v863
        %v865 = vmul.f32 %v795, 1.442695
        %v866 = vpow.pop %v865
        %v867 = vmul.f32 %v796, 1.442695
        %v868 = vpow.pop %v867
        %v869 = vmul.f32 %v797, 1.442695
        %v870 = vpow.pop %v869
        %v871 = vmul.f32 %v798, 1.442695
        %v872 = vpow.pop %v871
        %v873 = vmul.f32 %v799, 1.442695
        %v874 = vpow.pop %v873
        %v875 = vmul.f32 %v800, 1.442695
        %v876 = vpow.pop %v875
        %v877 = vmul.f32 %v801, 1.442695
        %v878 = vpow.pop %v877
        %v879 = vmul.f32 %v802, 1.442695
        %v880 = vpow.pop %v879
        %v881 = vmul.f32 %v803, 1.442695
        %v882 = vpow.pop %v881
        %v883 = vmul.f32 %v804, 1.442695
        %v884 = vpow.pop %v883
        %v885 = vmul.f32 %v805, 1.442695
        %v886 = vpow.pop %v885
        %v887 = vmul.f32 %v806, 1.442695
        %v888 = vpow.pop %v887
        %v889 = vmul.f32 %v807, 1.442695
        %v890 = vpow.pop %v889
        %v891 = vmul.f32 %v808, 1.442695
        %v892 = vpow.pop %v891
        %v893 = vmul.f32 %v809, 1.442695
        %v894 = vpow.pop %v893
        %v895 = vmul.f32 %v810, 1.442695
        %v896 = vpow.pop %v895
        %v897 = vmul.f32 %v811, 1.442695
        %v898 = vpow.pop %v897
        %v899 = vmul.f32 %v812, 1.442695
        %v900 = vpow.pop %v899
        %v901 = vmul.f32 %v813, 1.442695
        %v902 = vpow.pop %v901
        %v903 = vmul.f32 %v814, 1.442695
        %v904 = vpow.pop %v903
        %v905 = vmul.f32 %v815, 1.442695
        %v906 = vpow.pop %v905
        %v907 = vmul.f32 %v816, 1.442695
        %v908 = vpow.pop %v907
        %v909 = vmul.f32 %v817, 1.442695
        %v910 = vpow.pop %v909
        %v911 = vmul.f32 %v818, 1.442695
        %v912 = vpow.pop %v911
        %v913 = vmul.f32 %v819, 1.442695
        %v914 = vpow.pop %v913
        %v915 = vmul.f32 %v820, 1.442695
        %v916 = vpow.pop %v915
        %v917 = vmul.f32 %v821, 1.442695
        %v918 = vpow.pop %v917
        %v919 = vmul.f32 %v822, 1.442695
        %v920 = vpow.pop %v919
        %v921 = vmul.f32 %v823, 1.442695
        %v922 = vpow.pop %v921
        %v923 = vmul.f32 %v824, 1.442695
        %v924 = vpow.pop %v923
        %v925 = vmul.f32 %v825, 1.442695
        %v926 = vpow.pop %v925
        %v927 = vmul.f32 %v826, 1.442695
        %v928 = vpow.pop %v927
        %v929 = vmul.f32 %v827, 1.442695
        %v930 = vpow.pop %v929
        %v931 = vmul.f32 %v828, 1.442695
        %v932 = vpow.pop %v931
        %v933 = vmul.f32 %v829, 1.442695
        %v934 = vpow.pop %v933
        %v935 = vmul.f32 %v830, 1.442695
        %v936 = vpow.pop %v935
        %v937 = vmul.f32 %v831, 1.442695
        %v938 = vpow.pop %v937
        %v939 = vmul.f32 %v832, 1.442695
        %v940 = vpow.pop %v939
        %v941 = vmul.f32 %v833, 1.442695
        %v942 = vpow.pop %v941
        %v943 = vmul.f32 %v834, 1.442695
        %v944 = vpow.pop %v943
        %v945 = vmul.f32 %v835, 1.442695
        %v946 = vpow.pop %v945
        %v947 = vmul.f32 %v836, 1.442695
        %v948 = vpow.pop %v947
        %v949 = vmul.f32 %v837, 1.442695
        %v950 = vpow.pop %v949
        %v951 = vmul.f32 %v838, 1.442695
        %v952 = vpow.pop %v951
        %v953 = vmul.f32 %v839, 1.442695
        %v954 = vpow.pop %v953
        %v955 = vmul.f32 %v840, 1.442695
        %v956 = vpow.pop %v955
        %v957 = vmul.f32 %v841, 1.442695
        %v958 = vpow.pop %v957
        %v959 = vmul.f32 %v842, 1.442695
        %v960 = vpow.pop %v959
        %v961 = vmul.f32 %v843, 1.442695
        %v962 = vpow.pop %v961
        %v963 = vmul.f32 %v844, 1.442695
        %v964 = vpow.pop %v963
        %v965 = vmul.f32 %v845, 1.442695
        %v966 = vpow.pop %v965
        %v967 = vmul.f32 %v846, 1.442695
        %v968 = vpow.pop %v967
        %v969 = vmul.f32 %v847, 1.442695
        %v970 = vpow.pop %v969
        %v971 = vmul.f32 %v848, 1.442695
        %v972 = vpow.pop %v971
        %v973 = vmul.f32 %v849, 1.442695
        %v974 = vpow.pop %v973
        %v975 = vmul.f32 %v850, 1.442695
        %v976 = vpow.pop %v975
        %v977 = vmul.f32 %v851, 1.442695
        %v978 = vpow.pop %v977
        %v979 = vmul.f32 %v852, 1.442695
        %v980 = vpow.pop %v979
        %v981 = vmul.f32 %v281, %v854
        %v982 = vmul.f32 %v282, %v856
        %v983 = vmul.f32 %v283, %v858
        %v984 = vmul.f32 %v284, %v860
        %v985 = vmul.f32 %v285, %v862
        %v986 = vmul.f32 %v286, %v864
        %v987 = vmul.f32 %v287, %v866
        %v988 = vmul.f32 %v288, %v868
        %v989 = vmul.f32 %v289, %v870
        %v990 = vmul.f32 %v290, %v872
        %v991 = vmul.f32 %v291, %v874
        %v992 = vmul.f32 %v292, %v876
        %v993 = vmul.f32 %v293, %v878
        %v994 = vmul.f32 %v294, %v880
        %v995 = vmul.f32 %v295, %v882
        %v996 = vmul.f32 %v296, %v884
        %v997 = vmul.f32 %v297, %v886
        %v998 = vmul.f32 %v298, %v888
        %v999 = vmul.f32 %v299, %v890
        %v1000 = vmul.f32 %v300, %v892
        %v1001 = vmul.f32 %v301, %v894
        %v1002 = vmul.f32 %v302, %v896
        %v1003 = vmul.f32 %v303, %v898
        %v1004 = vmul.f32 %v304, %v900
        %v1005 = vmul.f32 %v305, %v902
        %v1006 = vmul.f32 %v306, %v904
        %v1007 = vmul.f32 %v307, %v906
        %v1008 = vmul.f32 %v308, %v908
        %v1009 = vmul.f32 %v309, %v910
        %v1010 = vmul.f32 %v310, %v912
        %v1011 = vmul.f32 %v311, %v914
        %v1012 = vmul.f32 %v312, %v916
        %v1013 = vmul.f32 %v313, %v918
        %v1014 = vmul.f32 %v314, %v920
        %v1015 = vmul.f32 %v315, %v922
        %v1016 = vmul.f32 %v316, %v924
        %v1017 = vmul.f32 %v317, %v926
        %v1018 = vmul.f32 %v318, %v928
        %v1019 = vmul.f32 %v319, %v930
        %v1020 = vmul.f32 %v320, %v932
        %v1021 = vmul.f32 %v321, %v934
        %v1022 = vmul.f32 %v322, %v936
        %v1023 = vmul.f32 %v323, %v938
        %v1024 = vmul.f32 %v324, %v940
        %v1025 = vmul.f32 %v325, %v942
        %v1026 = vmul.f32 %v326, %v944
        %v1027 = vmul.f32 %v327, %v946
        %v1028 = vmul.f32 %v328, %v948
        %v1029 = vmul.f32 %v329, %v950
        %v1030 = vmul.f32 %v330, %v952
        %v1031 = vmul.f32 %v331, %v954
        %v1032 = vmul.f32 %v332, %v956
        %v1033 = vmul.f32 %v333, %v958
        %v1034 = vmul.f32 %v334, %v960
        %v1035 = vmul.f32 %v335, %v962
        %v1036 = vmul.f32 %v336, %v964
        %v1037 = vmul.f32 %v337, %v966
        %v1038 = vmul.f32 %v338, %v968
        %v1039 = vmul.f32 %v339, %v970
        %v1040 = vmul.f32 %v340, %v972
        %v1041 = vmul.f32 %v341, %v974
        %v1042 = vmul.f32 %v342, %v976
        %v1043 = vmul.f32 %v343, %v978
        %v1044 = vmul.f32 %v344, %v980
        %v1045 = vmax.f32 %v981, 0.0
        %v1046 = vmax.f32 %v982, 0.0
        %v1047 = vmax.f32 %v983, 0.0
        %v1048 = vmax.f32 %v984, 0.0
        %v1049 = vmax.f32 %v985, 0.0
        %v1050 = vmax.f32 %v986, 0.0
        %v1051 = vmax.f32 %v987, 0.0
        %v1052 = vmax.f32 %v988, 0.0
        %v1053 = vmax.f32 %v989, 0.0
        %v1054 = vmax.f32 %v990, 0.0
        %v1055 = vmax.f32 %v991, 0.0
        %v1056 = vmax.f32 %v992, 0.0
        %v1057 = vmax.f32 %v993, 0.0
        %v1058 = vmax.f32 %v994, 0.0
        %v1059 = vmax.f32 %v995, 0.0
        %v1060 = vmax.f32 %v996, 0.0
        %v1061 = vmax.f32 %v997, 0.0
        %v1062 = vmax.f32 %v998, 0.0
        %v1063 = vmax.f32 %v999, 0.0
        %v1064 = vmax.f32 %v1000, 0.0
        %v1065 = vmax.f32 %v1001, 0.0
        %v1066 = vmax.f32 %v1002, 0.0
        %v1067 = vmax.f32 %v1003, 0.0
        %v1068 = vmax.f32 %v1004, 0.0
        %v1069 = vmax.f32 %v1005, 0.0
        %v1070 = vmax.f32 %v1006, 0.0
        %v1071 = vmax.f32 %v1007, 0.0
        %v1072 = vmax.f32 %v1008, 0.0
        %v1073 = vmax.f32 %v1009, 0.0
        %v1074 = vmax.f32 %v1010, 0.0
        %v1075 = vmax.f32 %v1011, 0.0
        %v1076 = vmax.f32 %v1012, 0.0
        %v1077 = vmax.f32 %v1013, 0.0
        %v1078 = vmax.f32 %v1014, 0.0
        %v1079 = vmax.f32 %v1015, 0.0
        %v1080 = vmax.f32 %v1016, 0.0
        %v1081 = vmax.f32 %v1017, 0.0
        %v1082 = vmax.f32 %v1018, 0.0
        %v1083 = vmax.f32 %v1019, 0.0
        %v1084 = vmax.f32 %v1020, 0.0
        %v1085 = vmax.f32 %v1021, 0.0
        %v1086 = vmax.f32 %v1022, 0.0
        %v1087 = vmax.f32 %v1023, 0.0
        %v1088 = vmax.f32 %v1024, 0.0
        %v1089 = vmax.f32 %v1025, 0.0
        %v1090 = vmax.f32 %v1026, 0.0
        %v1091 = vmax.f32 %v1027, 0.0
        %v1092 = vmax.f32 %v1028, 0.0
        %v1093 = vmax.f32 %v1029, 0.0
        %v1094 = vmax.f32 %v1030, 0.0
        %v1095 = vmax.f32 %v1031, 0.0
        %v1096 = vmax.f32 %v1032, 0.0
        %v1097 = vmax.f32 %v1033, 0.0
        %v1098 = vmax.f32 %v1034, 0.0
        %v1099 = vmax.f32 %v1035, 0.0
        %v1100 = vmax.f32 %v1036, 0.0
        %v1101 = vmax.f32 %v1037, 0.0
        %v1102 = vmax.f32 %v1038, 0.0
        %v1103 = vmax.f32 %v1039, 0.0
        %v1104 = vmax.f32 %v1040, 0.0
        %v1105 = vmax.f32 %v1041, 0.0
        %v1106 = vmax.f32 %v1042, 0.0
        %v1107 = vmax.f32 %v1043, 0.0
        %v1108 = vmax.f32 %v1044, 0.0
        %1109 = vadd.xlane.f32.xlu0 %v1045
        %v1110 = vpop.xlane.xlu0 %1109
        %1111 = vadd.xlane.f32.xlu0 %v1046
        %v1112 = vpop.xlane.xlu0 %1111
        %1113 = vadd.xlane.f32.xlu0 %v1047
        %v1114 = vpop.xlane.xlu0 %1113
        %1115 = vadd.xlane.f32.xlu0 %v1048
        %v1116 = vpop.xlane.xlu0 %1115
        %1117 = vadd.xlane.f32.xlu0 %v1049
        %v1118 = vpop.xlane.xlu0 %1117
        %1119 = vadd.xlane.f32.xlu0 %v1050
        %v1120 = vpop.xlane.xlu0 %1119
        %1121 = vadd.xlane.f32.xlu0 %v1051
        %v1122 = vpop.xlane.xlu0 %1121
        %1123 = vadd.xlane.f32.xlu0 %v1052
        %v1124 = vpop.xlane.xlu0 %1123
        %1125 = vadd.xlane.f32.xlu0 %v1053
        %v1126 = vpop.xlane.xlu0 %1125
        %1127 = vadd.xlane.f32.xlu0 %v1054
        %v1128 = vpop.xlane.xlu0 %1127
        %1129 = vadd.xlane.f32.xlu0 %v1055
        %v1130 = vpop.xlane.xlu0 %1129
        %1131 = vadd.xlane.f32.xlu0 %v1056
        %v1132 = vpop.xlane.xlu0 %1131
        %1133 = vadd.xlane.f32.xlu0 %v1057
        %v1134 = vpop.xlane.xlu0 %1133
        %1135 = vadd.xlane.f32.xlu0 %v1058
        %v1136 = vpop.xlane.xlu0 %1135
        %1137 = vadd.xlane.f32.xlu0 %v1059
        %v1138 = vpop.xlane.xlu0 %1137
        %1139 = vadd.xlane.f32.xlu0 %v1060
        %v1140 = vpop.xlane.xlu0 %1139
        %1141 = vadd.xlane.f32.xlu0 %v1061
        %v1142 = vpop.xlane.xlu0 %1141
        %1143 = vadd.xlane.f32.xlu0 %v1062
        %v1144 = vpop.xlane.xlu0 %1143
        %1145 = vadd.xlane.f32.xlu0 %v1063
        %v1146 = vpop.xlane.xlu0 %1145
        %1147 = vadd.xlane.f32.xlu0 %v1064
        %v1148 = vpop.xlane.xlu0 %1147
        %1149 = vadd.xlane.f32.xlu0 %v1065
        %v1150 = vpop.xlane.xlu0 %1149
        %1151 = vadd.xlane.f32.xlu0 %v1066
        %v1152 = vpop.xlane.xlu0 %1151
        %1153 = vadd.xlane.f32.xlu0 %v1067
        %v1154 = vpop.xlane.xlu0 %1153
        %1155 = vadd.xlane.f32.xlu0 %v1068
        %v1156 = vpop.xlane.xlu0 %1155
        %1157 = vadd.xlane.f32.xlu0 %v1069
        %v1158 = vpop.xlane.xlu0 %1157
        %1159 = vadd.xlane.f32.xlu0 %v1070
        %v1160 = vpop.xlane.xlu0 %1159
        %1161 = vadd.xlane.f32.xlu0 %v1071
        %v1162 = vpop.xlane.xlu0 %1161
        %1163 = vadd.xlane.f32.xlu0 %v1072
        %v1164 = vpop.xlane.xlu0 %1163
        %1165 = vadd.xlane.f32.xlu0 %v1073
        %v1166 = vpop.xlane.xlu0 %1165
        %1167 = vadd.xlane.f32.xlu0 %v1074
        %v1168 = vpop.xlane.xlu0 %1167
        %1169 = vadd.xlane.f32.xlu0 %v1075
        %v1170 = vpop.xlane.xlu0 %1169
        %1171 = vadd.xlane.f32.xlu0 %v1076
        %v1172 = vpop.xlane.xlu0 %1171
        %1173 = vadd.xlane.f32.xlu0 %v1077
        %v1174 = vpop.xlane.xlu0 %1173
        %1175 = vadd.xlane.f32.xlu0 %v1078
        %v1176 = vpop.xlane.xlu0 %1175
        %1177 = vadd.xlane.f32.xlu0 %v1079
        %v1178 = vpop.xlane.xlu0 %1177
        %1179 = vadd.xlane.f32.xlu0 %v1080
        %v1180 = vpop.xlane.xlu0 %1179
        %1181 = vadd.xlane.f32.xlu0 %v1081
        %v1182 = vpop.xlane.xlu0 %1181
        %1183 = vadd.xlane.f32.xlu0 %v1082
        %v1184 = vpop.xlane.xlu0 %1183
        %1185 = vadd.xlane.f32.xlu0 %v1083
        %v1186 = vpop.xlane.xlu0 %1185
        %1187 = vadd.xlane.f32.xlu0 %v1084
        %v1188 = vpop.xlane.xlu0 %1187
        %1189 = vadd.xlane.f32.xlu0 %v1085
        %v1190 = vpop.xlane.xlu0 %1189
        %1191 = vadd.xlane.f32.xlu0 %v1086
        %v1192 = vpop.xlane.xlu0 %1191
        %1193 = vadd.xlane.f32.xlu0 %v1087
        %v1194 = vpop.xlane.xlu0 %1193
        %1195 = vadd.xlane.f32.xlu0 %v1088
        %v1196 = vpop.xlane.xlu0 %1195
        %1197 = vadd.xlane.f32.xlu0 %v1089
        %v1198 = vpop.xlane.xlu0 %1197
        %1199 = vadd.xlane.f32.xlu0 %v1090
        %v1200 = vpop.xlane.xlu0 %1199
        %1201 = vadd.xlane.f32.xlu0 %v1091
        %v1202 = vpop.xlane.xlu0 %1201
        %1203 = vadd.xlane.f32.xlu0 %v1092
        %v1204 = vpop.xlane.xlu0 %1203
        %1205 = vadd.xlane.f32.xlu0 %v1093
        %v1206 = vpop.xlane.xlu0 %1205
        %1207 = vadd.xlane.f32.xlu0 %v1094
        %v1208 = vpop.xlane.xlu0 %1207
        %1209 = vadd.xlane.f32.xlu0 %v1095
        %v1210 = vpop.xlane.xlu0 %1209
        %1211 = vadd.xlane.f32.xlu0 %v1096
        %v1212 = vpop.xlane.xlu0 %1211
        %1213 = vadd.xlane.f32.xlu0 %v1097
        %v1214 = vpop.xlane.xlu0 %1213
        %1215 = vadd.xlane.f32.xlu0 %v1098
        %v1216 = vpop.xlane.xlu0 %1215
        %1217 = vadd.xlane.f32.xlu0 %v1099
        %v1218 = vpop.xlane.xlu0 %1217
        %1219 = vadd.xlane.f32.xlu0 %v1100
        %v1220 = vpop.xlane.xlu0 %1219
        %1221 = vadd.xlane.f32.xlu0 %v1101
        %v1222 = vpop.xlane.xlu0 %1221
        %1223 = vadd.xlane.f32.xlu0 %v1102
        %v1224 = vpop.xlane.xlu0 %1223
        %1225 = vadd.xlane.f32.xlu0 %v1103
        %v1226 = vpop.xlane.xlu0 %1225
        %1227 = vadd.xlane.f32.xlu0 %v1104
        %v1228 = vpop.xlane.xlu0 %1227
        %1229 = vadd.xlane.f32.xlu0 %v1105
        %v1230 = vpop.xlane.xlu0 %1229
        %1231 = vadd.xlane.f32.xlu0 %v1106
        %v1232 = vpop.xlane.xlu0 %1231
        %1233 = vadd.xlane.f32.xlu0 %v1107
        %v1234 = vpop.xlane.xlu0 %1233
        %1235 = vadd.xlane.f32.xlu0 %v1108
        %v1236 = vpop.xlane.xlu0 %1235
        %v1237 = vrcp.pop 128.0
        %v1238 = vmul.f32 %v1110, %v1237
        %v1239 = vmul.f32 %v1112, %v1237
        %v1240 = vmul.f32 %v1114, %v1237
        %v1241 = vmul.f32 %v1116, %v1237
        %v1242 = vmul.f32 %v1118, %v1237
        %v1243 = vmul.f32 %v1120, %v1237
        %v1244 = vmul.f32 %v1122, %v1237
        %v1245 = vmul.f32 %v1124, %v1237
        %v1246 = vmul.f32 %v1126, %v1237
        %v1247 = vmul.f32 %v1128, %v1237
        %v1248 = vmul.f32 %v1130, %v1237
        %v1249 = vmul.f32 %v1132, %v1237
        %v1250 = vmul.f32 %v1134, %v1237
        %v1251 = vmul.f32 %v1136, %v1237
        %v1252 = vmul.f32 %v1138, %v1237
        %v1253 = vmul.f32 %v1140, %v1237
        %v1254 = vmul.f32 %v1142, %v1237
        %v1255 = vmul.f32 %v1144, %v1237
        %v1256 = vmul.f32 %v1146, %v1237
        %v1257 = vmul.f32 %v1148, %v1237
        %v1258 = vmul.f32 %v1150, %v1237
        %v1259 = vmul.f32 %v1152, %v1237
        %v1260 = vmul.f32 %v1154, %v1237
        %v1261 = vmul.f32 %v1156, %v1237
        %v1262 = vmul.f32 %v1158, %v1237
        %v1263 = vmul.f32 %v1160, %v1237
        %v1264 = vmul.f32 %v1162, %v1237
        %v1265 = vmul.f32 %v1164, %v1237
        %v1266 = vmul.f32 %v1166, %v1237
        %v1267 = vmul.f32 %v1168, %v1237
        %v1268 = vmul.f32 %v1170, %v1237
        %v1269 = vmul.f32 %v1172, %v1237
        %v1270 = vmul.f32 %v1174, %v1237
        %v1271 = vmul.f32 %v1176, %v1237
        %v1272 = vmul.f32 %v1178, %v1237
        %v1273 = vmul.f32 %v1180, %v1237
        %v1274 = vmul.f32 %v1182, %v1237
        %v1275 = vmul.f32 %v1184, %v1237
        %v1276 = vmul.f32 %v1186, %v1237
        %v1277 = vmul.f32 %v1188, %v1237
        %v1278 = vmul.f32 %v1190, %v1237
        %v1279 = vmul.f32 %v1192, %v1237
        %v1280 = vmul.f32 %v1194, %v1237
        %v1281 = vmul.f32 %v1196, %v1237
        %v1282 = vmul.f32 %v1198, %v1237
        %v1283 = vmul.f32 %v1200, %v1237
        %v1284 = vmul.f32 %v1202, %v1237
        %v1285 = vmul.f32 %v1204, %v1237
        %v1286 = vmul.f32 %v1206, %v1237
        %v1287 = vmul.f32 %v1208, %v1237
        %v1288 = vmul.f32 %v1210, %v1237
        %v1289 = vmul.f32 %v1212, %v1237
        %v1290 = vmul.f32 %v1214, %v1237
        %v1291 = vmul.f32 %v1216, %v1237
        %v1292 = vmul.f32 %v1218, %v1237
        %v1293 = vmul.f32 %v1220, %v1237
        %v1294 = vmul.f32 %v1222, %v1237
        %v1295 = vmul.f32 %v1224, %v1237
        %v1296 = vmul.f32 %v1226, %v1237
        %v1297 = vmul.f32 %v1228, %v1237
        %v1298 = vmul.f32 %v1230, %v1237
        %v1299 = vmul.f32 %v1232, %v1237
        %v1300 = vmul.f32 %v1234, %v1237
        %v1301 = vmul.f32 %v1236, %v1237
        %v1302 = vmul.f32 %v1045, %v1045
        %v1303 = vmul.f32 %v1046, %v1046
        %v1304 = vmul.f32 %v1047, %v1047
        %v1305 = vmul.f32 %v1048, %v1048
        %v1306 = vmul.f32 %v1049, %v1049
        %v1307 = vmul.f32 %v1050, %v1050
        %v1308 = vmul.f32 %v1051, %v1051
        %v1309 = vmul.f32 %v1052, %v1052
        %v1310 = vmul.f32 %v1053, %v1053
        %v1311 = vmul.f32 %v1054, %v1054
        %v1312 = vmul.f32 %v1055, %v1055
        %v1313 = vmul.f32 %v1056, %v1056
        %v1314 = vmul.f32 %v1057, %v1057
        %v1315 = vmul.f32 %v1058, %v1058
        %v1316 = vmul.f32 %v1059, %v1059
        %v1317 = vmul.f32 %v1060, %v1060
        %v1318 = vmul.f32 %v1061, %v1061
        %v1319 = vmul.f32 %v1062, %v1062
        %v1320 = vmul.f32 %v1063, %v1063
        %v1321 = vmul.f32 %v1064, %v1064
        %v1322 = vmul.f32 %v1065, %v1065
        %v1323 = vmul.f32 %v1066, %v1066
        %v1324 = vmul.f32 %v1067, %v1067
        %v1325 = vmul.f32 %v1068, %v1068
        %v1326 = vmul.f32 %v1069, %v1069
        %v1327 = vmul.f32 %v1070, %v1070
        %v1328 = vmul.f32 %v1071, %v1071
        %v1329 = vmul.f32 %v1072, %v1072
        %v1330 = vmul.f32 %v1073, %v1073
        %v1331 = vmul.f32 %v1074, %v1074
        %v1332 = vmul.f32 %v1075, %v1075
        %v1333 = vmul.f32 %v1076, %v1076
        %v1334 = vmul.f32 %v1077, %v1077
        %v1335 = vmul.f32 %v1078, %v1078
        %v1336 = vmul.f32 %v1079, %v1079
        %v1337 = vmul.f32 %v1080, %v1080
        %v1338 = vmul.f32 %v1081, %v1081
        %v1339 = vmul.f32 %v1082, %v1082
        %v1340 = vmul.f32 %v1083, %v1083
        %v1341 = vmul.f32 %v1084, %v1084
        %v1342 = vmul.f32 %v1085, %v1085
        %v1343 = vmul.f32 %v1086, %v1086
        %v1344 = vmul.f32 %v1087, %v1087
        %v1345 = vmul.f32 %v1088, %v1088
        %v1346 = vmul.f32 %v1089, %v1089
        %v1347 = vmul.f32 %v1090, %v1090
        %v1348 = vmul.f32 %v1091, %v1091
        %v1349 = vmul.f32 %v1092, %v1092
        %v1350 = vmul.f32 %v1093, %v1093
        %v1351 = vmul.f32 %v1094, %v1094
        %v1352 = vmul.f32 %v1095, %v1095
        %v1353 = vmul.f32 %v1096, %v1096
        %v1354 = vmul.f32 %v1097, %v1097
        %v1355 = vmul.f32 %v1098, %v1098
        %v1356 = vmul.f32 %v1099, %v1099
        %v1357 = vmul.f32 %v1100, %v1100
        %v1358 = vmul.f32 %v1101, %v1101
        %v1359 = vmul.f32 %v1102, %v1102
        %v1360 = vmul.f32 %v1103, %v1103
        %v1361 = vmul.f32 %v1104, %v1104
        %v1362 = vmul.f32 %v1105, %v1105
        %v1363 = vmul.f32 %v1106, %v1106
        %v1364 = vmul.f32 %v1107, %v1107
        %v1365 = vmul.f32 %v1108, %v1108
        %1366 = vadd.xlane.f32.xlu0 %v1302
        %v1367 = vpop.xlane.xlu0 %1366
        %1368 = vadd.xlane.f32.xlu0 %v1303
        %v1369 = vpop.xlane.xlu0 %1368
        %1370 = vadd.xlane.f32.xlu0 %v1304
        %v1371 = vpop.xlane.xlu0 %1370
        %1372 = vadd.xlane.f32.xlu0 %v1305
        %v1373 = vpop.xlane.xlu0 %1372
        %1374 = vadd.xlane.f32.xlu0 %v1306
        %v1375 = vpop.xlane.xlu0 %1374
        %1376 = vadd.xlane.f32.xlu0 %v1307
        %v1377 = vpop.xlane.xlu0 %1376
        %1378 = vadd.xlane.f32.xlu0 %v1308
        %v1379 = vpop.xlane.xlu0 %1378
        %1380 = vadd.xlane.f32.xlu0 %v1309
        %v1381 = vpop.xlane.xlu0 %1380
        %1382 = vadd.xlane.f32.xlu0 %v1310
        %v1383 = vpop.xlane.xlu0 %1382
        %1384 = vadd.xlane.f32.xlu0 %v1311
        %v1385 = vpop.xlane.xlu0 %1384
        %1386 = vadd.xlane.f32.xlu0 %v1312
        %v1387 = vpop.xlane.xlu0 %1386
        %1388 = vadd.xlane.f32.xlu0 %v1313
        %v1389 = vpop.xlane.xlu0 %1388
        %1390 = vadd.xlane.f32.xlu0 %v1314
        %v1391 = vpop.xlane.xlu0 %1390
        %1392 = vadd.xlane.f32.xlu0 %v1315
        %v1393 = vpop.xlane.xlu0 %1392
        %1394 = vadd.xlane.f32.xlu0 %v1316
        %v1395 = vpop.xlane.xlu0 %1394
        %1396 = vadd.xlane.f32.xlu0 %v1317
        %v1397 = vpop.xlane.xlu0 %1396
        %1398 = vadd.xlane.f32.xlu0 %v1318
        %v1399 = vpop.xlane.xlu0 %1398
        %1400 = vadd.xlane.f32.xlu0 %v1319
        %v1401 = vpop.xlane.xlu0 %1400
        %1402 = vadd.xlane.f32.xlu0 %v1320
        %v1403 = vpop.xlane.xlu0 %1402
        %1404 = vadd.xlane.f32.xlu0 %v1321
        %v1405 = vpop.xlane.xlu0 %1404
        %1406 = vadd.xlane.f32.xlu0 %v1322
        %v1407 = vpop.xlane.xlu0 %1406
        %1408 = vadd.xlane.f32.xlu0 %v1323
        %v1409 = vpop.xlane.xlu0 %1408
        %1410 = vadd.xlane.f32.xlu0 %v1324
        %v1411 = vpop.xlane.xlu0 %1410
        %1412 = vadd.xlane.f32.xlu0 %v1325
        %v1413 = vpop.xlane.xlu0 %1412
        %1414 = vadd.xlane.f32.xlu0 %v1326
        %v1415 = vpop.xlane.xlu0 %1414
        %1416 = vadd.xlane.f32.xlu0 %v1327
        %v1417 = vpop.xlane.xlu0 %1416
        %1418 = vadd.xlane.f32.xlu0 %v1328
        %v1419 = vpop.xlane.xlu0 %1418
        %1420 = vadd.xlane.f32.xlu0 %v1329
        %v1421 = vpop.xlane.xlu0 %1420
        %1422 = vadd.xlane.f32.xlu0 %v1330
        %v1423 = vpop.xlane.xlu0 %1422
        %1424 = vadd.xlane.f32.xlu0 %v1331
        %v1425 = vpop.xlane.xlu0 %1424
        %1426 = vadd.xlane.f32.xlu0 %v1332
        %v1427 = vpop.xlane.xlu0 %1426
        %1428 = vadd.xlane.f32.xlu0 %v1333
        %v1429 = vpop.xlane.xlu0 %1428
        %1430 = vadd.xlane.f32.xlu0 %v1334
        %v1431 = vpop.xlane.xlu0 %1430
        %1432 = vadd.xlane.f32.xlu0 %v1335
        %v1433 = vpop.xlane.xlu0 %1432
        %1434 = vadd.xlane.f32.xlu0 %v1336
        %v1435 = vpop.xlane.xlu0 %1434
        %1436 = vadd.xlane.f32.xlu0 %v1337
        %v1437 = vpop.xlane.xlu0 %1436
        %1438 = vadd.xlane.f32.xlu0 %v1338
        %v1439 = vpop.xlane.xlu0 %1438
        %1440 = vadd.xlane.f32.xlu0 %v1339
        %v1441 = vpop.xlane.xlu0 %1440
        %1442 = vadd.xlane.f32.xlu0 %v1340
        %v1443 = vpop.xlane.xlu0 %1442
        %1444 = vadd.xlane.f32.xlu0 %v1341
        %v1445 = vpop.xlane.xlu0 %1444
        %1446 = vadd.xlane.f32.xlu0 %v1342
        %v1447 = vpop.xlane.xlu0 %1446
        %1448 = vadd.xlane.f32.xlu0 %v1343
        %v1449 = vpop.xlane.xlu0 %1448
        %1450 = vadd.xlane.f32.xlu0 %v1344
        %v1451 = vpop.xlane.xlu0 %1450
        %1452 = vadd.xlane.f32.xlu0 %v1345
        %v1453 = vpop.xlane.xlu0 %1452
        %1454 = vadd.xlane.f32.xlu0 %v1346
        %v1455 = vpop.xlane.xlu0 %1454
        %1456 = vadd.xlane.f32.xlu0 %v1347
        %v1457 = vpop.xlane.xlu0 %1456
        %1458 = vadd.xlane.f32.xlu0 %v1348
        %v1459 = vpop.xlane.xlu0 %1458
        %1460 = vadd.xlane.f32.xlu0 %v1349
        %v1461 = vpop.xlane.xlu0 %1460
        %1462 = vadd.xlane.f32.xlu0 %v1350
        %v1463 = vpop.xlane.xlu0 %1462
        %1464 = vadd.xlane.f32.xlu0 %v1351
        %v1465 = vpop.xlane.xlu0 %1464
        %1466 = vadd.xlane.f32.xlu0 %v1352
        %v1467 = vpop.xlane.xlu0 %1466
        %1468 = vadd.xlane.f32.xlu0 %v1353
        %v1469 = vpop.xlane.xlu0 %1468
        %1470 = vadd.xlane.f32.xlu0 %v1354
        %v1471 = vpop.xlane.xlu0 %1470
        %1472 = vadd.xlane.f32.xlu0 %v1355
        %v1473 = vpop.xlane.xlu0 %1472
        %1474 = vadd.xlane.f32.xlu0 %v1356
        %v1475 = vpop.xlane.xlu0 %1474
        %1476 = vadd.xlane.f32.xlu0 %v1357
        %v1477 = vpop.xlane.xlu0 %1476
        %1478 = vadd.xlane.f32.xlu0 %v1358
        %v1479 = vpop.xlane.xlu0 %1478
        %1480 = vadd.xlane.f32.xlu0 %v1359
        %v1481 = vpop.xlane.xlu0 %1480
        %1482 = vadd.xlane.f32.xlu0 %v1360
        %v1483 = vpop.xlane.xlu0 %1482
        %1484 = vadd.xlane.f32.xlu0 %v1361
        %v1485 = vpop.xlane.xlu0 %1484
        %1486 = vadd.xlane.f32.xlu0 %v1362
        %v1487 = vpop.xlane.xlu0 %1486
        %1488 = vadd.xlane.f32.xlu0 %v1363
        %v1489 = vpop.xlane.xlu0 %1488
        %1490 = vadd.xlane.f32.xlu0 %v1364
        %v1491 = vpop.xlane.xlu0 %1490
        %1492 = vadd.xlane.f32.xlu0 %v1365
        %v1493 = vpop.xlane.xlu0 %1492
        %v1494 = vmul.f32 %v1367, %v1237
        %v1495 = vmul.f32 %v1369, %v1237
        %v1496 = vmul.f32 %v1371, %v1237
        %v1497 = vmul.f32 %v1373, %v1237
        %v1498 = vmul.f32 %v1375, %v1237
        %v1499 = vmul.f32 %v1377, %v1237
        %v1500 = vmul.f32 %v1379, %v1237
        %v1501 = vmul.f32 %v1381, %v1237
        %v1502 = vmul.f32 %v1383, %v1237
        %v1503 = vmul.f32 %v1385, %v1237
        %v1504 = vmul.f32 %v1387, %v1237
        %v1505 = vmul.f32 %v1389, %v1237
        %v1506 = vmul.f32 %v1391, %v1237
        %v1507 = vmul.f32 %v1393, %v1237
        %v1508 = vmul.f32 %v1395, %v1237
        %v1509 = vmul.f32 %v1397, %v1237
        %v1510 = vmul.f32 %v1399, %v1237
        %v1511 = vmul.f32 %v1401, %v1237
        %v1512 = vmul.f32 %v1403, %v1237
        %v1513 = vmul.f32 %v1405, %v1237
        %v1514 = vmul.f32 %v1407, %v1237
        %v1515 = vmul.f32 %v1409, %v1237
        %v1516 = vmul.f32 %v1411, %v1237
        %v1517 = vmul.f32 %v1413, %v1237
        %v1518 = vmul.f32 %v1415, %v1237
        %v1519 = vmul.f32 %v1417, %v1237
        %v1520 = vmul.f32 %v1419, %v1237
        %v1521 = vmul.f32 %v1421, %v1237
        %v1522 = vmul.f32 %v1423, %v1237
        %v1523 = vmul.f32 %v1425, %v1237
        %v1524 = vmul.f32 %v1427, %v1237
        %v1525 = vmul.f32 %v1429, %v1237
        %v1526 = vmul.f32 %v1431, %v1237
        %v1527 = vmul.f32 %v1433, %v1237
        %v1528 = vmul.f32 %v1435, %v1237
        %v1529 = vmul.f32 %v1437, %v1237
        %v1530 = vmul.f32 %v1439, %v1237
        %v1531 = vmul.f32 %v1441, %v1237
        %v1532 = vmul.f32 %v1443, %v1237
        %v1533 = vmul.f32 %v1445, %v1237
        %v1534 = vmul.f32 %v1447, %v1237
        %v1535 = vmul.f32 %v1449, %v1237
        %v1536 = vmul.f32 %v1451, %v1237
        %v1537 = vmul.f32 %v1453, %v1237
        %v1538 = vmul.f32 %v1455, %v1237
        %v1539 = vmul.f32 %v1457, %v1237
        %v1540 = vmul.f32 %v1459, %v1237
        %v1541 = vmul.f32 %v1461, %v1237
        %v1542 = vmul.f32 %v1463, %v1237
        %v1543 = vmul.f32 %v1465, %v1237
        %v1544 = vmul.f32 %v1467, %v1237
        %v1545 = vmul.f32 %v1469, %v1237
        %v1546 = vmul.f32 %v1471, %v1237
        %v1547 = vmul.f32 %v1473, %v1237
        %v1548 = vmul.f32 %v1475, %v1237
        %v1549 = vmul.f32 %v1477, %v1237
        %v1550 = vmul.f32 %v1479, %v1237
        %v1551 = vmul.f32 %v1481, %v1237
        %v1552 = vmul.f32 %v1483, %v1237
        %v1553 = vmul.f32 %v1485, %v1237
        %v1554 = vmul.f32 %v1487, %v1237
        %v1555 = vmul.f32 %v1489, %v1237
        %v1556 = vmul.f32 %v1491, %v1237
        %v1557 = vmul.f32 %v1493, %v1237
        %v1558 = vmul.f32 %v1238, %v1238
        %v1559 = vmul.f32 %v1239, %v1239
        %v1560 = vmul.f32 %v1240, %v1240
        %v1561 = vmul.f32 %v1241, %v1241
        %v1562 = vmul.f32 %v1242, %v1242
        %v1563 = vmul.f32 %v1243, %v1243
        %v1564 = vmul.f32 %v1244, %v1244
        %v1565 = vmul.f32 %v1245, %v1245
        %v1566 = vmul.f32 %v1246, %v1246
        %v1567 = vmul.f32 %v1247, %v1247
        %v1568 = vmul.f32 %v1248, %v1248
        %v1569 = vmul.f32 %v1249, %v1249
        %v1570 = vmul.f32 %v1250, %v1250
        %v1571 = vmul.f32 %v1251, %v1251
        %v1572 = vmul.f32 %v1252, %v1252
        %v1573 = vmul.f32 %v1253, %v1253
        %v1574 = vmul.f32 %v1254, %v1254
        %v1575 = vmul.f32 %v1255, %v1255
        %v1576 = vmul.f32 %v1256, %v1256
        %v1577 = vmul.f32 %v1257, %v1257
        %v1578 = vmul.f32 %v1258, %v1258
        %v1579 = vmul.f32 %v1259, %v1259
        %v1580 = vmul.f32 %v1260, %v1260
        %v1581 = vmul.f32 %v1261, %v1261
        %v1582 = vmul.f32 %v1262, %v1262
        %v1583 = vmul.f32 %v1263, %v1263
        %v1584 = vmul.f32 %v1264, %v1264
        %v1585 = vmul.f32 %v1265, %v1265
        %v1586 = vmul.f32 %v1266, %v1266
        %v1587 = vmul.f32 %v1267, %v1267
        %v1588 = vmul.f32 %v1268, %v1268
        %v1589 = vmul.f32 %v1269, %v1269
        %v1590 = vmul.f32 %v1270, %v1270
        %v1591 = vmul.f32 %v1271, %v1271
        %v1592 = vmul.f32 %v1272, %v1272
        %v1593 = vmul.f32 %v1273, %v1273
        %v1594 = vmul.f32 %v1274, %v1274
        %v1595 = vmul.f32 %v1275, %v1275
        %v1596 = vmul.f32 %v1276, %v1276
        %v1597 = vmul.f32 %v1277, %v1277
        %v1598 = vmul.f32 %v1278, %v1278
        %v1599 = vmul.f32 %v1279, %v1279
        %v1600 = vmul.f32 %v1280, %v1280
        %v1601 = vmul.f32 %v1281, %v1281
        %v1602 = vmul.f32 %v1282, %v1282
        %v1603 = vmul.f32 %v1283, %v1283
        %v1604 = vmul.f32 %v1284, %v1284
        %v1605 = vmul.f32 %v1285, %v1285
        %v1606 = vmul.f32 %v1286, %v1286
        %v1607 = vmul.f32 %v1287, %v1287
        %v1608 = vmul.f32 %v1288, %v1288
        %v1609 = vmul.f32 %v1289, %v1289
        %v1610 = vmul.f32 %v1290, %v1290
        %v1611 = vmul.f32 %v1291, %v1291
        %v1612 = vmul.f32 %v1292, %v1292
        %v1613 = vmul.f32 %v1293, %v1293
        %v1614 = vmul.f32 %v1294, %v1294
        %v1615 = vmul.f32 %v1295, %v1295
        %v1616 = vmul.f32 %v1296, %v1296
        %v1617 = vmul.f32 %v1297, %v1297
        %v1618 = vmul.f32 %v1298, %v1298
        %v1619 = vmul.f32 %v1299, %v1299
        %v1620 = vmul.f32 %v1300, %v1300
        %v1621 = vmul.f32 %v1301, %v1301
        %v1622 = vsub.f32 %v1494, %v1558
        %v1623 = vsub.f32 %v1495, %v1559
        %v1624 = vsub.f32 %v1496, %v1560
        %v1625 = vsub.f32 %v1497, %v1561
        %v1626 = vsub.f32 %v1498, %v1562
        %v1627 = vsub.f32 %v1499, %v1563
        %v1628 = vsub.f32 %v1500, %v1564
        %v1629 = vsub.f32 %v1501, %v1565
        %v1630 = vsub.f32 %v1502, %v1566
        %v1631 = vsub.f32 %v1503, %v1567
        %v1632 = vsub.f32 %v1504, %v1568
        %v1633 = vsub.f32 %v1505, %v1569
        %v1634 = vsub.f32 %v1506, %v1570
        %v1635 = vsub.f32 %v1507, %v1571
        %v1636 = vsub.f32 %v1508, %v1572
        %v1637 = vsub.f32 %v1509, %v1573
        %v1638 = vsub.f32 %v1510, %v1574
        %v1639 = vsub.f32 %v1511, %v1575
        %v1640 = vsub.f32 %v1512, %v1576
        %v1641 = vsub.f32 %v1513, %v1577
        %v1642 = vsub.f32 %v1514, %v1578
        %v1643 = vsub.f32 %v1515, %v1579
        %v1644 = vsub.f32 %v1516, %v1580
        %v1645 = vsub.f32 %v1517, %v1581
        %v1646 = vsub.f32 %v1518, %v1582
        %v1647 = vsub.f32 %v1519, %v1583
        %v1648 = vsub.f32 %v1520, %v1584
        %v1649 = vsub.f32 %v1521, %v1585
        %v1650 = vsub.f32 %v1522, %v1586
        %v1651 = vsub.f32 %v1523, %v1587
        %v1652 = vsub.f32 %v1524, %v1588
        %v1653 = vsub.f32 %v1525, %v1589
        %v1654 = vsub.f32 %v1526, %v1590
        %v1655 = vsub.f32 %v1527, %v1591
        %v1656 = vsub.f32 %v1528, %v1592
        %v1657 = vsub.f32 %v1529, %v1593
        %v1658 = vsub.f32 %v1530, %v1594
        %v1659 = vsub.f32 %v1531, %v1595
        %v1660 = vsub.f32 %v1532, %v1596
        %v1661 = vsub.f32 %v1533, %v1597
        %v1662 = vsub.f32 %v1534, %v1598
        %v1663 = vsub.f32 %v1535, %v1599
        %v1664 = vsub.f32 %v1536, %v1600
        %v1665 = vsub.f32 %v1537, %v1601
        %v1666 = vsub.f32 %v1538, %v1602
        %v1667 = vsub.f32 %v1539, %v1603
        %v1668 = vsub.f32 %v1540, %v1604
        %v1669 = vsub.f32 %v1541, %v1605
        %v1670 = vsub.f32 %v1542, %v1606
        %v1671 = vsub.f32 %v1543, %v1607
        %v1672 = vsub.f32 %v1544, %v1608
        %v1673 = vsub.f32 %v1545, %v1609
        %v1674 = vsub.f32 %v1546, %v1610
        %v1675 = vsub.f32 %v1547, %v1611
        %v1676 = vsub.f32 %v1548, %v1612
        %v1677 = vsub.f32 %v1549, %v1613
        %v1678 = vsub.f32 %v1550, %v1614
        %v1679 = vsub.f32 %v1551, %v1615
        %v1680 = vsub.f32 %v1552, %v1616
        %v1681 = vsub.f32 %v1553, %v1617
        %v1682 = vsub.f32 %v1554, %v1618
        %v1683 = vsub.f32 %v1555, %v1619
        %v1684 = vsub.f32 %v1556, %v1620
        %v1685 = vsub.f32 %v1557, %v1621
        %v1686 = vmax.f32 %v1622, 0.0
        %v1687 = vmax.f32 %v1623, 0.0
        %v1688 = vmax.f32 %v1624, 0.0
        %v1689 = vmax.f32 %v1625, 0.0
        %v1690 = vmax.f32 %v1626, 0.0
        %v1691 = vmax.f32 %v1627, 0.0
        %v1692 = vmax.f32 %v1628, 0.0
        %v1693 = vmax.f32 %v1629, 0.0
        %v1694 = vmax.f32 %v1630, 0.0
        %v1695 = vmax.f32 %v1631, 0.0
        %v1696 = vmax.f32 %v1632, 0.0
        %v1697 = vmax.f32 %v1633, 0.0
        %v1698 = vmax.f32 %v1634, 0.0
        %v1699 = vmax.f32 %v1635, 0.0
        %v1700 = vmax.f32 %v1636, 0.0
        %v1701 = vmax.f32 %v1637, 0.0
        %v1702 = vmax.f32 %v1638, 0.0
        %v1703 = vmax.f32 %v1639, 0.0
        %v1704 = vmax.f32 %v1640, 0.0
        %v1705 = vmax.f32 %v1641, 0.0
        %v1706 = vmax.f32 %v1642, 0.0
        %v1707 = vmax.f32 %v1643, 0.0
        %v1708 = vmax.f32 %v1644, 0.0
        %v1709 = vmax.f32 %v1645, 0.0
        %v1710 = vmax.f32 %v1646, 0.0
        %v1711 = vmax.f32 %v1647, 0.0
        %v1712 = vmax.f32 %v1648, 0.0
        %v1713 = vmax.f32 %v1649, 0.0
        %v1714 = vmax.f32 %v1650, 0.0
        %v1715 = vmax.f32 %v1651, 0.0
        %v1716 = vmax.f32 %v1652, 0.0
        %v1717 = vmax.f32 %v1653, 0.0
        %v1718 = vmax.f32 %v1654, 0.0
        %v1719 = vmax.f32 %v1655, 0.0
        %v1720 = vmax.f32 %v1656, 0.0
        %v1721 = vmax.f32 %v1657, 0.0
        %v1722 = vmax.f32 %v1658, 0.0
        %v1723 = vmax.f32 %v1659, 0.0
        %v1724 = vmax.f32 %v1660, 0.0
        %v1725 = vmax.f32 %v1661, 0.0
        %v1726 = vmax.f32 %v1662, 0.0
        %v1727 = vmax.f32 %v1663, 0.0
        %v1728 = vmax.f32 %v1664, 0.0
        %v1729 = vmax.f32 %v1665, 0.0
        %v1730 = vmax.f32 %v1666, 0.0
        %v1731 = vmax.f32 %v1667, 0.0
        %v1732 = vmax.f32 %v1668, 0.0
        %v1733 = vmax.f32 %v1669, 0.0
        %v1734 = vmax.f32 %v1670, 0.0
        %v1735 = vmax.f32 %v1671, 0.0
        %v1736 = vmax.f32 %v1672, 0.0
        %v1737 = vmax.f32 %v1673, 0.0
        %v1738 = vmax.f32 %v1674, 0.0
        %v1739 = vmax.f32 %v1675, 0.0
        %v1740 = vmax.f32 %v1676, 0.0
        %v1741 = vmax.f32 %v1677, 0.0
        %v1742 = vmax.f32 %v1678, 0.0
        %v1743 = vmax.f32 %v1679, 0.0
        %v1744 = vmax.f32 %v1680, 0.0
        %v1745 = vmax.f32 %v1681, 0.0
        %v1746 = vmax.f32 %v1682, 0.0
        %v1747 = vmax.f32 %v1683, 0.0
        %v1748 = vmax.f32 %v1684, 0.0
        %v1749 = vmax.f32 %v1685, 0.0
        %v1750 = vsub.f32 %v1045, %v1238
        %v1751 = vsub.f32 %v1046, %v1239
        %v1752 = vsub.f32 %v1047, %v1240
        %v1753 = vsub.f32 %v1048, %v1241
        %v1754 = vsub.f32 %v1049, %v1242
        %v1755 = vsub.f32 %v1050, %v1243
        %v1756 = vsub.f32 %v1051, %v1244
        %v1757 = vsub.f32 %v1052, %v1245
        %v1758 = vsub.f32 %v1053, %v1246
        %v1759 = vsub.f32 %v1054, %v1247
        %v1760 = vsub.f32 %v1055, %v1248
        %v1761 = vsub.f32 %v1056, %v1249
        %v1762 = vsub.f32 %v1057, %v1250
        %v1763 = vsub.f32 %v1058, %v1251
        %v1764 = vsub.f32 %v1059, %v1252
        %v1765 = vsub.f32 %v1060, %v1253
        %v1766 = vsub.f32 %v1061, %v1254
        %v1767 = vsub.f32 %v1062, %v1255
        %v1768 = vsub.f32 %v1063, %v1256
        %v1769 = vsub.f32 %v1064, %v1257
        %v1770 = vsub.f32 %v1065, %v1258
        %v1771 = vsub.f32 %v1066, %v1259
        %v1772 = vsub.f32 %v1067, %v1260
        %v1773 = vsub.f32 %v1068, %v1261
        %v1774 = vsub.f32 %v1069, %v1262
        %v1775 = vsub.f32 %v1070, %v1263
        %v1776 = vsub.f32 %v1071, %v1264
        %v1777 = vsub.f32 %v1072, %v1265
        %v1778 = vsub.f32 %v1073, %v1266
        %v1779 = vsub.f32 %v1074, %v1267
        %v1780 = vsub.f32 %v1075, %v1268
        %v1781 = vsub.f32 %v1076, %v1269
        %v1782 = vsub.f32 %v1077, %v1270
        %v1783 = vsub.f32 %v1078, %v1271
        %v1784 = vsub.f32 %v1079, %v1272
        %v1785 = vsub.f32 %v1080, %v1273
        %v1786 = vsub.f32 %v1081, %v1274
        %v1787 = vsub.f32 %v1082, %v1275
        %v1788 = vsub.f32 %v1083, %v1276
        %v1789 = vsub.f32 %v1084, %v1277
        %v1790 = vsub.f32 %v1085, %v1278
        %v1791 = vsub.f32 %v1086, %v1279
        %v1792 = vsub.f32 %v1087, %v1280
        %v1793 = vsub.f32 %v1088, %v1281
        %v1794 = vsub.f32 %v1089, %v1282
        %v1795 = vsub.f32 %v1090, %v1283
        %v1796 = vsub.f32 %v1091, %v1284
        %v1797 = vsub.f32 %v1092, %v1285
        %v1798 = vsub.f32 %v1093, %v1286
        %v1799 = vsub.f32 %v1094, %v1287
        %v1800 = vsub.f32 %v1095, %v1288
        %v1801 = vsub.f32 %v1096, %v1289
        %v1802 = vsub.f32 %v1097, %v1290
        %v1803 = vsub.f32 %v1098, %v1291
        %v1804 = vsub.f32 %v1099, %v1292
        %v1805 = vsub.f32 %v1100, %v1293
        %v1806 = vsub.f32 %v1101, %v1294
        %v1807 = vsub.f32 %v1102, %v1295
        %v1808 = vsub.f32 %v1103, %v1296
        %v1809 = vsub.f32 %v1104, %v1297
        %v1810 = vsub.f32 %v1105, %v1298
        %v1811 = vsub.f32 %v1106, %v1299
        %v1812 = vsub.f32 %v1107, %v1300
        %v1813 = vsub.f32 %v1108, %v1301
        %v1814 = vadd.f32 %v1686, 1e-06
        %v1815 = vadd.f32 %v1687, 1e-06
        %v1816 = vadd.f32 %v1688, 1e-06
        %v1817 = vadd.f32 %v1689, 1e-06
        %v1818 = vadd.f32 %v1690, 1e-06
        %v1819 = vadd.f32 %v1691, 1e-06
        %v1820 = vadd.f32 %v1692, 1e-06
        %v1821 = vadd.f32 %v1693, 1e-06
        %v1822 = vadd.f32 %v1694, 1e-06
        %v1823 = vadd.f32 %v1695, 1e-06
        %v1824 = vadd.f32 %v1696, 1e-06
        %v1825 = vadd.f32 %v1697, 1e-06
        %v1826 = vadd.f32 %v1698, 1e-06
        %v1827 = vadd.f32 %v1699, 1e-06
        %v1828 = vadd.f32 %v1700, 1e-06
        %v1829 = vadd.f32 %v1701, 1e-06
        %v1830 = vadd.f32 %v1702, 1e-06
        %v1831 = vadd.f32 %v1703, 1e-06
        %v1832 = vadd.f32 %v1704, 1e-06
        %v1833 = vadd.f32 %v1705, 1e-06
        %v1834 = vadd.f32 %v1706, 1e-06
        %v1835 = vadd.f32 %v1707, 1e-06
        %v1836 = vadd.f32 %v1708, 1e-06
        %v1837 = vadd.f32 %v1709, 1e-06
        %v1838 = vadd.f32 %v1710, 1e-06
        %v1839 = vadd.f32 %v1711, 1e-06
        %v1840 = vadd.f32 %v1712, 1e-06
        %v1841 = vadd.f32 %v1713, 1e-06
        %v1842 = vadd.f32 %v1714, 1e-06
        %v1843 = vadd.f32 %v1715, 1e-06
        %v1844 = vadd.f32 %v1716, 1e-06
        %v1845 = vadd.f32 %v1717, 1e-06
        %v1846 = vadd.f32 %v1718, 1e-06
        %v1847 = vadd.f32 %v1719, 1e-06
        %v1848 = vadd.f32 %v1720, 1e-06
        %v1849 = vadd.f32 %v1721, 1e-06
        %v1850 = vadd.f32 %v1722, 1e-06
        %v1851 = vadd.f32 %v1723, 1e-06
        %v1852 = vadd.f32 %v1724, 1e-06
        %v1853 = vadd.f32 %v1725, 1e-06
        %v1854 = vadd.f32 %v1726, 1e-06
        %v1855 = vadd.f32 %v1727, 1e-06
        %v1856 = vadd.f32 %v1728, 1e-06
        %v1857 = vadd.f32 %v1729, 1e-06
        %v1858 = vadd.f32 %v1730, 1e-06
        %v1859 = vadd.f32 %v1731, 1e-06
        %v1860 = vadd.f32 %v1732, 1e-06
        %v1861 = vadd.f32 %v1733, 1e-06
        %v1862 = vadd.f32 %v1734, 1e-06
        %v1863 = vadd.f32 %v1735, 1e-06
        %v1864 = vadd.f32 %v1736, 1e-06
        %v1865 = vadd.f32 %v1737, 1e-06
        %v1866 = vadd.f32 %v1738, 1e-06
        %v1867 = vadd.f32 %v1739, 1e-06
        %v1868 = vadd.f32 %v1740, 1e-06
        %v1869 = vadd.f32 %v1741, 1e-06
        %v1870 = vadd.f32 %v1742, 1e-06
        %v1871 = vadd.f32 %v1743, 1e-06
        %v1872 = vadd.f32 %v1744, 1e-06
        %v1873 = vadd.f32 %v1745, 1e-06
        %v1874 = vadd.f32 %v1746, 1e-06
        %v1875 = vadd.f32 %v1747, 1e-06
        %v1876 = vadd.f32 %v1748, 1e-06
        %v1877 = vadd.f32 %v1749, 1e-06
        %v1878 = vrsqrt.pop %v1814
        %v1879 = vrsqrt.pop %v1815
        %v1880 = vrsqrt.pop %v1816
        %v1881 = vrsqrt.pop %v1817
        %v1882 = vrsqrt.pop %v1818
        %v1883 = vrsqrt.pop %v1819
        %v1884 = vrsqrt.pop %v1820
        %v1885 = vrsqrt.pop %v1821
        %v1886 = vrsqrt.pop %v1822
        %v1887 = vrsqrt.pop %v1823
        %v1888 = vrsqrt.pop %v1824
        %v1889 = vrsqrt.pop %v1825
        %v1890 = vrsqrt.pop %v1826
        %v1891 = vrsqrt.pop %v1827
        %v1892 = vrsqrt.pop %v1828
        %v1893 = vrsqrt.pop %v1829
        %v1894 = vrsqrt.pop %v1830
        %v1895 = vrsqrt.pop %v1831
        %v1896 = vrsqrt.pop %v1832
        %v1897 = vrsqrt.pop %v1833
        %v1898 = vrsqrt.pop %v1834
        %v1899 = vrsqrt.pop %v1835
        %v1900 = vrsqrt.pop %v1836
        %v1901 = vrsqrt.pop %v1837
        %v1902 = vrsqrt.pop %v1838
        %v1903 = vrsqrt.pop %v1839
        %v1904 = vrsqrt.pop %v1840
        %v1905 = vrsqrt.pop %v1841
        %v1906 = vrsqrt.pop %v1842
        %v1907 = vrsqrt.pop %v1843
        %v1908 = vrsqrt.pop %v1844
        %v1909 = vrsqrt.pop %v1845
        %v1910 = vrsqrt.pop %v1846
        %v1911 = vrsqrt.pop %v1847
        %v1912 = vrsqrt.pop %v1848
        %v1913 = vrsqrt.pop %v1849
        %v1914 = vrsqrt.pop %v1850
        %v1915 = vrsqrt.pop %v1851
        %v1916 = vrsqrt.pop %v1852
        %v1917 = vrsqrt.pop %v1853
        %v1918 = vrsqrt.pop %v1854
        %v1919 = vrsqrt.pop %v1855
        %v1920 = vrsqrt.pop %v1856
        %v1921 = vrsqrt.pop %v1857
        %v1922 = vrsqrt.pop %v1858
        %v1923 = vrsqrt.pop %v1859
        %v1924 = vrsqrt.pop %v1860
        %v1925 = vrsqrt.pop %v1861
        %v1926 = vrsqrt.pop %v1862
        %v1927 = vrsqrt.pop %v1863
        %v1928 = vrsqrt.pop %v1864
        %v1929 = vrsqrt.pop %v1865
        %v1930 = vrsqrt.pop %v1866
        %v1931 = vrsqrt.pop %v1867
        %v1932 = vrsqrt.pop %v1868
        %v1933 = vrsqrt.pop %v1869
        %v1934 = vrsqrt.pop %v1870
        %v1935 = vrsqrt.pop %v1871
        %v1936 = vrsqrt.pop %v1872
        %v1937 = vrsqrt.pop %v1873
        %v1938 = vrsqrt.pop %v1874
        %v1939 = vrsqrt.pop %v1875
        %v1940 = vrsqrt.pop %v1876
        %v1941 = vrsqrt.pop %v1877
        %v1942 = vmul.f32 %v1750, %v1878
        %v1943 = vmul.f32 %v1751, %v1879
        %v1944 = vmul.f32 %v1752, %v1880
        %v1945 = vmul.f32 %v1753, %v1881
        %v1946 = vmul.f32 %v1754, %v1882
        %v1947 = vmul.f32 %v1755, %v1883
        %v1948 = vmul.f32 %v1756, %v1884
        %v1949 = vmul.f32 %v1757, %v1885
        %v1950 = vmul.f32 %v1758, %v1886
        %v1951 = vmul.f32 %v1759, %v1887
        %v1952 = vmul.f32 %v1760, %v1888
        %v1953 = vmul.f32 %v1761, %v1889
        %v1954 = vmul.f32 %v1762, %v1890
        %v1955 = vmul.f32 %v1763, %v1891
        %v1956 = vmul.f32 %v1764, %v1892
        %v1957 = vmul.f32 %v1765, %v1893
        %v1958 = vmul.f32 %v1766, %v1894
        %v1959 = vmul.f32 %v1767, %v1895
        %v1960 = vmul.f32 %v1768, %v1896
        %v1961 = vmul.f32 %v1769, %v1897
        %v1962 = vmul.f32 %v1770, %v1898
        %v1963 = vmul.f32 %v1771, %v1899
        %v1964 = vmul.f32 %v1772, %v1900
        %v1965 = vmul.f32 %v1773, %v1901
        %v1966 = vmul.f32 %v1774, %v1902
        %v1967 = vmul.f32 %v1775, %v1903
        %v1968 = vmul.f32 %v1776, %v1904
        %v1969 = vmul.f32 %v1777, %v1905
        %v1970 = vmul.f32 %v1778, %v1906
        %v1971 = vmul.f32 %v1779, %v1907
        %v1972 = vmul.f32 %v1780, %v1908
        %v1973 = vmul.f32 %v1781, %v1909
        %v1974 = vmul.f32 %v1782, %v1910
        %v1975 = vmul.f32 %v1783, %v1911
        %v1976 = vmul.f32 %v1784, %v1912
        %v1977 = vmul.f32 %v1785, %v1913
        %v1978 = vmul.f32 %v1786, %v1914
        %v1979 = vmul.f32 %v1787, %v1915
        %v1980 = vmul.f32 %v1788, %v1916
        %v1981 = vmul.f32 %v1789, %v1917
        %v1982 = vmul.f32 %v1790, %v1918
        %v1983 = vmul.f32 %v1791, %v1919
        %v1984 = vmul.f32 %v1792, %v1920
        %v1985 = vmul.f32 %v1793, %v1921
        %v1986 = vmul.f32 %v1794, %v1922
        %v1987 = vmul.f32 %v1795, %v1923
        %v1988 = vmul.f32 %v1796, %v1924
        %v1989 = vmul.f32 %v1797, %v1925
        %v1990 = vmul.f32 %v1798, %v1926
        %v1991 = vmul.f32 %v1799, %v1927
        %v1992 = vmul.f32 %v1800, %v1928
        %v1993 = vmul.f32 %v1801, %v1929
        %v1994 = vmul.f32 %v1802, %v1930
        %v1995 = vmul.f32 %v1803, %v1931
        %v1996 = vmul.f32 %v1804, %v1932
        %v1997 = vmul.f32 %v1805, %v1933
        %v1998 = vmul.f32 %v1806, %v1934
        %v1999 = vmul.f32 %v1807, %v1935
        %v2000 = vmul.f32 %v1808, %v1936
        %v2001 = vmul.f32 %v1809, %v1937
        %v2002 = vmul.f32 %v1810, %v1938
        %v2003 = vmul.f32 %v1811, %v1939
        %v2004 = vmul.f32 %v1812, %v1940
        %v2005 = vmul.f32 %v1813, %v1941
        %v2006 = vld [vmem:[%s5] sm:$0x1]
        %v2008 = vlaneseq
        %v2009 = vshrl.u32 %v2008, 7
        %v2010 = vsub.s32 0, %v2009
        %v2011 = vrot.slane %v2006, %v2010
        %v2013 = vmul.f32 %v1942, %v2011
        %v2014 = vmul.f32 %v1943, %v2011
        %v2015 = vmul.f32 %v1944, %v2011
        %v2016 = vmul.f32 %v1945, %v2011
        %v2017 = vmul.f32 %v1946, %v2011
        %v2018 = vmul.f32 %v1947, %v2011
        %v2019 = vmul.f32 %v1948, %v2011
        %v2020 = vmul.f32 %v1949, %v2011
        %v2021 = vmul.f32 %v1950, %v2011
        %v2022 = vmul.f32 %v1951, %v2011
        %v2023 = vmul.f32 %v1952, %v2011
        %v2024 = vmul.f32 %v1953, %v2011
        %v2025 = vmul.f32 %v1954, %v2011
        %v2026 = vmul.f32 %v1955, %v2011
        %v2027 = vmul.f32 %v1956, %v2011
        %v2028 = vmul.f32 %v1957, %v2011
        %v2029 = vmul.f32 %v1958, %v2011
        %v2030 = vmul.f32 %v1959, %v2011
        %v2031 = vmul.f32 %v1960, %v2011
        %v2032 = vmul.f32 %v1961, %v2011
        %v2033 = vmul.f32 %v1962, %v2011
        %v2034 = vmul.f32 %v1963, %v2011
        %v2035 = vmul.f32 %v1964, %v2011
        %v2036 = vmul.f32 %v1965, %v2011
        %v2037 = vmul.f32 %v1966, %v2011
        %v2038 = vmul.f32 %v1967, %v2011
        %v2039 = vmul.f32 %v1968, %v2011
        %v2040 = vmul.f32 %v1969, %v2011
        %v2041 = vmul.f32 %v1970, %v2011
        %v2042 = vmul.f32 %v1971, %v2011
        %v2043 = vmul.f32 %v1972, %v2011
        %v2044 = vmul.f32 %v1973, %v2011
        %v2045 = vmul.f32 %v1974, %v2011
        %v2046 = vmul.f32 %v1975, %v2011
        %v2047 = vmul.f32 %v1976, %v2011
        %v2048 = vmul.f32 %v1977, %v2011
        %v2049 = vmul.f32 %v1978, %v2011
        %v2050 = vmul.f32 %v1979, %v2011
        %v2051 = vmul.f32 %v1980, %v2011
        %v2052 = vmul.f32 %v1981, %v2011
        %v2053 = vmul.f32 %v1982, %v2011
        %v2054 = vmul.f32 %v1983, %v2011
        %v2055 = vmul.f32 %v1984, %v2011
        %v2056 = vmul.f32 %v1985, %v2011
        %v2057 = vmul.f32 %v1986, %v2011
        %v2058 = vmul.f32 %v1987, %v2011
        %v2059 = vmul.f32 %v1988, %v2011
        %v2060 = vmul.f32 %v1989, %v2011
        %v2061 = vmul.f32 %v1990, %v2011
        %v2062 = vmul.f32 %v1991, %v2011
        %v2063 = vmul.f32 %v1992, %v2011
        %v2064 = vmul.f32 %v1993, %v2011
        %v2065 = vmul.f32 %v1994, %v2011
        %v2066 = vmul.f32 %v1995, %v2011
        %v2067 = vmul.f32 %v1996, %v2011
        %v2068 = vmul.f32 %v1997, %v2011
        %v2069 = vmul.f32 %v1998, %v2011
        %v2070 = vmul.f32 %v1999, %v2011
        %v2071 = vmul.f32 %v2000, %v2011
        %v2072 = vmul.f32 %v2001, %v2011
        %v2073 = vmul.f32 %v2002, %v2011
        %v2074 = vmul.f32 %v2003, %v2011
        %v2075 = vmul.f32 %v2004, %v2011
        %v2076 = vmul.f32 %v2005, %v2011
        %v2077 = vld [vmem:[%s6] sm:$0x1]
        %v2079 = vlaneseq
        %v2080 = vshrl.u32 %v2079, 7
        %v2081 = vsub.s32 0, %v2080
        %v2082 = vrot.slane %v2077, %v2081
        %v2084 = vadd.f32 %v2013, %v2082
        %v2085 = vadd.f32 %v2014, %v2082
        %v2086 = vadd.f32 %v2015, %v2082
        %v2087 = vadd.f32 %v2016, %v2082
        %v2088 = vadd.f32 %v2017, %v2082
        %v2089 = vadd.f32 %v2018, %v2082
        %v2090 = vadd.f32 %v2019, %v2082
        %v2091 = vadd.f32 %v2020, %v2082
        %v2092 = vadd.f32 %v2021, %v2082
        %v2093 = vadd.f32 %v2022, %v2082
        %v2094 = vadd.f32 %v2023, %v2082
        %v2095 = vadd.f32 %v2024, %v2082
        %v2096 = vadd.f32 %v2025, %v2082
        %v2097 = vadd.f32 %v2026, %v2082
        %v2098 = vadd.f32 %v2027, %v2082
        %v2099 = vadd.f32 %v2028, %v2082
        %v2100 = vadd.f32 %v2029, %v2082
        %v2101 = vadd.f32 %v2030, %v2082
        %v2102 = vadd.f32 %v2031, %v2082
        %v2103 = vadd.f32 %v2032, %v2082
        %v2104 = vadd.f32 %v2033, %v2082
        %v2105 = vadd.f32 %v2034, %v2082
        %v2106 = vadd.f32 %v2035, %v2082
        %v2107 = vadd.f32 %v2036, %v2082
        %v2108 = vadd.f32 %v2037, %v2082
        %v2109 = vadd.f32 %v2038, %v2082
        %v2110 = vadd.f32 %v2039, %v2082
        %v2111 = vadd.f32 %v2040, %v2082
        %v2112 = vadd.f32 %v2041, %v2082
        %v2113 = vadd.f32 %v2042, %v2082
        %v2114 = vadd.f32 %v2043, %v2082
        %v2115 = vadd.f32 %v2044, %v2082
        %v2116 = vadd.f32 %v2045, %v2082
        %v2117 = vadd.f32 %v2046, %v2082
        %v2118 = vadd.f32 %v2047, %v2082
        %v2119 = vadd.f32 %v2048, %v2082
        %v2120 = vadd.f32 %v2049, %v2082
        %v2121 = vadd.f32 %v2050, %v2082
        %v2122 = vadd.f32 %v2051, %v2082
        %v2123 = vadd.f32 %v2052, %v2082
        %v2124 = vadd.f32 %v2053, %v2082
        %v2125 = vadd.f32 %v2054, %v2082
        %v2126 = vadd.f32 %v2055, %v2082
        %v2127 = vadd.f32 %v2056, %v2082
        %v2128 = vadd.f32 %v2057, %v2082
        %v2129 = vadd.f32 %v2058, %v2082
        %v2130 = vadd.f32 %v2059, %v2082
        %v2131 = vadd.f32 %v2060, %v2082
        %v2132 = vadd.f32 %v2061, %v2082
        %v2133 = vadd.f32 %v2062, %v2082
        %v2134 = vadd.f32 %v2063, %v2082
        %v2135 = vadd.f32 %v2064, %v2082
        %v2136 = vadd.f32 %v2065, %v2082
        %v2137 = vadd.f32 %v2066, %v2082
        %v2138 = vadd.f32 %v2067, %v2082
        %v2139 = vadd.f32 %v2068, %v2082
        %v2140 = vadd.f32 %v2069, %v2082
        %v2141 = vadd.f32 %v2070, %v2082
        %v2142 = vadd.f32 %v2071, %v2082
        %v2143 = vadd.f32 %v2072, %v2082
        %v2144 = vadd.f32 %v2073, %v2082
        %v2145 = vadd.f32 %v2074, %v2082
        %v2146 = vadd.f32 %v2075, %v2082
        %v2147 = vadd.f32 %v2076, %v2082
        %2148 = vst [vmem:[%s272] sm:$0xff] %v2084
        %2149 = vst [vmem:[%s272 + $0x8] sm:$0xff] %v2085
        %2150 = vst [vmem:[%s272 + $0x10] sm:$0xff] %v2086
        %2151 = vst [vmem:[%s272 + $0x18] sm:$0xff] %v2087
        %2152 = vst [vmem:[%s272 + $0x20] sm:$0xff] %v2088
        %2153 = vst [vmem:[%s272 + $0x28] sm:$0xff] %v2089
        %2154 = vst [vmem:[%s272 + $0x30] sm:$0xff] %v2090
        %2155 = vst [vmem:[%s272 + $0x38] sm:$0xff] %v2091
        %2156 = vst [vmem:[%s272 + $0x40] sm:$0xff] %v2092
        %2157 = vst [vmem:[%s272 + $0x48] sm:$0xff] %v2093
        %2158 = vst [vmem:[%s272 + $0x50] sm:$0xff] %v2094
        %2159 = vst [vmem:[%s272 + $0x58] sm:$0xff] %v2095
        %2160 = vst [vmem:[%s272 + $0x60] sm:$0xff] %v2096
        %2161 = vst [vmem:[%s272 + $0x68] sm:$0xff] %v2097
        %2162 = vst [vmem:[%s272 + $0x70] sm:$0xff] %v2098
        %2163 = vst [vmem:[%s272 + $0x78] sm:$0xff] %v2099
        %2164 = vst [vmem:[%s272 + $0x80] sm:$0xff] %v2100
        %2165 = vst [vmem:[%s272 + $0x88] sm:$0xff] %v2101
        %2166 = vst [vmem:[%s272 + $0x90] sm:$0xff] %v2102
        %2167 = vst [vmem:[%s272 + $0x98] sm:$0xff] %v2103
        %2168 = vst [vmem:[%s272 + $0xa0] sm:$0xff] %v2104
        %2169 = vst [vmem:[%s272 + $0xa8] sm:$0xff] %v2105
        %2170 = vst [vmem:[%s272 + $0xb0] sm:$0xff] %v2106
        %2171 = vst [vmem:[%s272 + $0xb8] sm:$0xff] %v2107
        %2172 = vst [vmem:[%s272 + $0xc0] sm:$0xff] %v2108
        %2173 = vst [vmem:[%s272 + $0xc8] sm:$0xff] %v2109
        %2174 = vst [vmem:[%s272 + $0xd0] sm:$0xff] %v2110
        %2175 = vst [vmem:[%s272 + $0xd8] sm:$0xff] %v2111
        %2176 = vst [vmem:[%s272 + $0xe0] sm:$0xff] %v2112
        %2177 = vst [vmem:[%s272 + $0xe8] sm:$0xff] %v2113
        %2178 = vst [vmem:[%s272 + $0xf0] sm:$0xff] %v2114
        %2179 = vst [vmem:[%s272 + $0xf8] sm:$0xff] %v2115
        %2180 = vst [vmem:[%s272 + $0x100] sm:$0xff] %v2116
        %2181 = vst [vmem:[%s272 + $0x108] sm:$0xff] %v2117
        %2182 = vst [vmem:[%s272 + $0x110] sm:$0xff] %v2118
        %2183 = vst [vmem:[%s272 + $0x118] sm:$0xff] %v2119
        %2184 = vst [vmem:[%s272 + $0x120] sm:$0xff] %v2120
        %2185 = vst [vmem:[%s272 + $0x128] sm:$0xff] %v2121
        %2186 = vst [vmem:[%s272 + $0x130] sm:$0xff] %v2122
        %2187 = vst [vmem:[%s272 + $0x138] sm:$0xff] %v2123
        %2188 = vst [vmem:[%s272 + $0x140] sm:$0xff] %v2124
        %2189 = vst [vmem:[%s272 + $0x148] sm:$0xff] %v2125
        %2190 = vst [vmem:[%s272 + $0x150] sm:$0xff] %v2126
        %2191 = vst [vmem:[%s272 + $0x158] sm:$0xff] %v2127
        %2192 = vst [vmem:[%s272 + $0x160] sm:$0xff] %v2128
        %2193 = vst [vmem:[%s272 + $0x168] sm:$0xff] %v2129
        %2194 = vst [vmem:[%s272 + $0x170] sm:$0xff] %v2130
        %2195 = vst [vmem:[%s272 + $0x178] sm:$0xff] %v2131
        %2196 = vst [vmem:[%s272 + $0x180] sm:$0xff] %v2132
        %2197 = vst [vmem:[%s272 + $0x188] sm:$0xff] %v2133
        %2198 = vst [vmem:[%s272 + $0x190] sm:$0xff] %v2134
        %2199 = vst [vmem:[%s272 + $0x198] sm:$0xff] %v2135
        %2200 = vst [vmem:[%s272 + $0x1a0] sm:$0xff] %v2136
        %2201 = vst [vmem:[%s272 + $0x1a8] sm:$0xff] %v2137
        %2202 = vst [vmem:[%s272 + $0x1b0] sm:$0xff] %v2138
        %2203 = vst [vmem:[%s272 + $0x1b8] sm:$0xff] %v2139
        %2204 = vst [vmem:[%s272 + $0x1c0] sm:$0xff] %v2140
        %2205 = vst [vmem:[%s272 + $0x1c8] sm:$0xff] %v2141
        %2206 = vst [vmem:[%s272 + $0x1d0] sm:$0xff] %v2142
        %2207 = vst [vmem:[%s272 + $0x1d8] sm:$0xff] %v2143
        %2208 = vst [vmem:[%s272 + $0x1e0] sm:$0xff] %v2144
        %2209 = vst [vmem:[%s272 + $0x1e8] sm:$0xff] %v2145
        %2210 = vst [vmem:[%s272 + $0x1f0] sm:$0xff] %v2146
        %2211 = vst [vmem:[%s272 + $0x1f8] sm:$0xff] %v2147
        %s2212 = sand.u32 %s181, 1
        %s2213 = scalar_lea.sflag [#allocation3], %s2212
        %s2214 = sand.u32 %s181, 1
        %s2215 = smul.addr %s2214, 512
        %s2216 = scalar_lea.vmem [#allocation2], %s2215
        // Predicated region
        $region49: #{attention_dis.3} parent=47 // pred_check
          %p2217 = pneg %p191
        $region50: #{attention_dis.3} parent=47 // pred_check_branch
          %2219 = sbr.rel (%p2217) target = $region52
        $region51: #{attention_dis.3} parent=47 // pred_region
          %s2220 = smul.u32 64, %s21
          %s2222 = ssub.s32 8192, 8192
          %2223 = vsyncadd %s2213, %s2222
          %s2224 = smul.addr %s2220, 128
          %s2225 = scalar_lea.hbm %s7, %s2224
          %s2226 = sshll.u32 %s2216, 4
          %s2227 = int_to_ptr.vmem [resolvable:$true] %s2226
          %2232 = dma.vmem_to_hbm [thread:$0]  %s2227, 8192, %s2225, %s2213, 128, 128, 8
        $region52: #{attention_dis.3} parent=47 // pred_fallthru
          _
      $region48: #{attention_dis.3} parent=5 // pred_fallthru
        _
      %p2233 = scmp.le.s32.totalorder 2, %s16
      // Predicated region
      $region53: #{attention_dis.3} parent=5 // pred_check
        %p2234 = pneg %p2233
      $region54: #{attention_dis.3} parent=5 // pred_check_branch
        %2236 = sbr.rel (%p2234) target = $region56
      $region55: #{attention_dis.3} parent=5 // pred_region
        %s2237 = ssub.s32 %s16, 2
        // Predicated region
        $region57: #{attention_dis.3} parent=55 // pred_check
          %p2238 = pneg %p197
        $region58: #{attention_dis.3} parent=55 // pred_check_branch
          %2240 = sbr.rel (%p2238) target = $region60
        $region59: #{attention_dis.3} parent=55 // pred_region
          %s2241 = sand.u32 %s182, 1
          %s2242 = scalar_lea.sflag [#allocation3], %s2241
          %s2243 = sand.u32 %s182, 1
          %s2244 = smul.addr %s2243, 512
          %s2245 = scalar_lea.vmem [#allocation2], %s2244
          %2246 = dma.done %s2242, 8192
        $region60: #{attention_dis.3} parent=55 // pred_fallthru
          _
      $region56: #{attention_dis.3} parent=5 // pred_fallthru
        _
    $region6: #{attention_dis.3} parent=1 // loop_footer
      %s20 = sadd.s32 1, %s16
    $region7: #{attention_dis.3} parent=1 // loop_footer_branch
      %15 = sbr.rel target = $region3
    $region8: #{attention_dis.3} parent=1 // loop_exit
      _
    %2247 = vsyncpa [#allocation3], 1
    %s2248 = scalar_lea.sflag [#allocation3], 1
    %2249 = vsyncpa %s2248, 1

</llo_original>
